<compile_context>
chip_gen: v7x
topology: tpu7x:2x2x1
jax: 0.10.0
libtpu: 0.0.40
codegen_flags: <defaults>
</compile_context>

<pallas_src>
import jax
import jax.numpy as jnp
from jax import lax
from jax.experimental import pallas as pl
from jax.experimental.pallas import tpu as pltpu


# ---------------------------------------------------------------------------
# Fused Pallas kernel: 1x1 (all groups) -> 3x3 (block-diag groups) -> 1x1 + res
# ---------------------------------------------------------------------------
def _make_kernel(RP, PAD, Wp, GChid, GCgo):
    def kernel(x_ref, w1_ref, b1m_ref, w2_ref, b2_ref, wo_ref, bo_ref,
               o_ref, hext_ref):
        x = x_ref[0]                                              # (RP, Cin) f32

        # --- 1x1 conv, all groups stacked; bias pre-masked off the spatial halo
        h = jnp.dot(x, w1_ref[...], preferred_element_type=jnp.float32)
        h = h + b1m_ref[...]                                      # (RP, G*Chid)

        # --- stage into the shift buffer.  Only the halo bands need zeroing;
        #     the interior is fully overwritten every grid step.
        hext_ref[0:PAD, :] = jnp.zeros((PAD, GChid), jnp.float32)
        hext_ref[PAD + RP:PAD + RP + PAD, :] = jnp.zeros((PAD, GChid), jnp.float32)
        hext_ref[PAD:PAD + RP, :] = h                             # aligned store

        # --- 3x3 conv (all groups at once, block-diagonal W2): 9 accumulating
        #     MXU matmuls over row-shifted static views.  t = (dy+1)*3 + (dx+1)
        acc = jnp.broadcast_to(b2_ref[...], (RP, GCgo)).astype(jnp.float32)
        for t in range(9):
            off = (t // 3 - 1) * Wp + (t % 3 - 1)
            win = hext_ref[PAD + off:PAD + off + RP, :]           # (RP, G*Chid)
            acc = acc + jnp.dot(win, w2_ref[t],
                                preferred_element_type=jnp.float32)

        # --- output 1x1 conv + bias + residual
        out = jnp.dot(acc, wo_ref[...], preferred_element_type=jnp.float32)
        o_ref[0] = (out + bo_ref[...] + x).astype(o_ref.dtype)

    return kernel


# ---------------------------------------------------------------------------
# Weight packing (pure-JAX glue, tiny): stack groups / build block-diagonal 3x3
# ---------------------------------------------------------------------------
def pack_params(params):
    groups = params["groups"]
    G = len(groups)
    Chid = groups[0]["w1"].shape[0]
    Cin = groups[0]["w1"].shape[1]
    Cgo = groups[0]["w2"].shape[0]
    GChid, GCgo = G * Chid, G * Cgo

    # 1x1 weights, all groups stacked along the output-channel (lane) axis.
    w1 = jnp.concatenate(
        [jnp.transpose(p["w1"][:, :, 0, 0], (1, 0)) for p in groups], axis=1)  # (Cin, G*Chid)
    b1 = jnp.concatenate([p["b1"] for p in groups]).reshape(1, GChid)

    # 3x3 weights: (9, G*Chid, G*Cgo), block-diagonal across groups, t = ky*3+kx.
    w2 = jnp.zeros((9, GChid, GCgo), jnp.float32)
    for g, p in enumerate(groups):
        wg = jnp.transpose(p["w2"], (2, 3, 1, 0)).reshape(9, Chid, Cgo)
        w2 = w2.at[:, g * Chid:(g + 1) * Chid, g * Cgo:(g + 1) * Cgo].set(wg)
    b2 = jnp.concatenate([p["b2"] for p in groups]).reshape(1, GCgo)

    wo = jnp.transpose(params["wo"][:, :, 0, 0], (1, 0))                        # (G*Cgo, Cin)
    bo = params["bo"].reshape(1, params["wo"].shape[0])
    return dict(w1=w1, b1=b1, w2=w2, b2=b2, wo=wo, bo=bo)


# ---------------------------------------------------------------------------
# ResNext forward (Pallas)
# ---------------------------------------------------------------------------
def resnext_forward(params, x_nchw):
    pk = pack_params(params)
    N, Cin, H, W = x_nchw.shape
    Hp, Wp = H + 2, W + 2
    RP = Hp * Wp                      # padded spatial rows per image
    SH = Wp + 1                       # max |row shift| needed by the 3x3 taps
    PAD = ((SH + 7) // 8) * 8         # sublane-aligned halo band in shift buffer
    GChid = pk["w1"].shape[1]
    GCgo = pk["wo"].shape[0]

    # NCHW -> NHWC, spatial zero-pad by 1, flatten spatial (single XLA copy).
    x_flat = jnp.pad(jnp.transpose(x_nchw, (0, 2, 3, 1)),
                     ((0, 0), (1, 1), (1, 1), (0, 0))).reshape(N, RP, Cin)

    # Pre-masked 1x1 bias: zero on the spatial halo rows, b1 on interior rows.
    ii = jnp.arange(RP) // Wp
    jj = jnp.arange(RP) % Wp
    interior = ((ii >= 1) & (ii <= H) & (jj >= 1) & (jj <= W)).astype(jnp.float32)
    b1m = interior[:, None] * pk["b1"]                            # (RP, G*Chid)

    kernel = _make_kernel(RP, PAD, Wp, GChid, GCgo)

    flops = 2 * N * RP * (Cin * GChid + 9 * GChid * GCgo + GCgo * Cin)
    bytes_accessed = 4 * (2 * N * RP * Cin + pk["w1"].size + b1m.size
                          + pk["w2"].size + GCgo + pk["wo"].size + Cin)

    out_flat = pl.pallas_call(
        kernel,
        out_shape=jax.ShapeDtypeStruct((N, RP, Cin), jnp.float32),
        grid_spec=pltpu.PrefetchScalarGridSpec(
            num_scalar_prefetch=0,
            grid=(N,),
            in_specs=[
                pl.BlockSpec((1, RP, Cin), lambda n: (n, 0, 0)),      # x (padded, flat)
                pl.BlockSpec((Cin, GChid), lambda n: (0, 0)),         # w1 (groups stacked)
                pl.BlockSpec((RP, GChid), lambda n: (0, 0)),          # b1, pre-masked
                pl.BlockSpec((9, GChid, GCgo), lambda n: (0, 0, 0)),  # w2 (block-diag)
                pl.BlockSpec((1, GCgo), lambda n: (0, 0)),            # b2
                pl.BlockSpec((GCgo, Cin), lambda n: (0, 0)),          # wo
                pl.BlockSpec((1, Cin), lambda n: (0, 0)),             # bo
            ],
            out_specs=pl.BlockSpec((1, RP, Cin), lambda n: (n, 0, 0)),
            scratch_shapes=[pltpu.VMEM((2 * PAD + RP, GChid), jnp.float32)],
        ),
        compiler_params=pltpu.CompilerParams(
            dimension_semantics=("parallel",),        # one image per TC on megacore
            vmem_limit_bytes=32 * 1024 * 1024,        # explicit, safe on v5e/v6e/v7x
        ),
        cost_estimate=pl.CostEstimate(flops=flops, transcendentals=0,
                                      bytes_accessed=bytes_accessed),
    )(x_flat, pk["w1"], b1m, pk["w2"], pk["b2"], pk["wo"], pk["bo"])

    # Drop the spatial halo and go back to NCHW (fuses with the final transpose).
    out = out_flat.reshape(N, Hp, Wp, Cin)[:, 1:H + 1, 1:W + 1, :]
    return jnp.transpose(out, (0, 3, 1, 2))


# ---------------------------------------------------------------------------
# Deterministic parameter init (PyTorch Conv2d default: U(-1/sqrt(fan_in), ...))
# ---------------------------------------------------------------------------
def init_params(key, num_group, cin, chid, cgo):
    def conv_init(k, cout, cin_fan, kh, kw):
        k1, k2 = jax.random.split(k)
        bound = 1.0 / float((cin_fan * kh * kw) ** 0.5)
        w = jax.random.uniform(k1, (cout, cin_fan, kh, kw), jnp.float32, -bound, bound)
        b = jax.random.uniform(k2, (cout,), jnp.float32, -bound, bound)
        return w, b

    keys = jax.random.split(key, 2 * num_group + 1)
    groups = []
    for g in range(num_group):
        w1, b1 = conv_init(keys[2 * g], chid, cin, 1, 1)
        w2, b2 = conv_init(keys[2 * g + 1], cgo, chid, 3, 3)
        groups.append(dict(w1=w1, b1=b1, w2=w2, b2=b2))
    wo, bo = conv_init(keys[-1], cin, num_group * cgo, 1, 1)
    return dict(groups=groups, wo=wo, bo=bo)


# ---------------------------------------------------------------------------
# Pure-JAX reference (mirrors the PyTorch module, NCHW)
# ---------------------------------------------------------------------------
def _conv_ref(x, w, b, pad):
    out = lax.conv_general_dilated(x, w, (1, 1), [(pad, pad), (pad, pad)],
                                   dimension_numbers=("NCHW", "OIHW", "NCHW"))
    return out + b[None, :, None, None]


def resnext_reference(params, x):
    ys = []
    for p in params["groups"]:
        h = _conv_ref(x, p["w1"], p["b1"], 0)
        ys.append(_conv_ref(h, p["w2"], p["b2"], 1))
    z = jnp.concatenate(ys, axis=1)
    return _conv_ref(z, params["wo"], params["bo"], 0) + x


# ---------------------------------------------------------------------------
if __name__ == "__main__":
    num_group, input_channels, hidden_channels, group_output_channels = 2, 4, 8, 4
    N, H, W = 2, 16, 16

    key = jax.random.PRNGKey(0)
    kx, kp = jax.random.split(key)
    x = jax.random.normal(kx, (N, input_channels, H, W), jnp.float32)
    params = init_params(kp, num_group, input_channels, hidden_channels,
                         group_output_channels)

    fwd = jax.jit(resnext_forward)
    out = jax.block_until_ready(fwd(params, x))
    ref = jax.block_until_ready(resnext_reference(params, x))

    assert out.shape == (N, input_channels, H, W)
    assert jnp.allclose(out, ref, atol=1e-4, rtol=1e-4), "mismatch vs reference"
    print("KERNEL_OK")
</pallas_src>

<mosaic_0001>
module attributes {stable_mosaic.version = 11 : i64} {
  func.func @kernel(%arg0: i32, %arg1: memref<1x324x4xf32, #tpu.memory_space<vmem>>, %arg2: memref<4x16xf32, #tpu.memory_space<vmem>>, %arg3: memref<324x16xf32, #tpu.memory_space<vmem>>, %arg4: memref<9x16x8xf32, #tpu.memory_space<vmem>>, %arg5: memref<1x8xf32, #tpu.memory_space<vmem>>, %arg6: memref<8x4xf32, #tpu.memory_space<vmem>>, %arg7: memref<1x4xf32, #tpu.memory_space<vmem>>, %arg8: memref<1x324x4xf32, #tpu.memory_space<vmem>>, %arg9: memref<372x16xf32, #tpu.memory_space<vmem>>) attributes {dimension_semantics = [#tpu.dimension_semantics<parallel>], iteration_bounds = array<i64: 2>, scalar_prefetch = 0 : i64, scratch_operands = 1 : i64, tpu.core_type = #tpu.core_type<tc>, window_params = [{transform_indices = @transform_0, window_bounds = array<i64: 1, 324, 4>}, {pipeline_mode = #tpu.pipeline_mode<synchronous>, transform_indices = @transform_1, window_bounds = array<i64: 4, 16>}, {pipeline_mode = #tpu.pipeline_mode<synchronous>, transform_indices = @transform_2, window_bounds = array<i64: 324, 16>}, {pipeline_mode = #tpu.pipeline_mode<synchronous>, transform_indices = @transform_3, window_bounds = array<i64: 9, 16, 8>}, {pipeline_mode = #tpu.pipeline_mode<synchronous>, transform_indices = @transform_4, window_bounds = array<i64: 1, 8>}, {pipeline_mode = #tpu.pipeline_mode<synchronous>, transform_indices = @transform_5, window_bounds = array<i64: 8, 4>}, {pipeline_mode = #tpu.pipeline_mode<synchronous>, transform_indices = @transform_6, window_bounds = array<i64: 1, 4>}, {transform_indices = @transform_7, window_bounds = array<i64: 1, 324, 4>}]} {
    %c0 = arith.constant 0 : index
    %c0_0 = arith.constant 0 : index
    %c0_1 = arith.constant 0 : index
    %0 = vector.load %arg1[%c0, %c0_0, %c0_1] : memref<1x324x4xf32, #tpu.memory_space<vmem>>, vector<1x324x4xf32>
    %1 = vector.shape_cast %0 : vector<1x324x4xf32> to vector<324x4xf32>
    %c0_2 = arith.constant 0 : index
    %c0_3 = arith.constant 0 : index
    %2 = vector.load %arg2[%c0_2, %c0_3] : memref<4x16xf32, #tpu.memory_space<vmem>>, vector<4x16xf32>
    %cst = arith.constant dense<0.000000e+00> : vector<324x16xf32>
    %3 = tpu.matmul %1, %2, %cst {dimension_numbers = #tpu.dot_dimension_numbers<[1], [0], [0], [1], [0, 0, 1, 1], [], []>} : vector<324x4xf32>, vector<4x16xf32>, vector<324x16xf32> -> vector<324x16xf32>
    %c0_4 = arith.constant 0 : index
    %c0_5 = arith.constant 0 : index
    %4 = vector.load %arg3[%c0_4, %c0_5] : memref<324x16xf32, #tpu.memory_space<vmem>>, vector<324x16xf32>
    %5 = arith.addf %3, %4 : vector<324x16xf32>
    %cst_6 = arith.constant 0.000000e+00 : f32
    %6 = vector.broadcast %cst_6 : f32 to vector<24x16xf32>
    %c0_7 = arith.constant 0 : index
    %c0_8 = arith.constant 0 : index
    %7 = vector.load %arg9[%c0_7, %c0_8] : memref<372x16xf32, #tpu.memory_space<vmem>>, vector<24x16xf32>
    tpu.vector_store %arg9[%c0_7, %c0_8], %6 {strides = array<i32>} : memref<372x16xf32, #tpu.memory_space<vmem>>, vector<24x16xf32>,
    %cst_9 = arith.constant 0.000000e+00 : f32
    %8 = vector.broadcast %cst_9 : f32 to vector<24x16xf32>
    %c348 = arith.constant 348 : index
    %c0_10 = arith.constant 0 : index
    %9 = vector.load %arg9[%c348, %c0_10] : memref<372x16xf32, #tpu.memory_space<vmem>>, vector<24x16xf32>
    tpu.vector_store %arg9[%c348, %c0_10], %8 {strides = array<i32>} : memref<372x16xf32, #tpu.memory_space<vmem>>, vector<24x16xf32>,
    %c24 = arith.constant 24 : index
    %c0_11 = arith.constant 0 : index
    %10 = vector.load %arg9[%c24, %c0_11] : memref<372x16xf32, #tpu.memory_space<vmem>>, vector<324x16xf32>
    tpu.vector_store %arg9[%c24, %c0_11], %5 {strides = array<i32>} : memref<372x16xf32, #tpu.memory_space<vmem>>, vector<324x16xf32>,
    %c0_12 = arith.constant 0 : index
    %c0_13 = arith.constant 0 : index
    %11 = vector.load %arg5[%c0_12, %c0_13] : memref<1x8xf32, #tpu.memory_space<vmem>>, vector<1x8xf32>
    %12 = vector.shape_cast %11 : vector<1x8xf32> to vector<1x8xf32>
    %13 = vector.broadcast %12 : vector<1x8xf32> to vector<324x8xf32>
    %c5 = arith.constant 5 : index
    %c0_14 = arith.constant 0 : index
    %14 = vector.load %arg9[%c5, %c0_14] : memref<372x16xf32, #tpu.memory_space<vmem>>, vector<324x16xf32>
    %c0_15 = arith.constant 0 : index
    %c0_16 = arith.constant 0 : index
    %c0_17 = arith.constant 0 : index
    %15 = vector.load %arg4[%c0_15, %c0_16, %c0_17] : memref<9x16x8xf32, #tpu.memory_space<vmem>>, vector<1x16x8xf32>
    %16 = vector.shape_cast %15 : vector<1x16x8xf32> to vector<16x8xf32>
    %cst_18 = arith.constant dense<0.000000e+00> : vector<324x8xf32>
    %17 = tpu.matmul %14, %16, %cst_18 {dimension_numbers = #tpu.dot_dimension_numbers<[1], [0], [0], [1], [0, 0, 1, 1], [], []>} : vector<324x16xf32>, vector<16x8xf32>, vector<324x8xf32> -> vector<324x8xf32>
    %18 = arith.addf %13, %17 : vector<324x8xf32>
    %c6 = arith.constant 6 : index
    %c0_19 = arith.constant 0 : index
    %19 = vector.load %arg9[%c6, %c0_19] : memref<372x16xf32, #tpu.memory_space<vmem>>, vector<324x16xf32>
    %c1 = arith.constant 1 : index
    %c0_20 = arith.constant 0 : index
    %c0_21 = arith.constant 0 : index
    %20 = vector.load %arg4[%c1, %c0_20, %c0_21] : memref<9x16x8xf32, #tpu.memory_space<vmem>>, vector<1x16x8xf32>
    %21 = vector.shape_cast %20 : vector<1x16x8xf32> to vector<16x8xf32>
    %cst_22 = arith.constant dense<0.000000e+00> : vector<324x8xf32>
    %22 = tpu.matmul %19, %21, %cst_22 {dimension_numbers = #tpu.dot_dimension_numbers<[1], [0], [0], [1], [0, 0, 1, 1], [], []>} : vector<324x16xf32>, vector<16x8xf32>, vector<324x8xf32> -> vector<324x8xf32>
    %23 = arith.addf %18, %22 : vector<324x8xf32>
    %c7 = arith.constant 7 : index
    %c0_23 = arith.constant 0 : index
    %24 = vector.load %arg9[%c7, %c0_23] : memref<372x16xf32, #tpu.memory_space<vmem>>, vector<324x16xf32>
    %c2 = arith.constant 2 : index
    %c0_24 = arith.constant 0 : index
    %c0_25 = arith.constant 0 : index
    %25 = vector.load %arg4[%c2, %c0_24, %c0_25] : memref<9x16x8xf32, #tpu.memory_space<vmem>>, vector<1x16x8xf32>
    %26 = vector.shape_cast %25 : vector<1x16x8xf32> to vector<16x8xf32>
    %cst_26 = arith.constant dense<0.000000e+00> : vector<324x8xf32>
    %27 = tpu.matmul %24, %26, %cst_26 {dimension_numbers = #tpu.dot_dimension_numbers<[1], [0], [0], [1], [0, 0, 1, 1], [], []>} : vector<324x16xf32>, vector<16x8xf32>, vector<324x8xf32> -> vector<324x8xf32>
    %28 = arith.addf %23, %27 : vector<324x8xf32>
    %c23 = arith.constant 23 : index
    %c0_27 = arith.constant 0 : index
    %29 = vector.load %arg9[%c23, %c0_27] : memref<372x16xf32, #tpu.memory_space<vmem>>, vector<324x16xf32>
    %c3 = arith.constant 3 : index
    %c0_28 = arith.constant 0 : index
    %c0_29 = arith.constant 0 : index
    %30 = vector.load %arg4[%c3, %c0_28, %c0_29] : memref<9x16x8xf32, #tpu.memory_space<vmem>>, vector<1x16x8xf32>
    %31 = vector.shape_cast %30 : vector<1x16x8xf32> to vector<16x8xf32>
    %cst_30 = arith.constant dense<0.000000e+00> : vector<324x8xf32>
    %32 = tpu.matmul %29, %31, %cst_30 {dimension_numbers = #tpu.dot_dimension_numbers<[1], [0], [0], [1], [0, 0, 1, 1], [], []>} : vector<324x16xf32>, vector<16x8xf32>, vector<324x8xf32> -> vector<324x8xf32>
    %33 = arith.addf %28, %32 : vector<324x8xf32>
    %c24_31 = arith.constant 24 : index
    %c0_32 = arith.constant 0 : index
    %34 = vector.load %arg9[%c24_31, %c0_32] : memref<372x16xf32, #tpu.memory_space<vmem>>, vector<324x16xf32>
    %c4 = arith.constant 4 : index
    %c0_33 = arith.constant 0 : index
    %c0_34 = arith.constant 0 : index
    %35 = vector.load %arg4[%c4, %c0_33, %c0_34] : memref<9x16x8xf32, #tpu.memory_space<vmem>>, vector<1x16x8xf32>
    %36 = vector.shape_cast %35 : vector<1x16x8xf32> to vector<16x8xf32>
    %cst_35 = arith.constant dense<0.000000e+00> : vector<324x8xf32>
    %37 = tpu.matmul %34, %36, %cst_35 {dimension_numbers = #tpu.dot_dimension_numbers<[1], [0], [0], [1], [0, 0, 1, 1], [], []>} : vector<324x16xf32>, vector<16x8xf32>, vector<324x8xf32> -> vector<324x8xf32>
    %38 = arith.addf %33, %37 : vector<324x8xf32>
    %c25 = arith.constant 25 : index
    %c0_36 = arith.constant 0 : index
    %39 = vector.load %arg9[%c25, %c0_36] : memref<372x16xf32, #tpu.memory_space<vmem>>, vector<324x16xf32>
    %c5_37 = arith.constant 5 : index
    %c0_38 = arith.constant 0 : index
    %c0_39 = arith.constant 0 : index
    %40 = vector.load %arg4[%c5_37, %c0_38, %c0_39] : memref<9x16x8xf32, #tpu.memory_space<vmem>>, vector<1x16x8xf32>
    %41 = vector.shape_cast %40 : vector<1x16x8xf32> to vector<16x8xf32>
    %cst_40 = arith.constant dense<0.000000e+00> : vector<324x8xf32>
    %42 = tpu.matmul %39, %41, %cst_40 {dimension_numbers = #tpu.dot_dimension_numbers<[1], [0], [0], [1], [0, 0, 1, 1], [], []>} : vector<324x16xf32>, vector<16x8xf32>, vector<324x8xf32> -> vector<324x8xf32>
    %43 = arith.addf %38, %42 : vector<324x8xf32>
    %c41 = arith.constant 41 : index
    %c0_41 = arith.constant 0 : index
    %44 = vector.load %arg9[%c41, %c0_41] : memref<372x16xf32, #tpu.memory_space<vmem>>, vector<324x16xf32>
    %c6_42 = arith.constant 6 : index
    %c0_43 = arith.constant 0 : index
    %c0_44 = arith.constant 0 : index
    %45 = vector.load %arg4[%c6_42, %c0_43, %c0_44] : memref<9x16x8xf32, #tpu.memory_space<vmem>>, vector<1x16x8xf32>
    %46 = vector.shape_cast %45 : vector<1x16x8xf32> to vector<16x8xf32>
    %cst_45 = arith.constant dense<0.000000e+00> : vector<324x8xf32>
    %47 = tpu.matmul %44, %46, %cst_45 {dimension_numbers = #tpu.dot_dimension_numbers<[1], [0], [0], [1], [0, 0, 1, 1], [], []>} : vector<324x16xf32>, vector<16x8xf32>, vector<324x8xf32> -> vector<324x8xf32>
    %48 = arith.addf %43, %47 : vector<324x8xf32>
    %c42 = arith.constant 42 : index
    %c0_46 = arith.constant 0 : index
    %49 = vector.load %arg9[%c42, %c0_46] : memref<372x16xf32, #tpu.memory_space<vmem>>, vector<324x16xf32>
    %c7_47 = arith.constant 7 : index
    %c0_48 = arith.constant 0 : index
    %c0_49 = arith.constant 0 : index
    %50 = vector.load %arg4[%c7_47, %c0_48, %c0_49] : memref<9x16x8xf32, #tpu.memory_space<vmem>>, vector<1x16x8xf32>
    %51 = vector.shape_cast %50 : vector<1x16x8xf32> to vector<16x8xf32>
    %cst_50 = arith.constant dense<0.000000e+00> : vector<324x8xf32>
    %52 = tpu.matmul %49, %51, %cst_50 {dimension_numbers = #tpu.dot_dimension_numbers<[1], [0], [0], [1], [0, 0, 1, 1], [], []>} : vector<324x16xf32>, vector<16x8xf32>, vector<324x8xf32> -> vector<324x8xf32>
    %53 = arith.addf %48, %52 : vector<324x8xf32>
    %c43 = arith.constant 43 : index
    %c0_51 = arith.constant 0 : index
    %54 = vector.load %arg9[%c43, %c0_51] : memref<372x16xf32, #tpu.memory_space<vmem>>, vector<324x16xf32>
    %c8 = arith.constant 8 : index
    %c0_52 = arith.constant 0 : index
    %c0_53 = arith.constant 0 : index
    %55 = vector.load %arg4[%c8, %c0_52, %c0_53] : memref<9x16x8xf32, #tpu.memory_space<vmem>>, vector<1x16x8xf32>
    %56 = vector.shape_cast %55 : vector<1x16x8xf32> to vector<16x8xf32>
    %cst_54 = arith.constant dense<0.000000e+00> : vector<324x8xf32>
    %57 = tpu.matmul %54, %56, %cst_54 {dimension_numbers = #tpu.dot_dimension_numbers<[1], [0], [0], [1], [0, 0, 1, 1], [], []>} : vector<324x16xf32>, vector<16x8xf32>, vector<324x8xf32> -> vector<324x8xf32>
    %58 = arith.addf %53, %57 : vector<324x8xf32>
    %c0_55 = arith.constant 0 : index
    %c0_56 = arith.constant 0 : index
    %59 = vector.load %arg6[%c0_55, %c0_56] : memref<8x4xf32, #tpu.memory_space<vmem>>, vector<8x4xf32>
    %cst_57 = arith.constant dense<0.000000e+00> : vector<324x4xf32>
    %60 = tpu.matmul %58, %59, %cst_57 {dimension_numbers = #tpu.dot_dimension_numbers<[1], [0], [0], [1], [0, 0, 1, 1], [], []>} : vector<324x8xf32>, vector<8x4xf32>, vector<324x4xf32> -> vector<324x4xf32>
    %c0_58 = arith.constant 0 : index
    %c0_59 = arith.constant 0 : index
    %61 = vector.load %arg7[%c0_58, %c0_59] : memref<1x4xf32, #tpu.memory_space<vmem>>, vector<1x4xf32>
    %62 = vector.broadcast %61 : vector<1x4xf32> to vector<324x4xf32>
    %63 = arith.addf %60, %62 : vector<324x4xf32>
    %64 = arith.addf %63, %1 : vector<324x4xf32>
    %c0_60 = arith.constant 0 : index
    %c0_61 = arith.constant 0 : index
    %c0_62 = arith.constant 0 : index
    %65 = vector.load %arg8[%c0_60, %c0_61, %c0_62] : memref<1x324x4xf32, #tpu.memory_space<vmem>>, vector<1x324x4xf32>
    %66 = vector.shape_cast %65 : vector<1x324x4xf32> to vector<324x4xf32>
    %67 = vector.shape_cast %64 : vector<324x4xf32> to vector<1x324x4xf32>
    tpu.vector_store %arg8[%c0_60, %c0_61, %c0_62], %67 {strides = array<i32>} : memref<1x324x4xf32, #tpu.memory_space<vmem>>, vector<1x324x4xf32>,
    return
  }
  func.func @transform_0(%arg0: i32) -> (i32, i32, i32) {
    %c0_i32 = arith.constant 0 : i32
    %c0_i32_0 = arith.constant 0 : i32
    %c0_i32_1 = arith.constant 0 : i32
    return %arg0, %c0_i32, %c0_i32_0 : i32, i32, i32
  }
  func.func @transform_1(%arg0: i32) -> (i32, i32) {
    %c0_i32 = arith.constant 0 : i32
    %c0_i32_0 = arith.constant 0 : i32
    %c0_i32_1 = arith.constant 0 : i32
    return %c0_i32, %c0_i32_0 : i32, i32
  }
  func.func @transform_2(%arg0: i32) -> (i32, i32) {
    %c0_i32 = arith.constant 0 : i32
    %c0_i32_0 = arith.constant 0 : i32
    %c0_i32_1 = arith.constant 0 : i32
    return %c0_i32, %c0_i32_0 : i32, i32
  }
  func.func @transform_3(%arg0: i32) -> (i32, i32, i32) {
    %c0_i32 = arith.constant 0 : i32
    %c0_i32_0 = arith.constant 0 : i32
    %c0_i32_1 = arith.constant 0 : i32
    %c0_i32_2 = arith.constant 0 : i32
    return %c0_i32, %c0_i32_0, %c0_i32_1 : i32, i32, i32
  }
  func.func @transform_4(%arg0: i32) -> (i32, i32) {
    %c0_i32 = arith.constant 0 : i32
    %c0_i32_0 = arith.constant 0 : i32
    %c0_i32_1 = arith.constant 0 : i32
    return %c0_i32, %c0_i32_0 : i32, i32
  }
  func.func @transform_5(%arg0: i32) -> (i32, i32) {
    %c0_i32 = arith.constant 0 : i32
    %c0_i32_0 = arith.constant 0 : i32
    %c0_i32_1 = arith.constant 0 : i32
    return %c0_i32, %c0_i32_0 : i32, i32
  }
  func.func @transform_6(%arg0: i32) -> (i32, i32) {
    %c0_i32 = arith.constant 0 : i32
    %c0_i32_0 = arith.constant 0 : i32
    %c0_i32_1 = arith.constant 0 : i32
    return %c0_i32, %c0_i32_0 : i32, i32
  }
  func.func @transform_7(%arg0: i32) -> (i32, i32, i32) {
    %c0_i32 = arith.constant 0 : i32
    %c0_i32_0 = arith.constant 0 : i32
    %c0_i32_1 = arith.constant 0 : i32
    return %arg0, %c0_i32, %c0_i32_0 : i32, i32, i32
  }
}

</mosaic_0001>

<llo_original>
// kernel: resnext_forward.1
$region0: #{resnext_forward.1}
  #allocation0 [shape = 'u32[]', space=smem, size = 0x4, offset = 0x4, fixed_abs, tag = 'smem constant byte address 0x4 - core index']
  #allocation1 [shape = 'u32[144,128]{1,0:T(1,128)}', space=vmem, size = 0x12000, scoped, tag = 'internal scratch']
  #allocation2 [shape = 'f32[372,16]{1,0:T(8,128)}', space=vmem, size = 0x2f000, scoped, tag = 'scratch operand']
  %s0 = inlined_call_operand.vmem [shape: f32[2,324,4], index: 0, kind: input, shape index: {}]
  %s1 = inlined_call_operand.vmem [shape: f32[4,16], index: 1, kind: input, shape index: {}]
  %s2 = inlined_call_operand.vmem [shape: f32[324,16], index: 2, kind: input, shape index: {}]
  %s3 = inlined_call_operand.vmem [shape: f32[9,16,8], index: 3, kind: input, shape index: {}]
  %s4 = inlined_call_operand.vmem [shape: f32[1,8], index: 4, kind: input, shape index: {}]
  %s5 = inlined_call_operand.vmem [shape: f32[8,4], index: 5, kind: input, shape index: {}]
  %s6 = inlined_call_operand.vmem [shape: f32[1,4], index: 6, kind: input, shape index: {}]
  %s7 = inlined_call_operand.vmem [shape: f32[2,324,4], index: 7, kind: output, shape index: {}]
  %s8 = sld [smem:[#allocation0]]
  $region61: #{resnext_forward.1} parent=0
    _
  %s10 = ssub.s32 1, %s8
  %s11 = scalar_select 0, %s10, %s8
  loop: start=0, step=1, limit=4
  $region2: #{resnext_forward.1} parent=0 // loop_pre_header
    _
  $region3: #{resnext_forward.1} parent=0 // loop_header
    %s13 = sphi 0, %s17
    %p14 = scmp.ge.s32.totalorder %s13, 4
    %s23 = sphi 0, %s25
    %s26 = sphi 0, %s23
    %s27 = sphi 0, %s26
    %s43 = sphi 0, %s27
    %s47 = sphi 0, %s47
    %s49 = sphi 0, %s47
    %s50 = sphi 0, %s49
    %s64 = sphi 0, %s50
    %s68 = sphi 0, %s68
    %s70 = sphi 0, %s68
    %s71 = sphi 0, %s70
    %s85 = sphi 0, %s71
    %s89 = sphi 0, %s89
    %s91 = sphi 0, %s89
    %s92 = sphi 0, %s91
    %s106 = sphi 0, %s92
    %s110 = sphi 0, %s110
    %s112 = sphi 0, %s110
    %s113 = sphi 0, %s112
    %s127 = sphi 0, %s113
    %s131 = sphi 0, %s131
    %s133 = sphi 0, %s131
    %s134 = sphi 0, %s133
    %s148 = sphi 0, %s134
    %s152 = sphi 0, %s152
    %s154 = sphi 0, %s152
    %s155 = sphi 0, %s154
    %s169 = sphi 0, %s155
    %s175 = sphi 0, %s177
    %s178 = sphi 0, %s175
    %s179 = sphi 0, %s178
    %s195 = sphi 0, %s179
  $region4: #{resnext_forward.1} parent=0 // loop_header_branch
    %16 = sbr.rel (%p14) target = $region8
  $region5: #{resnext_forward.1} parent=0 // loop_body
    %s18 = ssub.s32 %s13, 1
    %s19 = ssub.s32 %s13, 2
    %s20 = sadd.s32 %s13, 1
    %s21 = ssub.s32 %s13, %s20
    %p22 = scmp.eq.s32.totalorder %s21, 0
    %s24 = sadd.s32 %s23, 1
    %s25 = scalar_select %p22, %s23, %s24
    %p28 = pneg %p22
    %p29 = scmp.eq.s32.totalorder %s13, 1
    %p30 = por %p28, %p29
    %p31 = scmp.ne.s32.totalorder %s23, %s26
    %p32 = scmp.eq.s32.totalorder %s13, 0
    %p33 = por %p31, %p32
    %p34 = scmp.ne.s32.totalorder %s23, %s26
    %p35 = scmp.eq.s32.totalorder %s18, 1
    %p36 = por %p34, %p35
    %p37 = scmp.ne.s32.totalorder %s26, %s27
    %p38 = scmp.eq.s32.totalorder %s18, 0
    %p39 = por %p37, %p38
    %p40 = scmp.ne.s32.totalorder %s26, %s27
    %p41 = scmp.eq.s32.totalorder %s19, 1
    %p42 = por %p40, %p41
    %p44 = scmp.ne.s32.totalorder %s27, %s43
    %p45 = scmp.eq.s32.totalorder %s19, 0
    %p46 = por %p44, %p45
    %s48 = sadd.s32 %s47, 1
    %p51 = scmp.eq.s32.totalorder %s13, 1
    %p52 = scmp.ne.s32.totalorder %s47, %s49
    %p53 = scmp.eq.s32.totalorder %s13, 0
    %p54 = por %p52, %p53
    %p55 = scmp.ne.s32.totalorder %s47, %s49
    %p56 = scmp.eq.s32.totalorder %s18, 1
    %p57 = por %p55, %p56
    %p58 = scmp.ne.s32.totalorder %s49, %s50
    %p59 = scmp.eq.s32.totalorder %s18, 0
    %p60 = por %p58, %p59
    %p61 = scmp.ne.s32.totalorder %s49, %s50
    %p62 = scmp.eq.s32.totalorder %s19, 1
    %p63 = por %p61, %p62
    %p65 = scmp.ne.s32.totalorder %s50, %s64
    %p66 = scmp.eq.s32.totalorder %s19, 0
    %p67 = por %p65, %p66
    %s69 = sadd.s32 %s68, 1
    %p72 = scmp.eq.s32.totalorder %s13, 1
    %p73 = scmp.ne.s32.totalorder %s68, %s70
    %p74 = scmp.eq.s32.totalorder %s13, 0
    %p75 = por %p73, %p74
    %p76 = scmp.ne.s32.totalorder %s68, %s70
    %p77 = scmp.eq.s32.totalorder %s18, 1
    %p78 = por %p76, %p77
    %p79 = scmp.ne.s32.totalorder %s70, %s71
    %p80 = scmp.eq.s32.totalorder %s18, 0
    %p81 = por %p79, %p80
    %p82 = scmp.ne.s32.totalorder %s70, %s71
    %p83 = scmp.eq.s32.totalorder %s19, 1
    %p84 = por %p82, %p83
    %p86 = scmp.ne.s32.totalorder %s71, %s85
    %p87 = scmp.eq.s32.totalorder %s19, 0
    %p88 = por %p86, %p87
    %s90 = sadd.s32 %s89, 1
    %p93 = scmp.eq.s32.totalorder %s13, 1
    %p94 = scmp.ne.s32.totalorder %s89, %s91
    %p95 = scmp.eq.s32.totalorder %s13, 0
    %p96 = por %p94, %p95
    %p97 = scmp.ne.s32.totalorder %s89, %s91
    %p98 = scmp.eq.s32.totalorder %s18, 1
    %p99 = por %p97, %p98
    %p100 = scmp.ne.s32.totalorder %s91, %s92
    %p101 = scmp.eq.s32.totalorder %s18, 0
    %p102 = por %p100, %p101
    %p103 = scmp.ne.s32.totalorder %s91, %s92
    %p104 = scmp.eq.s32.totalorder %s19, 1
    %p105 = por %p103, %p104
    %p107 = scmp.ne.s32.totalorder %s92, %s106
    %p108 = scmp.eq.s32.totalorder %s19, 0
    %p109 = por %p107, %p108
    %s111 = sadd.s32 %s110, 1
    %p114 = scmp.eq.s32.totalorder %s13, 1
    %p115 = scmp.ne.s32.totalorder %s110, %s112
    %p116 = scmp.eq.s32.totalorder %s13, 0
    %p117 = por %p115, %p116
    %p118 = scmp.ne.s32.totalorder %s110, %s112
    %p119 = scmp.eq.s32.totalorder %s18, 1
    %p120 = por %p118, %p119
    %p121 = scmp.ne.s32.totalorder %s112, %s113
    %p122 = scmp.eq.s32.totalorder %s18, 0
    %p123 = por %p121, %p122
    %p124 = scmp.ne.s32.totalorder %s112, %s113
    %p125 = scmp.eq.s32.totalorder %s19, 1
    %p126 = por %p124, %p125
    %p128 = scmp.ne.s32.totalorder %s113, %s127
    %p129 = scmp.eq.s32.totalorder %s19, 0
    %p130 = por %p128, %p129
    %s132 = sadd.s32 %s131, 1
    %p135 = scmp.eq.s32.totalorder %s13, 1
    %p136 = scmp.ne.s32.totalorder %s131, %s133
    %p137 = scmp.eq.s32.totalorder %s13, 0
    %p138 = por %p136, %p137
    %p139 = scmp.ne.s32.totalorder %s131, %s133
    %p140 = scmp.eq.s32.totalorder %s18, 1
    %p141 = por %p139, %p140
    %p142 = scmp.ne.s32.totalorder %s133, %s134
    %p143 = scmp.eq.s32.totalorder %s18, 0
    %p144 = por %p142, %p143
    %p145 = scmp.ne.s32.totalorder %s133, %s134
    %p146 = scmp.eq.s32.totalorder %s19, 1
    %p147 = por %p145, %p146
    %p149 = scmp.ne.s32.totalorder %s134, %s148
    %p150 = scmp.eq.s32.totalorder %s19, 0
    %p151 = por %p149, %p150
    %s153 = sadd.s32 %s152, 1
    %p156 = scmp.eq.s32.totalorder %s13, 1
    %p157 = scmp.ne.s32.totalorder %s152, %s154
    %p158 = scmp.eq.s32.totalorder %s13, 0
    %p159 = por %p157, %p158
    %p160 = scmp.ne.s32.totalorder %s152, %s154
    %p161 = scmp.eq.s32.totalorder %s18, 1
    %p162 = por %p160, %p161
    %p163 = scmp.ne.s32.totalorder %s154, %s155
    %p164 = scmp.eq.s32.totalorder %s18, 0
    %p165 = por %p163, %p164
    %p166 = scmp.ne.s32.totalorder %s154, %s155
    %p167 = scmp.eq.s32.totalorder %s19, 1
    %p168 = por %p166, %p167
    %p170 = scmp.ne.s32.totalorder %s155, %s169
    %p171 = scmp.eq.s32.totalorder %s19, 0
    %p172 = por %p170, %p171
    %s173 = ssub.s32 %s13, %s20
    %p174 = scmp.eq.s32.totalorder %s173, 0
    %s176 = sadd.s32 %s175, 1
    %s177 = scalar_select %p174, %s175, %s176
    %p180 = pneg %p174
    %p181 = scmp.eq.s32.totalorder %s13, 1
    %p182 = por %p180, %p181
    %p183 = scmp.ne.s32.totalorder %s175, %s178
    %p184 = scmp.eq.s32.totalorder %s13, 0
    %p185 = por %p183, %p184
    %p186 = scmp.ne.s32.totalorder %s175, %s178
    %p187 = scmp.eq.s32.totalorder %s18, 1
    %p188 = por %p186, %p187
    %p189 = scmp.ne.s32.totalorder %s178, %s179
    %p190 = scmp.eq.s32.totalorder %s18, 0
    %p191 = por %p189, %p190
    %p192 = scmp.ne.s32.totalorder %s178, %s179
    %p193 = scmp.eq.s32.totalorder %s19, 1
    %p194 = por %p192, %p193
    %p196 = scmp.ne.s32.totalorder %s179, %s195
    %p197 = scmp.eq.s32.totalorder %s19, 0
    %p198 = por %p196, %p197
    %p199 = scmp.le.s32.totalorder 1, %s13
    %p200 = scmp.lt.s32.totalorder %s13, 3
    %p201 = pnand %p199, %p200
    %p202 = pneg %p201
    // Predicated region
    $region9: #{resnext_forward.1} parent=5 // pred_check
      _
    $region10: #{resnext_forward.1} parent=5 // pred_check_branch
      %204 = sbr.rel (%p201) target = $region12
    $region11: #{resnext_forward.1} parent=5 // pred_region
      %s205 = ssub.s32 %s13, 1
      // Predicated region
      $region13: #{resnext_forward.1} parent=11 // pred_check
        %p206 = pneg %p60
      $region14: #{resnext_forward.1} parent=11 // pred_check_branch
        %208 = sbr.rel (%p206) target = $region16
      $region15: #{resnext_forward.1} parent=11 // pred_region
        _
      $region16: #{resnext_forward.1} parent=11 // pred_fallthru
        _
      // Predicated region
      $region17: #{resnext_forward.1} parent=11 // pred_check
        %p209 = pneg %p81
      $region18: #{resnext_forward.1} parent=11 // pred_check_branch
        %211 = sbr.rel (%p209) target = $region20
      $region19: #{resnext_forward.1} parent=11 // pred_region
        _
      $region20: #{resnext_forward.1} parent=11 // pred_fallthru
        _
      // Predicated region
      $region21: #{resnext_forward.1} parent=11 // pred_check
        %p212 = pneg %p102
      $region22: #{resnext_forward.1} parent=11 // pred_check_branch
        %214 = sbr.rel (%p212) target = $region24
      $region23: #{resnext_forward.1} parent=11 // pred_region
        _
      $region24: #{resnext_forward.1} parent=11 // pred_fallthru
        _
      // Predicated region
      $region25: #{resnext_forward.1} parent=11 // pred_check
        %p215 = pneg %p123
      $region26: #{resnext_forward.1} parent=11 // pred_check_branch
        %217 = sbr.rel (%p215) target = $region28
      $region27: #{resnext_forward.1} parent=11 // pred_region
        _
      $region28: #{resnext_forward.1} parent=11 // pred_fallthru
        _
      // Predicated region
      $region29: #{resnext_forward.1} parent=11 // pred_check
        %p218 = pneg %p144
      $region30: #{resnext_forward.1} parent=11 // pred_check_branch
        %220 = sbr.rel (%p218) target = $region32
      $region31: #{resnext_forward.1} parent=11 // pred_region
        _
      $region32: #{resnext_forward.1} parent=11 // pred_fallthru
        _
      // Predicated region
      $region33: #{resnext_forward.1} parent=11 // pred_check
        %p221 = pneg %p165
      $region34: #{resnext_forward.1} parent=11 // pred_check_branch
        %223 = sbr.rel (%p221) target = $region36
      $region35: #{resnext_forward.1} parent=11 // pred_region
        _
      $region36: #{resnext_forward.1} parent=11 // pred_fallthru
        _
    $region12: #{resnext_forward.1} parent=5 // pred_fallthru
      _
    %p224 = scmp.lt.s32.totalorder %s13, 2
    // Predicated region
    $region37: #{resnext_forward.1} parent=5 // pred_check
      %p225 = pneg %p224
    $region38: #{resnext_forward.1} parent=5 // pred_check_branch
      %227 = sbr.rel (%p225) target = $region40
    $region39: #{resnext_forward.1} parent=5 // pred_region
      // Predicated region
      $region41: #{resnext_forward.1} parent=39 // pred_check
        %p228 = pneg %p33
      $region42: #{resnext_forward.1} parent=39 // pred_check_branch
        %230 = sbr.rel (%p228) target = $region44
      $region43: #{resnext_forward.1} parent=39 // pred_region
        %p231 = scmp.lt.s32.totalorder %s13, 1
        %s232 = scalar_select %p231, %s13, 1
        %s233 = smul.addr %s232, 41
        %s234 = smul.addr %s233, 8
        %s235 = scalar_lea.vmem %s0, %s234
      $region44: #{resnext_forward.1} parent=39 // pred_fallthru
        _
    $region40: #{resnext_forward.1} parent=5 // pred_fallthru
      _
    %p236 = scmp.le.s32.totalorder 1, %s13
    %p237 = scmp.lt.s32.totalorder %s13, 3
    %p238 = pnand %p236, %p237
    %p239 = pneg %p238
    // Predicated region
    $region45: #{resnext_forward.1} parent=5 // pred_check
      _
    $region46: #{resnext_forward.1} parent=5 // pred_check_branch
      %241 = sbr.rel (%p238) target = $region48
    $region47: #{resnext_forward.1} parent=5 // pred_region
      %s242 = ssub.s32 %s13, 1
      %p243 = scmp.lt.s32.totalorder %s18, 1
      %s244 = scalar_select %p243, %s18, 1
      %s245 = smul.addr %s244, 41
      %s246 = smul.addr %s245, 8
      %s247 = scalar_lea.vmem %s0, %s246
      %p248 = pneg %p39
      %p249 = pneg %p36
      %p250 = pneg %p60
      %p251 = pneg %p57
      %p252 = pneg %p81
      %p253 = pneg %p78
      %p254 = pneg %p102
      %p255 = pneg %p99
      %p256 = pneg %p123
      %p257 = pneg %p120
      %p258 = pneg %p144
      %p259 = pneg %p141
      %p260 = pneg %p165
      %p261 = pneg %p162
      %p262 = pneg %p191
      %p263 = pneg %p188
      %p264 = scmp.lt.s32.totalorder %s18, 1
      %s265 = scalar_select %p264, %s18, 1
      %s266 = smul.addr %s265, 41
      %s267 = smul.addr %s266, 8
      %s268 = scalar_lea.vmem %s7, %s267
      %p269 = scmp.lt.s32.totalorder %s18, 1
      %s270 = scalar_select %p269, %s18, 1
      %s271 = smul.addr %s270, 41
      %s272 = smul.addr %s271, 8
      %s273 = scalar_lea.vmem %s0, %s272
      %p274 = scmp.lt.s32.totalorder %s18, 1
      %s275 = scalar_select %p274, %s18, 1
      %s276 = smul.addr %s275, 41
      %s277 = smul.addr %s276, 8
      %s278 = scalar_lea.vmem %s7, %s277
      %v279 = vld [vmem:[%s273] sm:$0xff]
      %v280 = vld [vmem:[%s273 + $0x8] sm:$0xff]
      %v281 = vld [vmem:[%s273 + $0x10] sm:$0xff]
      %v282 = vld [vmem:[%s273 + $0x18] sm:$0xff]
      %v283 = vld [vmem:[%s273 + $0x20] sm:$0xff]
      %v284 = vld [vmem:[%s273 + $0x28] sm:$0xff]
      %v285 = vld [vmem:[%s273 + $0x30] sm:$0xff]
      %v286 = vld [vmem:[%s273 + $0x38] sm:$0xff]
      %v287 = vld [vmem:[%s273 + $0x40] sm:$0xff]
      %v288 = vld [vmem:[%s273 + $0x48] sm:$0xff]
      %v289 = vld [vmem:[%s273 + $0x50] sm:$0xff]
      %v290 = vld [vmem:[%s273 + $0x58] sm:$0xff]
      %v291 = vld [vmem:[%s273 + $0x60] sm:$0xff]
      %v292 = vld [vmem:[%s273 + $0x68] sm:$0xff]
      %v293 = vld [vmem:[%s273 + $0x70] sm:$0xff]
      %v294 = vld [vmem:[%s273 + $0x78] sm:$0xff]
      %v295 = vld [vmem:[%s273 + $0x80] sm:$0xff]
      %v296 = vld [vmem:[%s273 + $0x88] sm:$0xff]
      %v297 = vld [vmem:[%s273 + $0x90] sm:$0xff]
      %v298 = vld [vmem:[%s273 + $0x98] sm:$0xff]
      %v299 = vld [vmem:[%s273 + $0xa0] sm:$0xff]
      %v300 = vld [vmem:[%s273 + $0xa8] sm:$0xff]
      %v301 = vld [vmem:[%s273 + $0xb0] sm:$0xff]
      %v302 = vld [vmem:[%s273 + $0xb8] sm:$0xff]
      %v303 = vld [vmem:[%s273 + $0xc0] sm:$0xff]
      %v304 = vld [vmem:[%s273 + $0xc8] sm:$0xff]
      %v305 = vld [vmem:[%s273 + $0xd0] sm:$0xff]
      %v306 = vld [vmem:[%s273 + $0xd8] sm:$0xff]
      %v307 = vld [vmem:[%s273 + $0xe0] sm:$0xff]
      %v308 = vld [vmem:[%s273 + $0xe8] sm:$0xff]
      %v309 = vld [vmem:[%s273 + $0xf0] sm:$0xff]
      %v310 = vld [vmem:[%s273 + $0xf8] sm:$0xff]
      %v311 = vld [vmem:[%s273 + $0x100] sm:$0xff]
      %v312 = vld [vmem:[%s273 + $0x108] sm:$0xff]
      %v313 = vld [vmem:[%s273 + $0x110] sm:$0xff]
      %v314 = vld [vmem:[%s273 + $0x118] sm:$0xff]
      %v315 = vld [vmem:[%s273 + $0x120] sm:$0xff]
      %v316 = vld [vmem:[%s273 + $0x128] sm:$0xff]
      %v317 = vld [vmem:[%s273 + $0x130] sm:$0xff]
      %v318 = vld [vmem:[%s273 + $0x138] sm:$0xff]
      %v319 = vld [vmem:[%s273 + $0x140] sm:$0xf]
      %v320 = vld [vmem:[%s1] sm:$0xf]
      %v321 = vld [vmem:[%s2] sm:$0xff]
      %v322 = vld [vmem:[%s2 + $0x8] sm:$0xff]
      %v323 = vld [vmem:[%s2 + $0x10] sm:$0xff]
      %v324 = vld [vmem:[%s2 + $0x18] sm:$0xff]
      %v325 = vld [vmem:[%s2 + $0x20] sm:$0xff]
      %v326 = vld [vmem:[%s2 + $0x28] sm:$0xff]
      %v327 = vld [vmem:[%s2 + $0x30] sm:$0xff]
      %v328 = vld [vmem:[%s2 + $0x38] sm:$0xff]
      %v329 = vld [vmem:[%s2 + $0x40] sm:$0xff]
      %v330 = vld [vmem:[%s2 + $0x48] sm:$0xff]
      %v331 = vld [vmem:[%s2 + $0x50] sm:$0xff]
      %v332 = vld [vmem:[%s2 + $0x58] sm:$0xff]
      %v333 = vld [vmem:[%s2 + $0x60] sm:$0xff]
      %v334 = vld [vmem:[%s2 + $0x68] sm:$0xff]
      %v335 = vld [vmem:[%s2 + $0x70] sm:$0xff]
      %v336 = vld [vmem:[%s2 + $0x78] sm:$0xff]
      %v337 = vld [vmem:[%s2 + $0x80] sm:$0xff]
      %v338 = vld [vmem:[%s2 + $0x88] sm:$0xff]
      %v339 = vld [vmem:[%s2 + $0x90] sm:$0xff]
      %v340 = vld [vmem:[%s2 + $0x98] sm:$0xff]
      %v341 = vld [vmem:[%s2 + $0xa0] sm:$0xff]
      %v342 = vld [vmem:[%s2 + $0xa8] sm:$0xff]
      %v343 = vld [vmem:[%s2 + $0xb0] sm:$0xff]
      %v344 = vld [vmem:[%s2 + $0xb8] sm:$0xff]
      %v345 = vld [vmem:[%s2 + $0xc0] sm:$0xff]
      %v346 = vld [vmem:[%s2 + $0xc8] sm:$0xff]
      %v347 = vld [vmem:[%s2 + $0xd0] sm:$0xff]
      %v348 = vld [vmem:[%s2 + $0xd8] sm:$0xff]
      %v349 = vld [vmem:[%s2 + $0xe0] sm:$0xff]
      %v350 = vld [vmem:[%s2 + $0xe8] sm:$0xff]
      %v351 = vld [vmem:[%s2 + $0xf0] sm:$0xff]
      %v352 = vld [vmem:[%s2 + $0xf8] sm:$0xff]
      %v353 = vld [vmem:[%s2 + $0x100] sm:$0xff]
      %v354 = vld [vmem:[%s2 + $0x108] sm:$0xff]
      %v355 = vld [vmem:[%s2 + $0x110] sm:$0xff]
      %v356 = vld [vmem:[%s2 + $0x118] sm:$0xff]
      %v357 = vld [vmem:[%s2 + $0x120] sm:$0xff]
      %v358 = vld [vmem:[%s2 + $0x128] sm:$0xff]
      %v359 = vld [vmem:[%s2 + $0x130] sm:$0xff]
      %v360 = vld [vmem:[%s2 + $0x138] sm:$0xff]
      %v361 = vld [vmem:[%s2 + $0x140] sm:$0xf]
      %vm362 = vcmask 31744
      %v364 = vsel %vm362, %v279, 0
      %v367 = vsel %vm362, %v280, 0
      %v370 = vsel %vm362, %v281, 0
      %v373 = vsel %vm362, %v282, 0
      %v376 = vsel %vm362, %v283, 0
      %v379 = vsel %vm362, %v284, 0
      %v382 = vsel %vm362, %v285, 0
      %v385 = vsel %vm362, %v286, 0
      %v388 = vsel %vm362, %v287, 0
      %v391 = vsel %vm362, %v288, 0
      %v394 = vsel %vm362, %v289, 0
      %v397 = vsel %vm362, %v290, 0
      %v400 = vsel %vm362, %v291, 0
      %v403 = vsel %vm362, %v292, 0
      %v406 = vsel %vm362, %v293, 0
      %v409 = vsel %vm362, %v294, 0
      %v412 = vsel %vm362, %v295, 0
      %v415 = vsel %vm362, %v296, 0
      %v418 = vsel %vm362, %v297, 0
      %v421 = vsel %vm362, %v298, 0
      %v424 = vsel %vm362, %v299, 0
      %v427 = vsel %vm362, %v300, 0
      %v430 = vsel %vm362, %v301, 0
      %v433 = vsel %vm362, %v302, 0
      %v436 = vsel %vm362, %v303, 0
      %v439 = vsel %vm362, %v304, 0
      %v442 = vsel %vm362, %v305, 0
      %v445 = vsel %vm362, %v306, 0
      %v448 = vsel %vm362, %v307, 0
      %v451 = vsel %vm362, %v308, 0
      %v454 = vsel %vm362, %v309, 0
      %v457 = vsel %vm362, %v310, 0
      %v460 = vsel %vm362, %v311, 0
      %v463 = vsel %vm362, %v312, 0
      %v466 = vsel %vm362, %v313, 0
      %v469 = vsel %vm362, %v314, 0
      %v472 = vsel %vm362, %v315, 0
      %v475 = vsel %vm362, %v316, 0
      %v478 = vsel %vm362, %v317, 0
      %v481 = vsel %vm362, %v318, 0
      %v484 = vsel %vm362, %v319, 0
      %vm486 = vcmask 1043456
      %v488 = vsel %vm486, %v320, 0
      %490 = vmatprep.subr.mxu0 0.0
      %491 = vmatpush1.msra.mxu0 %v488
      %492 = vmatprep.subr.mxu0 0.0
      %493 = vmatpush1.msra.mxu0 0.0
      %494 = vmatprep.subr.mxu0 0.0
      %495 = vmatpush1.msra.mxu0 0.0
      %496 = vmatprep.subr.mxu0 0.0
      %497 = vmatpush1.msra.mxu0 0.0
      %498 = vmatprep.subr.mxu0 0.0
      %499 = vmatpush1.msra.mxu0 0.0
      %500 = vmatprep.subr.mxu0 0.0
      %501 = vmatpush1.msra.mxu0 0.0
      %502 = vmatprep.subr.mxu0 0.0
      %503 = vmatpush1.msra.mxu0 0.0
      %504 = vmatprep.subr.mxu0 0.0
      %505 = vmatpush1.msra.mxu0 0.0
      %506 = vmatprep.subr.mxu0 0.0
      %507 = vmatpush1.msra.mxu0 0.0
      %508 = vmatprep.subr.mxu0 0.0
      %509 = vmatpush1.msra.mxu0 0.0
      %510 = vmatprep.subr.mxu0 0.0
      %511 = vmatpush1.msra.mxu0 0.0
      %512 = vmatprep.subr.mxu0 0.0
      %513 = vmatpush1.msra.mxu0 0.0
      %514 = vmatprep.subr.mxu0 0.0
      %515 = vmatpush1.msra.mxu0 0.0
      %516 = vmatprep.subr.mxu0 0.0
      %517 = vmatpush1.msra.mxu0 0.0
      %518 = vmatprep.subr.mxu0 0.0
      %519 = vmatpush1.msra.mxu0 0.0
      %520 = vmatprep.subr.mxu0 0.0
      %521 = vmatpush1.msra.mxu0 0.0
      %522 = vmatprep.subr.mxu0 0.0
      %523 = vmatpush1.msra.mxu0 0.0
      %524 = vmatprep.subr.mxu0 0.0
      %525 = vmatpush1.msra.mxu0 0.0
      %526 = vmatprep.subr.mxu0 0.0
      %527 = vmatpush1.msra.mxu0 0.0
      %528 = vmatprep.subr.mxu0 0.0
      %529 = vmatpush1.msra.mxu0 0.0
      %530 = vmatprep.subr.mxu0 0.0
      %531 = vmatpush1.msra.mxu0 0.0
      %532 = vmatprep.subr.mxu0 0.0
      %533 = vmatpush1.msra.mxu0 0.0
      %534 = vmatprep.subr.mxu0 0.0
      %535 = vmatpush1.msra.mxu0 0.0
      %536 = vmatprep.subr.mxu0 0.0
      %537 = vmatpush1.msra.mxu0 0.0
      %538 = vmatprep.subr.mxu0 0.0
      %539 = vmatpush1.msra.mxu0 0.0
      %540 = vmatprep.subr.mxu0 0.0
      %541 = vmatpush1.msra.mxu0 0.0
      %542 = vmatprep.subr.mxu0 0.0
      %543 = vmatpush1.msra.mxu0 0.0
      %544 = vmatprep.subr.mxu0 0.0
      %545 = vmatpush1.msra.mxu0 0.0
      %546 = vmatprep.subr.mxu0 0.0
      %547 = vmatpush1.msra.mxu0 0.0
      %548 = vmatprep.subr.mxu0 0.0
      %549 = vmatpush1.msra.mxu0 0.0
      %550 = vmatprep.subr.mxu0 0.0
      %551 = vmatpush1.msra.mxu0 0.0
      %552 = vmatprep.subr.mxu0 0.0
      %553 = vmatpush1.msra.mxu0 0.0
      %554 = vmatprep.mubr.f32.mxu0 0.0
      %555 = vmatmul.mubr.f32.gmra.mrb[0].mxu0 %v364
      %v556 = vpop.f32.mrb[0].mxu0
      %v557 = vadd.f32 %v321, %v556
      %v558 = vpop.f32.mrb[0].mxu0
      %559 = vmatprep.mubr.f32.mxu0 0.0
      %560 = vmatmul.mubr.f32.gmra.mrb[0].mxu0 %v367
      %v561 = vpop.f32.mrb[0].mxu0
      %v562 = vadd.f32 %v322, %v561
      %v563 = vpop.f32.mrb[0].mxu0
      %564 = vmatprep.mubr.f32.mxu0 0.0
      %565 = vmatmul.mubr.f32.gmra.mrb[0].mxu0 %v370
      %v566 = vpop.f32.mrb[0].mxu0
      %v567 = vadd.f32 %v323, %v566
      %v568 = vpop.f32.mrb[0].mxu0
      %569 = vmatprep.mubr.f32.mxu0 0.0
      %570 = vmatmul.mubr.f32.gmra.mrb[0].mxu0 %v373
      %v571 = vpop.f32.mrb[0].mxu0
      %v572 = vadd.f32 %v324, %v571
      %v573 = vpop.f32.mrb[0].mxu0
      %574 = vmatprep.mubr.f32.mxu0 0.0
      %575 = vmatmul.mubr.f32.gmra.mrb[0].mxu0 %v376
      %v576 = vpop.f32.mrb[0].mxu0
      %v577 = vadd.f32 %v325, %v576
      %v578 = vpop.f32.mrb[0].mxu0
      %579 = vmatprep.mubr.f32.mxu0 0.0
      %580 = vmatmul.mubr.f32.gmra.mrb[0].mxu0 %v379
      %v581 = vpop.f32.mrb[0].mxu0
      %v582 = vadd.f32 %v326, %v581
      %v583 = vpop.f32.mrb[0].mxu0
      %584 = vmatprep.mubr.f32.mxu0 0.0
      %585 = vmatmul.mubr.f32.gmra.mrb[0].mxu0 %v382
      %v586 = vpop.f32.mrb[0].mxu0
      %v587 = vadd.f32 %v327, %v586
      %v588 = vpop.f32.mrb[0].mxu0
      %589 = vmatprep.mubr.f32.mxu0 0.0
      %590 = vmatmul.mubr.f32.gmra.mrb[0].mxu0 %v385
      %v591 = vpop.f32.mrb[0].mxu0
      %v592 = vadd.f32 %v328, %v591
      %v593 = vpop.f32.mrb[0].mxu0
      %594 = vmatprep.mubr.f32.mxu0 0.0
      %595 = vmatmul.mubr.f32.gmra.mrb[0].mxu0 %v388
      %v596 = vpop.f32.mrb[0].mxu0
      %v597 = vadd.f32 %v329, %v596
      %v598 = vpop.f32.mrb[0].mxu0
      %599 = vmatprep.mubr.f32.mxu0 0.0
      %600 = vmatmul.mubr.f32.gmra.mrb[0].mxu0 %v391
      %v601 = vpop.f32.mrb[0].mxu0
      %v602 = vadd.f32 %v330, %v601
      %v603 = vpop.f32.mrb[0].mxu0
      %604 = vmatprep.mubr.f32.mxu0 0.0
      %605 = vmatmul.mubr.f32.gmra.mrb[0].mxu0 %v394
      %v606 = vpop.f32.mrb[0].mxu0
      %v607 = vadd.f32 %v331, %v606
      %v608 = vpop.f32.mrb[0].mxu0
      %609 = vmatprep.mubr.f32.mxu0 0.0
      %610 = vmatmul.mubr.f32.gmra.mrb[0].mxu0 %v397
      %v611 = vpop.f32.mrb[0].mxu0
      %v612 = vadd.f32 %v332, %v611
      %v613 = vpop.f32.mrb[0].mxu0
      %614 = vmatprep.mubr.f32.mxu0 0.0
      %615 = vmatmul.mubr.f32.gmra.mrb[0].mxu0 %v400
      %v616 = vpop.f32.mrb[0].mxu0
      %v617 = vadd.f32 %v333, %v616
      %v618 = vpop.f32.mrb[0].mxu0
      %619 = vmatprep.mubr.f32.mxu0 0.0
      %620 = vmatmul.mubr.f32.gmra.mrb[0].mxu0 %v403
      %v621 = vpop.f32.mrb[0].mxu0
      %v622 = vadd.f32 %v334, %v621
      %v623 = vpop.f32.mrb[0].mxu0
      %624 = vmatprep.mubr.f32.mxu0 0.0
      %625 = vmatmul.mubr.f32.gmra.mrb[0].mxu0 %v406
      %v626 = vpop.f32.mrb[0].mxu0
      %v627 = vadd.f32 %v335, %v626
      %v628 = vpop.f32.mrb[0].mxu0
      %629 = vmatprep.mubr.f32.mxu0 0.0
      %630 = vmatmul.mubr.f32.gmra.mrb[0].mxu0 %v409
      %v631 = vpop.f32.mrb[0].mxu0
      %v632 = vadd.f32 %v336, %v631
      %v633 = vpop.f32.mrb[0].mxu0
      %634 = vmatprep.mubr.f32.mxu0 0.0
      %635 = vmatmul.mubr.f32.gmra.mrb[0].mxu0 %v412
      %v636 = vpop.f32.mrb[0].mxu0
      %v637 = vadd.f32 %v337, %v636
      %v638 = vpop.f32.mrb[0].mxu0
      %639 = vmatprep.mubr.f32.mxu0 0.0
      %640 = vmatmul.mubr.f32.gmra.mrb[0].mxu0 %v415
      %v641 = vpop.f32.mrb[0].mxu0
      %v642 = vadd.f32 %v338, %v641
      %v643 = vpop.f32.mrb[0].mxu0
      %644 = vmatprep.mubr.f32.mxu0 0.0
      %645 = vmatmul.mubr.f32.gmra.mrb[0].mxu0 %v418
      %v646 = vpop.f32.mrb[0].mxu0
      %v647 = vadd.f32 %v339, %v646
      %v648 = vpop.f32.mrb[0].mxu0
      %649 = vmatprep.mubr.f32.mxu0 0.0
      %650 = vmatmul.mubr.f32.gmra.mrb[0].mxu0 %v421
      %v651 = vpop.f32.mrb[0].mxu0
      %v652 = vadd.f32 %v340, %v651
      %v653 = vpop.f32.mrb[0].mxu0
      %654 = vmatprep.mubr.f32.mxu0 0.0
      %655 = vmatmul.mubr.f32.gmra.mrb[0].mxu0 %v424
      %v656 = vpop.f32.mrb[0].mxu0
      %v657 = vadd.f32 %v341, %v656
      %v658 = vpop.f32.mrb[0].mxu0
      %659 = vmatprep.mubr.f32.mxu0 0.0
      %660 = vmatmul.mubr.f32.gmra.mrb[0].mxu0 %v427
      %v661 = vpop.f32.mrb[0].mxu0
      %v662 = vadd.f32 %v342, %v661
      %v663 = vpop.f32.mrb[0].mxu0
      %664 = vmatprep.mubr.f32.mxu0 0.0
      %665 = vmatmul.mubr.f32.gmra.mrb[0].mxu0 %v430
      %v666 = vpop.f32.mrb[0].mxu0
      %v667 = vadd.f32 %v343, %v666
      %v668 = vpop.f32.mrb[0].mxu0
      %669 = vmatprep.mubr.f32.mxu0 0.0
      %670 = vmatmul.mubr.f32.gmra.mrb[0].mxu0 %v433
      %v671 = vpop.f32.mrb[0].mxu0
      %v672 = vadd.f32 %v344, %v671
      %v673 = vpop.f32.mrb[0].mxu0
      %674 = vmatprep.mubr.f32.mxu0 0.0
      %675 = vmatmul.mubr.f32.gmra.mrb[0].mxu0 %v436
      %v676 = vpop.f32.mrb[0].mxu0
      %v677 = vadd.f32 %v345, %v676
      %v678 = vpop.f32.mrb[0].mxu0
      %679 = vmatprep.mubr.f32.mxu0 0.0
      %680 = vmatmul.mubr.f32.gmra.mrb[0].mxu0 %v439
      %v681 = vpop.f32.mrb[0].mxu0
      %v682 = vadd.f32 %v346, %v681
      %v683 = vpop.f32.mrb[0].mxu0
      %684 = vmatprep.mubr.f32.mxu0 0.0
      %685 = vmatmul.mubr.f32.gmra.mrb[0].mxu0 %v442
      %v686 = vpop.f32.mrb[0].mxu0
      %v687 = vadd.f32 %v347, %v686
      %v688 = vpop.f32.mrb[0].mxu0
      %689 = vmatprep.mubr.f32.mxu0 0.0
      %690 = vmatmul.mubr.f32.gmra.mrb[0].mxu0 %v445
      %v691 = vpop.f32.mrb[0].mxu0
      %v692 = vadd.f32 %v348, %v691
      %v693 = vpop.f32.mrb[0].mxu0
      %694 = vmatprep.mubr.f32.mxu0 0.0
      %695 = vmatmul.mubr.f32.gmra.mrb[0].mxu0 %v448
      %v696 = vpop.f32.mrb[0].mxu0
      %v697 = vadd.f32 %v349, %v696
      %v698 = vpop.f32.mrb[0].mxu0
      %699 = vmatprep.mubr.f32.mxu0 0.0
      %700 = vmatmul.mubr.f32.gmra.mrb[0].mxu0 %v451
      %v701 = vpop.f32.mrb[0].mxu0
      %v702 = vadd.f32 %v350, %v701
      %v703 = vpop.f32.mrb[0].mxu0
      %704 = vmatprep.mubr.f32.mxu0 0.0
      %705 = vmatmul.mubr.f32.gmra.mrb[0].mxu0 %v454
      %v706 = vpop.f32.mrb[0].mxu0
      %v707 = vadd.f32 %v351, %v706
      %v708 = vpop.f32.mrb[0].mxu0
      %709 = vmatprep.mubr.f32.mxu0 0.0
      %710 = vmatmul.mubr.f32.gmra.mrb[0].mxu0 %v457
      %v711 = vpop.f32.mrb[0].mxu0
      %v712 = vadd.f32 %v352, %v711
      %v713 = vpop.f32.mrb[0].mxu0
      %714 = vmatprep.mubr.f32.mxu0 0.0
      %715 = vmatmul.mubr.f32.gmra.mrb[0].mxu0 %v460
      %v716 = vpop.f32.mrb[0].mxu0
      %v717 = vadd.f32 %v353, %v716
      %v718 = vpop.f32.mrb[0].mxu0
      %719 = vmatprep.mubr.f32.mxu0 0.0
      %720 = vmatmul.mubr.f32.gmra.mrb[0].mxu0 %v463
      %v721 = vpop.f32.mrb[0].mxu0
      %v722 = vadd.f32 %v354, %v721
      %v723 = vpop.f32.mrb[0].mxu0
      %724 = vmatprep.mubr.f32.mxu0 0.0
      %725 = vmatmul.mubr.f32.gmra.mrb[0].mxu0 %v466
      %v726 = vpop.f32.mrb[0].mxu0
      %v727 = vadd.f32 %v355, %v726
      %v728 = vpop.f32.mrb[0].mxu0
      %729 = vmatprep.mubr.f32.mxu0 0.0
      %730 = vmatmul.mubr.f32.gmra.mrb[0].mxu0 %v469
      %v731 = vpop.f32.mrb[0].mxu0
      %v732 = vadd.f32 %v356, %v731
      %v733 = vpop.f32.mrb[0].mxu0
      %734 = vmatprep.mubr.f32.mxu0 0.0
      %735 = vmatmul.mubr.f32.gmra.mrb[0].mxu0 %v472
      %v736 = vpop.f32.mrb[0].mxu0
      %v737 = vadd.f32 %v357, %v736
      %v738 = vpop.f32.mrb[0].mxu0
      %739 = vmatprep.mubr.f32.mxu0 0.0
      %740 = vmatmul.mubr.f32.gmra.mrb[0].mxu0 %v475
      %v741 = vpop.f32.mrb[0].mxu0
      %v742 = vadd.f32 %v358, %v741
      %v743 = vpop.f32.mrb[0].mxu0
      %744 = vmatprep.mubr.f32.mxu0 0.0
      %745 = vmatmul.mubr.f32.gmra.mrb[0].mxu0 %v478
      %v746 = vpop.f32.mrb[0].mxu0
      %v747 = vadd.f32 %v359, %v746
      %v748 = vpop.f32.mrb[0].mxu0
      %749 = vmatprep.mubr.f32.mxu0 0.0
      %750 = vmatmul.mubr.f32.gmra.mrb[0].mxu0 %v481
      %v751 = vpop.f32.mrb[0].mxu0
      %v752 = vadd.f32 %v360, %v751
      %v753 = vpop.f32.mrb[0].mxu0
      %754 = vmatprep.mubr.f32.mxu0 0.0
      %755 = vmatmul.mubr.f32.gmra.mrb[0].mxu0 %v484
      %v756 = vpop.f32.mrb[0].mxu0
      %v757 = vadd.f32 %v361, %v756
      %v758 = vpop.f32.mrb[0].mxu0
      %759 = vdwg.mxu0
      %vm760 = vcmask 130048
      %761 = vst.msk [vmem:[#allocation2] sm:$0xff] %vm760, 0.0
      %762 = vst.msk [vmem:[#allocation2 + $0x8] sm:$0xff] %vm760, 0.0
      %763 = vst.msk [vmem:[#allocation2 + $0x10] sm:$0xff] %vm760, 0.0
      %764 = vst.msk [vmem:[#allocation2 + $0x15c] sm:$0xff] %vm760, 0.0
      %765 = vst.msk [vmem:[#allocation2 + $0x164] sm:$0xff] %vm760, 0.0
      %766 = vst.msk [vmem:[#allocation2 + $0x16c] sm:$0xff] %vm760, 0.0
      %767 = vst.msk [vmem:[#allocation2 + $0x18] sm:$0xff] %vm760, %v557
      %768 = vst.msk [vmem:[#allocation2 + $0x20] sm:$0xff] %vm760, %v562
      %769 = vst.msk [vmem:[#allocation2 + $0x28] sm:$0xff] %vm760, %v567
      %770 = vst.msk [vmem:[#allocation2 + $0x30] sm:$0xff] %vm760, %v572
      %771 = vst.msk [vmem:[#allocation2 + $0x38] sm:$0xff] %vm760, %v577
      %772 = vst.msk [vmem:[#allocation2 + $0x40] sm:$0xff] %vm760, %v582
      %773 = vst.msk [vmem:[#allocation2 + $0x48] sm:$0xff] %vm760, %v587
      %774 = vst.msk [vmem:[#allocation2 + $0x50] sm:$0xff] %vm760, %v592
      %775 = vst.msk [vmem:[#allocation2 + $0x58] sm:$0xff] %vm760, %v597
      %776 = vst.msk [vmem:[#allocation2 + $0x60] sm:$0xff] %vm760, %v602
      %777 = vst.msk [vmem:[#allocation2 + $0x68] sm:$0xff] %vm760, %v607
      %778 = vst.msk [vmem:[#allocation2 + $0x70] sm:$0xff] %vm760, %v612
      %779 = vst.msk [vmem:[#allocation2 + $0x78] sm:$0xff] %vm760, %v617
      %780 = vst.msk [vmem:[#allocation2 + $0x80] sm:$0xff] %vm760, %v622
      %781 = vst.msk [vmem:[#allocation2 + $0x88] sm:$0xff] %vm760, %v627
      %782 = vst.msk [vmem:[#allocation2 + $0x90] sm:$0xff] %vm760, %v632
      %783 = vst.msk [vmem:[#allocation2 + $0x98] sm:$0xff] %vm760, %v637
      %784 = vst.msk [vmem:[#allocation2 + $0xa0] sm:$0xff] %vm760, %v642
      %785 = vst.msk [vmem:[#allocation2 + $0xa8] sm:$0xff] %vm760, %v647
      %786 = vst.msk [vmem:[#allocation2 + $0xb0] sm:$0xff] %vm760, %v652
      %787 = vst.msk [vmem:[#allocation2 + $0xb8] sm:$0xff] %vm760, %v657
      %788 = vst.msk [vmem:[#allocation2 + $0xc0] sm:$0xff] %vm760, %v662
      %789 = vst.msk [vmem:[#allocation2 + $0xc8] sm:$0xff] %vm760, %v667
      %790 = vst.msk [vmem:[#allocation2 + $0xd0] sm:$0xff] %vm760, %v672
      %791 = vst.msk [vmem:[#allocation2 + $0xd8] sm:$0xff] %vm760, %v677
      %792 = vst.msk [vmem:[#allocation2 + $0xe0] sm:$0xff] %vm760, %v682
      %793 = vst.msk [vmem:[#allocation2 + $0xe8] sm:$0xff] %vm760, %v687
      %794 = vst.msk [vmem:[#allocation2 + $0xf0] sm:$0xff] %vm760, %v692
      %795 = vst.msk [vmem:[#allocation2 + $0xf8] sm:$0xff] %vm760, %v697
      %796 = vst.msk [vmem:[#allocation2 + $0x100] sm:$0xff] %vm760, %v702
      %797 = vst.msk [vmem:[#allocation2 + $0x108] sm:$0xff] %vm760, %v707
      %798 = vst.msk [vmem:[#allocation2 + $0x110] sm:$0xff] %vm760, %v712
      %799 = vst.msk [vmem:[#allocation2 + $0x118] sm:$0xff] %vm760, %v717
      %800 = vst.msk [vmem:[#allocation2 + $0x120] sm:$0xff] %vm760, %v722
      %801 = vst.msk [vmem:[#allocation2 + $0x128] sm:$0xff] %vm760, %v727
      %802 = vst.msk [vmem:[#allocation2 + $0x130] sm:$0xff] %vm760, %v732
      %803 = vst.msk [vmem:[#allocation2 + $0x138] sm:$0xff] %vm760, %v737
      %804 = vst.msk [vmem:[#allocation2 + $0x140] sm:$0xff] %vm760, %v742
      %805 = vst.msk [vmem:[#allocation2 + $0x148] sm:$0xff] %vm760, %v747
      %806 = vst.msk [vmem:[#allocation2 + $0x150] sm:$0xff] %vm760, %v752
      %vm807 = vcmask 125952
      %808 = vst.msk [vmem:[#allocation2 + $0x158] sm:$0xf] %vm807, %v757
      %v809 = vld [vmem:[%s4] sm:$0x1]
      %v811 = vlaneseq
      %v812 = vshrl.u32 %v811, 7
      %v813 = vsub.s32 0, %v812
      %v814 = vrot.slane %v809, %v813
      %v816 = vld [vmem:[#allocation2 + $0x5] sm:$0xff]
      %v817 = vld [vmem:[#allocation2 + $0xd] sm:$0xff]
      %v818 = vld [vmem:[#allocation2 + $0x15] sm:$0xff]
      %v819 = vld [vmem:[#allocation2 + $0x1d] sm:$0xff]
      %v820 = vld [vmem:[#allocation2 + $0x25] sm:$0xff]
      %v821 = vld [vmem:[#allocation2 + $0x2d] sm:$0xff]
      %v822 = vld [vmem:[#allocation2 + $0x35] sm:$0xff]
      %v823 = vld [vmem:[#allocation2 + $0x3d] sm:$0xff]
      %v824 = vld [vmem:[#allocation2 + $0x45] sm:$0xff]
      %v825 = vld [vmem:[#allocation2 + $0x4d] sm:$0xff]
      %v826 = vld [vmem:[#allocation2 + $0x55] sm:$0xff]
      %v827 = vld [vmem:[#allocation2 + $0x5d] sm:$0xff]
      %v828 = vld [vmem:[#allocation2 + $0x65] sm:$0xff]
      %v829 = vld [vmem:[#allocation2 + $0x6d] sm:$0xff]
      %v830 = vld [vmem:[#allocation2 + $0x75] sm:$0xff]
      %v831 = vld [vmem:[#allocation2 + $0x7d] sm:$0xff]
      %v832 = vld [vmem:[#allocation2 + $0x85] sm:$0xff]
      %v833 = vld [vmem:[#allocation2 + $0x8d] sm:$0xff]
      %v834 = vld [vmem:[#allocation2 + $0x95] sm:$0xff]
      %v835 = vld [vmem:[#allocation2 + $0x9d] sm:$0xff]
      %v836 = vld [vmem:[#allocation2 + $0xa5] sm:$0xff]
      %v837 = vld [vmem:[#allocation2 + $0xad] sm:$0xff]
      %v838 = vld [vmem:[#allocation2 + $0xb5] sm:$0xff]
      %v839 = vld [vmem:[#allocation2 + $0xbd] sm:$0xff]
      %v840 = vld [vmem:[#allocation2 + $0xc5] sm:$0xff]
      %v841 = vld [vmem:[#allocation2 + $0xcd] sm:$0xff]
      %v842 = vld [vmem:[#allocation2 + $0xd5] sm:$0xff]
      %v843 = vld [vmem:[#allocation2 + $0xdd] sm:$0xff]
      %v844 = vld [vmem:[#allocation2 + $0xe5] sm:$0xff]
      %v845 = vld [vmem:[#allocation2 + $0xed] sm:$0xff]
      %v846 = vld [vmem:[#allocation2 + $0xf5] sm:$0xff]
      %v847 = vld [vmem:[#allocation2 + $0xfd] sm:$0xff]
      %v848 = vld [vmem:[#allocation2 + $0x105] sm:$0xff]
      %v849 = vld [vmem:[#allocation2 + $0x10d] sm:$0xff]
      %v850 = vld [vmem:[#allocation2 + $0x115] sm:$0xff]
      %v851 = vld [vmem:[#allocation2 + $0x11d] sm:$0xff]
      %v852 = vld [vmem:[#allocation2 + $0x125] sm:$0xff]
      %v853 = vld [vmem:[#allocation2 + $0x12d] sm:$0xff]
      %v854 = vld [vmem:[#allocation2 + $0x135] sm:$0xff]
      %v855 = vld [vmem:[#allocation2 + $0x13d] sm:$0xff]
      %v856 = vld [vmem:[#allocation2 + $0x145] sm:$0xf]
      %v857 = vld [vmem:[%s3] sm:$0xff]
      %v858 = vld [vmem:[%s3 + $0x8] sm:$0xff]
      %v860 = vsel %vm760, %v816, 0
      %v863 = vsel %vm760, %v817, 0
      %v866 = vsel %vm760, %v818, 0
      %v869 = vsel %vm760, %v819, 0
      %v872 = vsel %vm760, %v820, 0
      %v875 = vsel %vm760, %v821, 0
      %v878 = vsel %vm760, %v822, 0
      %v881 = vsel %vm760, %v823, 0
      %v884 = vsel %vm760, %v824, 0
      %v887 = vsel %vm760, %v825, 0
      %v890 = vsel %vm760, %v826, 0
      %v893 = vsel %vm760, %v827, 0
      %v896 = vsel %vm760, %v828, 0
      %v899 = vsel %vm760, %v829, 0
      %v902 = vsel %vm760, %v830, 0
      %v905 = vsel %vm760, %v831, 0
      %v908 = vsel %vm760, %v832, 0
      %v911 = vsel %vm760, %v833, 0
      %v914 = vsel %vm760, %v834, 0
      %v917 = vsel %vm760, %v835, 0
      %v920 = vsel %vm760, %v836, 0
      %v923 = vsel %vm760, %v837, 0
      %v926 = vsel %vm760, %v838, 0
      %v929 = vsel %vm760, %v839, 0
      %v932 = vsel %vm760, %v840, 0
      %v935 = vsel %vm760, %v841, 0
      %v938 = vsel %vm760, %v842, 0
      %v941 = vsel %vm760, %v843, 0
      %v944 = vsel %vm760, %v844, 0
      %v947 = vsel %vm760, %v845, 0
      %v950 = vsel %vm760, %v846, 0
      %v953 = vsel %vm760, %v847, 0
      %v956 = vsel %vm760, %v848, 0
      %v959 = vsel %vm760, %v849, 0
      %v962 = vsel %vm760, %v850, 0
      %v965 = vsel %vm760, %v851, 0
      %v968 = vsel %vm760, %v852, 0
      %v971 = vsel %vm760, %v853, 0
      %v974 = vsel %vm760, %v854, 0
      %v977 = vsel %vm760, %v855, 0
      %v980 = vsel %vm760, %v856, 0
      %982 = vmatprep.subr.mxu0 0.0
      %983 = vmatpush1.msra.mxu0 %v857
      %984 = vmatprep.subr.mxu0 0.0
      %985 = vmatpush1.msra.mxu0 %v858
      %986 = vmatprep.subr.mxu0 0.0
      %987 = vmatpush1.msra.mxu0 0.0
      %988 = vmatprep.subr.mxu0 0.0
      %989 = vmatpush1.msra.mxu0 0.0
      %990 = vmatprep.subr.mxu0 0.0
      %991 = vmatpush1.msra.mxu0 0.0
      %992 = vmatprep.subr.mxu0 0.0
      %993 = vmatpush1.msra.mxu0 0.0
      %994 = vmatprep.subr.mxu0 0.0
      %995 = vmatpush1.msra.mxu0 0.0
      %996 = vmatprep.subr.mxu0 0.0
      %997 = vmatpush1.msra.mxu0 0.0
      %998 = vmatprep.subr.mxu0 0.0
      %999 = vmatpush1.msra.mxu0 0.0
      %1000 = vmatprep.subr.mxu0 0.0
      %1001 = vmatpush1.msra.mxu0 0.0
      %1002 = vmatprep.subr.mxu0 0.0
      %1003 = vmatpush1.msra.mxu0 0.0
      %1004 = vmatprep.subr.mxu0 0.0
      %1005 = vmatpush1.msra.mxu0 0.0
      %1006 = vmatprep.subr.mxu0 0.0
      %1007 = vmatpush1.msra.mxu0 0.0
      %1008 = vmatprep.subr.mxu0 0.0
      %1009 = vmatpush1.msra.mxu0 0.0
      %1010 = vmatprep.subr.mxu0 0.0
      %1011 = vmatpush1.msra.mxu0 0.0
      %1012 = vmatprep.subr.mxu0 0.0
      %1013 = vmatpush1.msra.mxu0 0.0
      %1014 = vmatprep.subr.mxu0 0.0
      %1015 = vmatpush1.msra.mxu0 0.0
      %1016 = vmatprep.subr.mxu0 0.0
      %1017 = vmatpush1.msra.mxu0 0.0
      %1018 = vmatprep.subr.mxu0 0.0
      %1019 = vmatpush1.msra.mxu0 0.0
      %1020 = vmatprep.subr.mxu0 0.0
      %1021 = vmatpush1.msra.mxu0 0.0
      %1022 = vmatprep.subr.mxu0 0.0
      %1023 = vmatpush1.msra.mxu0 0.0
      %1024 = vmatprep.subr.mxu0 0.0
      %1025 = vmatpush1.msra.mxu0 0.0
      %1026 = vmatprep.subr.mxu0 0.0
      %1027 = vmatpush1.msra.mxu0 0.0
      %1028 = vmatprep.subr.mxu0 0.0
      %1029 = vmatpush1.msra.mxu0 0.0
      %1030 = vmatprep.subr.mxu0 0.0
      %1031 = vmatpush1.msra.mxu0 0.0
      %1032 = vmatprep.subr.mxu0 0.0
      %1033 = vmatpush1.msra.mxu0 0.0
      %1034 = vmatprep.subr.mxu0 0.0
      %1035 = vmatpush1.msra.mxu0 0.0
      %1036 = vmatprep.subr.mxu0 0.0
      %1037 = vmatpush1.msra.mxu0 0.0
      %1038 = vmatprep.subr.mxu0 0.0
      %1039 = vmatpush1.msra.mxu0 0.0
      %1040 = vmatprep.subr.mxu0 0.0
      %1041 = vmatpush1.msra.mxu0 0.0
      %1042 = vmatprep.subr.mxu0 0.0
      %1043 = vmatpush1.msra.mxu0 0.0
      %1044 = vmatprep.subr.mxu0 0.0
      %1045 = vmatpush1.msra.mxu0 0.0
      %1046 = vmatprep.mubr.f32.mxu0 0.0
      %1047 = vmatmul.mubr.f32.gmra.mrb[0].mxu0 %v860
      %v1048 = vpop.f32.mrb[0].mxu0
      %v1049 = vadd.f32 0.0, %v1048
      %v1050 = vpop.f32.mrb[0].mxu0
      %1051 = vmatprep.mubr.f32.mxu0 0.0
      %1052 = vmatmul.mubr.f32.gmra.mrb[0].mxu0 %v863
      %v1053 = vpop.f32.mrb[0].mxu0
      %v1054 = vadd.f32 0.0, %v1053
      %v1055 = vpop.f32.mrb[0].mxu0
      %1056 = vmatprep.mubr.f32.mxu0 0.0
      %1057 = vmatmul.mubr.f32.gmra.mrb[0].mxu0 %v866
      %v1058 = vpop.f32.mrb[0].mxu0
      %v1059 = vadd.f32 0.0, %v1058
      %v1060 = vpop.f32.mrb[0].mxu0
      %1061 = vmatprep.mubr.f32.mxu0 0.0
      %1062 = vmatmul.mubr.f32.gmra.mrb[0].mxu0 %v869
      %v1063 = vpop.f32.mrb[0].mxu0
      %v1064 = vadd.f32 0.0, %v1063
      %v1065 = vpop.f32.mrb[0].mxu0
      %1066 = vmatprep.mubr.f32.mxu0 0.0
      %1067 = vmatmul.mubr.f32.gmra.mrb[0].mxu0 %v872
      %v1068 = vpop.f32.mrb[0].mxu0
      %v1069 = vadd.f32 0.0, %v1068
      %v1070 = vpop.f32.mrb[0].mxu0
      %1071 = vmatprep.mubr.f32.mxu0 0.0
      %1072 = vmatmul.mubr.f32.gmra.mrb[0].mxu0 %v875
      %v1073 = vpop.f32.mrb[0].mxu0
      %v1074 = vadd.f32 0.0, %v1073
      %v1075 = vpop.f32.mrb[0].mxu0
      %1076 = vmatprep.mubr.f32.mxu0 0.0
      %1077 = vmatmul.mubr.f32.gmra.mrb[0].mxu0 %v878
      %v1078 = vpop.f32.mrb[0].mxu0
      %v1079 = vadd.f32 0.0, %v1078
      %v1080 = vpop.f32.mrb[0].mxu0
      %1081 = vmatprep.mubr.f32.mxu0 0.0
      %1082 = vmatmul.mubr.f32.gmra.mrb[0].mxu0 %v881
      %v1083 = vpop.f32.mrb[0].mxu0
      %v1084 = vadd.f32 0.0, %v1083
      %v1085 = vpop.f32.mrb[0].mxu0
      %1086 = vmatprep.mubr.f32.mxu0 0.0
      %1087 = vmatmul.mubr.f32.gmra.mrb[0].mxu0 %v884
      %v1088 = vpop.f32.mrb[0].mxu0
      %v1089 = vadd.f32 0.0, %v1088
      %v1090 = vpop.f32.mrb[0].mxu0
      %1091 = vmatprep.mubr.f32.mxu0 0.0
      %1092 = vmatmul.mubr.f32.gmra.mrb[0].mxu0 %v887
      %v1093 = vpop.f32.mrb[0].mxu0
      %v1094 = vadd.f32 0.0, %v1093
      %v1095 = vpop.f32.mrb[0].mxu0
      %1096 = vmatprep.mubr.f32.mxu0 0.0
      %1097 = vmatmul.mubr.f32.gmra.mrb[0].mxu0 %v890
      %v1098 = vpop.f32.mrb[0].mxu0
      %v1099 = vadd.f32 0.0, %v1098
      %v1100 = vpop.f32.mrb[0].mxu0
      %1101 = vmatprep.mubr.f32.mxu0 0.0
      %1102 = vmatmul.mubr.f32.gmra.mrb[0].mxu0 %v893
      %v1103 = vpop.f32.mrb[0].mxu0
      %v1104 = vadd.f32 0.0, %v1103
      %v1105 = vpop.f32.mrb[0].mxu0
      %1106 = vmatprep.mubr.f32.mxu0 0.0
      %1107 = vmatmul.mubr.f32.gmra.mrb[0].mxu0 %v896
      %v1108 = vpop.f32.mrb[0].mxu0
      %v1109 = vadd.f32 0.0, %v1108
      %v1110 = vpop.f32.mrb[0].mxu0
      %1111 = vmatprep.mubr.f32.mxu0 0.0
      %1112 = vmatmul.mubr.f32.gmra.mrb[0].mxu0 %v899
      %v1113 = vpop.f32.mrb[0].mxu0
      %v1114 = vadd.f32 0.0, %v1113
      %v1115 = vpop.f32.mrb[0].mxu0
      %1116 = vmatprep.mubr.f32.mxu0 0.0
      %1117 = vmatmul.mubr.f32.gmra.mrb[0].mxu0 %v902
      %v1118 = vpop.f32.mrb[0].mxu0
      %v1119 = vadd.f32 0.0, %v1118
      %v1120 = vpop.f32.mrb[0].mxu0
      %1121 = vmatprep.mubr.f32.mxu0 0.0
      %1122 = vmatmul.mubr.f32.gmra.mrb[0].mxu0 %v905
      %v1123 = vpop.f32.mrb[0].mxu0
      %v1124 = vadd.f32 0.0, %v1123
      %v1125 = vpop.f32.mrb[0].mxu0
      %1126 = vmatprep.mubr.f32.mxu0 0.0
      %1127 = vmatmul.mubr.f32.gmra.mrb[0].mxu0 %v908
      %v1128 = vpop.f32.mrb[0].mxu0
      %v1129 = vadd.f32 0.0, %v1128
      %v1130 = vpop.f32.mrb[0].mxu0
      %1131 = vmatprep.mubr.f32.mxu0 0.0
      %1132 = vmatmul.mubr.f32.gmra.mrb[0].mxu0 %v911
      %v1133 = vpop.f32.mrb[0].mxu0
      %v1134 = vadd.f32 0.0, %v1133
      %v1135 = vpop.f32.mrb[0].mxu0
      %1136 = vmatprep.mubr.f32.mxu0 0.0
      %1137 = vmatmul.mubr.f32.gmra.mrb[0].mxu0 %v914
      %v1138 = vpop.f32.mrb[0].mxu0
      %v1139 = vadd.f32 0.0, %v1138
      %v1140 = vpop.f32.mrb[0].mxu0
      %1141 = vmatprep.mubr.f32.mxu0 0.0
      %1142 = vmatmul.mubr.f32.gmra.mrb[0].mxu0 %v917
      %v1143 = vpop.f32.mrb[0].mxu0
      %v1144 = vadd.f32 0.0, %v1143
      %v1145 = vpop.f32.mrb[0].mxu0
      %1146 = vmatprep.mubr.f32.mxu0 0.0
      %1147 = vmatmul.mubr.f32.gmra.mrb[0].mxu0 %v920
      %v1148 = vpop.f32.mrb[0].mxu0
      %v1149 = vadd.f32 0.0, %v1148
      %v1150 = vpop.f32.mrb[0].mxu0
      %1151 = vmatprep.mubr.f32.mxu0 0.0
      %1152 = vmatmul.mubr.f32.gmra.mrb[0].mxu0 %v923
      %v1153 = vpop.f32.mrb[0].mxu0
      %v1154 = vadd.f32 0.0, %v1153
      %v1155 = vpop.f32.mrb[0].mxu0
      %1156 = vmatprep.mubr.f32.mxu0 0.0
      %1157 = vmatmul.mubr.f32.gmra.mrb[0].mxu0 %v926
      %v1158 = vpop.f32.mrb[0].mxu0
      %v1159 = vadd.f32 0.0, %v1158
      %v1160 = vpop.f32.mrb[0].mxu0
      %1161 = vmatprep.mubr.f32.mxu0 0.0
      %1162 = vmatmul.mubr.f32.gmra.mrb[0].mxu0 %v929
      %v1163 = vpop.f32.mrb[0].mxu0
      %v1164 = vadd.f32 0.0, %v1163
      %v1165 = vpop.f32.mrb[0].mxu0
      %1166 = vmatprep.mubr.f32.mxu0 0.0
      %1167 = vmatmul.mubr.f32.gmra.mrb[0].mxu0 %v932
      %v1168 = vpop.f32.mrb[0].mxu0
      %v1169 = vadd.f32 0.0, %v1168
      %v1170 = vpop.f32.mrb[0].mxu0
      %1171 = vmatprep.mubr.f32.mxu0 0.0
      %1172 = vmatmul.mubr.f32.gmra.mrb[0].mxu0 %v935
      %v1173 = vpop.f32.mrb[0].mxu0
      %v1174 = vadd.f32 0.0, %v1173
      %v1175 = vpop.f32.mrb[0].mxu0
      %1176 = vmatprep.mubr.f32.mxu0 0.0
      %1177 = vmatmul.mubr.f32.gmra.mrb[0].mxu0 %v938
      %v1178 = vpop.f32.mrb[0].mxu0
      %v1179 = vadd.f32 0.0, %v1178
      %v1180 = vpop.f32.mrb[0].mxu0
      %1181 = vmatprep.mubr.f32.mxu0 0.0
      %1182 = vmatmul.mubr.f32.gmra.mrb[0].mxu0 %v941
      %v1183 = vpop.f32.mrb[0].mxu0
      %v1184 = vadd.f32 0.0, %v1183
      %v1185 = vpop.f32.mrb[0].mxu0
      %1186 = vmatprep.mubr.f32.mxu0 0.0
      %1187 = vmatmul.mubr.f32.gmra.mrb[0].mxu0 %v944
      %v1188 = vpop.f32.mrb[0].mxu0
      %v1189 = vadd.f32 0.0, %v1188
      %v1190 = vpop.f32.mrb[0].mxu0
      %1191 = vmatprep.mubr.f32.mxu0 0.0
      %1192 = vmatmul.mubr.f32.gmra.mrb[0].mxu0 %v947
      %v1193 = vpop.f32.mrb[0].mxu0
      %v1194 = vadd.f32 0.0, %v1193
      %v1195 = vpop.f32.mrb[0].mxu0
      %1196 = vmatprep.mubr.f32.mxu0 0.0
      %1197 = vmatmul.mubr.f32.gmra.mrb[0].mxu0 %v950
      %v1198 = vpop.f32.mrb[0].mxu0
      %v1199 = vadd.f32 0.0, %v1198
      %v1200 = vpop.f32.mrb[0].mxu0
      %1201 = vmatprep.mubr.f32.mxu0 0.0
      %1202 = vmatmul.mubr.f32.gmra.mrb[0].mxu0 %v953
      %v1203 = vpop.f32.mrb[0].mxu0
      %v1204 = vadd.f32 0.0, %v1203
      %v1205 = vpop.f32.mrb[0].mxu0
      %1206 = vmatprep.mubr.f32.mxu0 0.0
      %1207 = vmatmul.mubr.f32.gmra.mrb[0].mxu0 %v956
      %v1208 = vpop.f32.mrb[0].mxu0
      %v1209 = vadd.f32 0.0, %v1208
      %v1210 = vpop.f32.mrb[0].mxu0
      %1211 = vmatprep.mubr.f32.mxu0 0.0
      %1212 = vmatmul.mubr.f32.gmra.mrb[0].mxu0 %v959
      %v1213 = vpop.f32.mrb[0].mxu0
      %v1214 = vadd.f32 0.0, %v1213
      %v1215 = vpop.f32.mrb[0].mxu0
      %1216 = vmatprep.mubr.f32.mxu0 0.0
      %1217 = vmatmul.mubr.f32.gmra.mrb[0].mxu0 %v962
      %v1218 = vpop.f32.mrb[0].mxu0
      %v1219 = vadd.f32 0.0, %v1218
      %v1220 = vpop.f32.mrb[0].mxu0
      %1221 = vmatprep.mubr.f32.mxu0 0.0
      %1222 = vmatmul.mubr.f32.gmra.mrb[0].mxu0 %v965
      %v1223 = vpop.f32.mrb[0].mxu0
      %v1224 = vadd.f32 0.0, %v1223
      %v1225 = vpop.f32.mrb[0].mxu0
      %1226 = vmatprep.mubr.f32.mxu0 0.0
      %1227 = vmatmul.mubr.f32.gmra.mrb[0].mxu0 %v968
      %v1228 = vpop.f32.mrb[0].mxu0
      %v1229 = vadd.f32 0.0, %v1228
      %v1230 = vpop.f32.mrb[0].mxu0
      %1231 = vmatprep.mubr.f32.mxu0 0.0
      %1232 = vmatmul.mubr.f32.gmra.mrb[0].mxu0 %v971
      %v1233 = vpop.f32.mrb[0].mxu0
      %v1234 = vadd.f32 0.0, %v1233
      %v1235 = vpop.f32.mrb[0].mxu0
      %1236 = vmatprep.mubr.f32.mxu0 0.0
      %1237 = vmatmul.mubr.f32.gmra.mrb[0].mxu0 %v974
      %v1238 = vpop.f32.mrb[0].mxu0
      %v1239 = vadd.f32 0.0, %v1238
      %v1240 = vpop.f32.mrb[0].mxu0
      %1241 = vmatprep.mubr.f32.mxu0 0.0
      %1242 = vmatmul.mubr.f32.gmra.mrb[0].mxu0 %v977
      %v1243 = vpop.f32.mrb[0].mxu0
      %v1244 = vadd.f32 0.0, %v1243
      %v1245 = vpop.f32.mrb[0].mxu0
      %1246 = vmatprep.mubr.f32.mxu0 0.0
      %1247 = vmatmul.mubr.f32.gmra.mrb[0].mxu0 %v980
      %v1248 = vpop.f32.mrb[0].mxu0
      %v1249 = vadd.f32 0.0, %v1248
      %v1250 = vpop.f32.mrb[0].mxu0
      %1251 = vdwg.mxu0
      %v1252 = vadd.f32 %v814, %v1049
      %v1253 = vadd.f32 %v814, %v1054
      %v1254 = vadd.f32 %v814, %v1059
      %v1255 = vadd.f32 %v814, %v1064
      %v1256 = vadd.f32 %v814, %v1069
      %v1257 = vadd.f32 %v814, %v1074
      %v1258 = vadd.f32 %v814, %v1079
      %v1259 = vadd.f32 %v814, %v1084
      %v1260 = vadd.f32 %v814, %v1089
      %v1261 = vadd.f32 %v814, %v1094
      %v1262 = vadd.f32 %v814, %v1099
      %v1263 = vadd.f32 %v814, %v1104
      %v1264 = vadd.f32 %v814, %v1109
      %v1265 = vadd.f32 %v814, %v1114
      %v1266 = vadd.f32 %v814, %v1119
      %v1267 = vadd.f32 %v814, %v1124
      %v1268 = vadd.f32 %v814, %v1129
      %v1269 = vadd.f32 %v814, %v1134
      %v1270 = vadd.f32 %v814, %v1139
      %v1271 = vadd.f32 %v814, %v1144
      %v1272 = vadd.f32 %v814, %v1149
      %v1273 = vadd.f32 %v814, %v1154
      %v1274 = vadd.f32 %v814, %v1159
      %v1275 = vadd.f32 %v814, %v1164
      %v1276 = vadd.f32 %v814, %v1169
      %v1277 = vadd.f32 %v814, %v1174
      %v1278 = vadd.f32 %v814, %v1179
      %v1279 = vadd.f32 %v814, %v1184
      %v1280 = vadd.f32 %v814, %v1189
      %v1281 = vadd.f32 %v814, %v1194
      %v1282 = vadd.f32 %v814, %v1199
      %v1283 = vadd.f32 %v814, %v1204
      %v1284 = vadd.f32 %v814, %v1209
      %v1285 = vadd.f32 %v814, %v1214
      %v1286 = vadd.f32 %v814, %v1219
      %v1287 = vadd.f32 %v814, %v1224
      %v1288 = vadd.f32 %v814, %v1229
      %v1289 = vadd.f32 %v814, %v1234
      %v1290 = vadd.f32 %v814, %v1239
      %v1291 = vadd.f32 %v814, %v1244
      %v1292 = vadd.f32 %v814, %v1249
      %v1293 = vld [vmem:[#allocation2 + $0x6] sm:$0xff]
      %v1294 = vld [vmem:[#allocation2 + $0xe] sm:$0xff]
      %v1295 = vld [vmem:[#allocation2 + $0x16] sm:$0xff]
      %v1296 = vld [vmem:[#allocation2 + $0x1e] sm:$0xff]
      %v1297 = vld [vmem:[#allocation2 + $0x26] sm:$0xff]
      %v1298 = vld [vmem:[#allocation2 + $0x2e] sm:$0xff]
      %v1299 = vld [vmem:[#allocation2 + $0x36] sm:$0xff]
      %v1300 = vld [vmem:[#allocation2 + $0x3e] sm:$0xff]
      %v1301 = vld [vmem:[#allocation2 + $0x46] sm:$0xff]
      %v1302 = vld [vmem:[#allocation2 + $0x4e] sm:$0xff]
      %v1303 = vld [vmem:[#allocation2 + $0x56] sm:$0xff]
      %v1304 = vld [vmem:[#allocation2 + $0x5e] sm:$0xff]
      %v1305 = vld [vmem:[#allocation2 + $0x66] sm:$0xff]
      %v1306 = vld [vmem:[#allocation2 + $0x6e] sm:$0xff]
      %v1307 = vld [vmem:[#allocation2 + $0x76] sm:$0xff]
      %v1308 = vld [vmem:[#allocation2 + $0x7e] sm:$0xff]
      %v1309 = vld [vmem:[#allocation2 + $0x86] sm:$0xff]
      %v1310 = vld [vmem:[#allocation2 + $0x8e] sm:$0xff]
      %v1311 = vld [vmem:[#allocation2 + $0x96] sm:$0xff]
      %v1312 = vld [vmem:[#allocation2 + $0x9e] sm:$0xff]
      %v1313 = vld [vmem:[#allocation2 + $0xa6] sm:$0xff]
      %v1314 = vld [vmem:[#allocation2 + $0xae] sm:$0xff]
      %v1315 = vld [vmem:[#allocation2 + $0xb6] sm:$0xff]
      %v1316 = vld [vmem:[#allocation2 + $0xbe] sm:$0xff]
      %v1317 = vld [vmem:[#allocation2 + $0xc6] sm:$0xff]
      %v1318 = vld [vmem:[#allocation2 + $0xce] sm:$0xff]
      %v1319 = vld [vmem:[#allocation2 + $0xd6] sm:$0xff]
      %v1320 = vld [vmem:[#allocation2 + $0xde] sm:$0xff]
      %v1321 = vld [vmem:[#allocation2 + $0xe6] sm:$0xff]
      %v1322 = vld [vmem:[#allocation2 + $0xee] sm:$0xff]
      %v1323 = vld [vmem:[#allocation2 + $0xf6] sm:$0xff]
      %v1324 = vld [vmem:[#allocation2 + $0xfe] sm:$0xff]
      %v1325 = vld [vmem:[#allocation2 + $0x106] sm:$0xff]
      %v1326 = vld [vmem:[#allocation2 + $0x10e] sm:$0xff]
      %v1327 = vld [vmem:[#allocation2 + $0x116] sm:$0xff]
      %v1328 = vld [vmem:[#allocation2 + $0x11e] sm:$0xff]
      %v1329 = vld [vmem:[#allocation2 + $0x126] sm:$0xff]
      %v1330 = vld [vmem:[#allocation2 + $0x12e] sm:$0xff]
      %v1331 = vld [vmem:[#allocation2 + $0x136] sm:$0xff]
      %v1332 = vld [vmem:[#allocation2 + $0x13e] sm:$0xff]
      %v1333 = vld [vmem:[#allocation2 + $0x146] sm:$0xf]
      %s1334 = scalar_lea.vmem %s3, 16
      %v1335 = vld [vmem:[%s1334] sm:$0xff]
      %v1336 = vld [vmem:[%s1334 + $0x8] sm:$0xff]
      %v1338 = vsel %vm760, %v1293, 0
      %v1341 = vsel %vm760, %v1294, 0
      %v1344 = vsel %vm760, %v1295, 0
      %v1347 = vsel %vm760, %v1296, 0
      %v1350 = vsel %vm760, %v1297, 0
      %v1353 = vsel %vm760, %v1298, 0
      %v1356 = vsel %vm760, %v1299, 0
      %v1359 = vsel %vm760, %v1300, 0
      %v1362 = vsel %vm760, %v1301, 0
      %v1365 = vsel %vm760, %v1302, 0
      %v1368 = vsel %vm760, %v1303, 0
      %v1371 = vsel %vm760, %v1304, 0
      %v1374 = vsel %vm760, %v1305, 0
      %v1377 = vsel %vm760, %v1306, 0
      %v1380 = vsel %vm760, %v1307, 0
      %v1383 = vsel %vm760, %v1308, 0
      %v1386 = vsel %vm760, %v1309, 0
      %v1389 = vsel %vm760, %v1310, 0
      %v1392 = vsel %vm760, %v1311, 0
      %v1395 = vsel %vm760, %v1312, 0
      %v1398 = vsel %vm760, %v1313, 0
      %v1401 = vsel %vm760, %v1314, 0
      %v1404 = vsel %vm760, %v1315, 0
      %v1407 = vsel %vm760, %v1316, 0
      %v1410 = vsel %vm760, %v1317, 0
      %v1413 = vsel %vm760, %v1318, 0
      %v1416 = vsel %vm760, %v1319, 0
      %v1419 = vsel %vm760, %v1320, 0
      %v1422 = vsel %vm760, %v1321, 0
      %v1425 = vsel %vm760, %v1322, 0
      %v1428 = vsel %vm760, %v1323, 0
      %v1431 = vsel %vm760, %v1324, 0
      %v1434 = vsel %vm760, %v1325, 0
      %v1437 = vsel %vm760, %v1326, 0
      %v1440 = vsel %vm760, %v1327, 0
      %v1443 = vsel %vm760, %v1328, 0
      %v1446 = vsel %vm760, %v1329, 0
      %v1449 = vsel %vm760, %v1330, 0
      %v1452 = vsel %vm760, %v1331, 0
      %v1455 = vsel %vm760, %v1332, 0
      %v1458 = vsel %vm760, %v1333, 0
      %1460 = vmatprep.subr.mxu0 0.0
      %1461 = vmatpush1.msra.mxu0 %v1335
      %1462 = vmatprep.subr.mxu0 0.0
      %1463 = vmatpush1.msra.mxu0 %v1336
      %1464 = vmatprep.subr.mxu0 0.0
      %1465 = vmatpush1.msra.mxu0 0.0
      %1466 = vmatprep.subr.mxu0 0.0
      %1467 = vmatpush1.msra.mxu0 0.0
      %1468 = vmatprep.subr.mxu0 0.0
      %1469 = vmatpush1.msra.mxu0 0.0
      %1470 = vmatprep.subr.mxu0 0.0
      %1471 = vmatpush1.msra.mxu0 0.0
      %1472 = vmatprep.subr.mxu0 0.0
      %1473 = vmatpush1.msra.mxu0 0.0
      %1474 = vmatprep.subr.mxu0 0.0
      %1475 = vmatpush1.msra.mxu0 0.0
      %1476 = vmatprep.subr.mxu0 0.0
      %1477 = vmatpush1.msra.mxu0 0.0
      %1478 = vmatprep.subr.mxu0 0.0
      %1479 = vmatpush1.msra.mxu0 0.0
      %1480 = vmatprep.subr.mxu0 0.0
      %1481 = vmatpush1.msra.mxu0 0.0
      %1482 = vmatprep.subr.mxu0 0.0
      %1483 = vmatpush1.msra.mxu0 0.0
      %1484 = vmatprep.subr.mxu0 0.0
      %1485 = vmatpush1.msra.mxu0 0.0
      %1486 = vmatprep.subr.mxu0 0.0
      %1487 = vmatpush1.msra.mxu0 0.0
      %1488 = vmatprep.subr.mxu0 0.0
      %1489 = vmatpush1.msra.mxu0 0.0
      %1490 = vmatprep.subr.mxu0 0.0
      %1491 = vmatpush1.msra.mxu0 0.0
      %1492 = vmatprep.subr.mxu0 0.0
      %1493 = vmatpush1.msra.mxu0 0.0
      %1494 = vmatprep.subr.mxu0 0.0
      %1495 = vmatpush1.msra.mxu0 0.0
      %1496 = vmatprep.subr.mxu0 0.0
      %1497 = vmatpush1.msra.mxu0 0.0
      %1498 = vmatprep.subr.mxu0 0.0
      %1499 = vmatpush1.msra.mxu0 0.0
      %1500 = vmatprep.subr.mxu0 0.0
      %1501 = vmatpush1.msra.mxu0 0.0
      %1502 = vmatprep.subr.mxu0 0.0
      %1503 = vmatpush1.msra.mxu0 0.0
      %1504 = vmatprep.subr.mxu0 0.0
      %1505 = vmatpush1.msra.mxu0 0.0
      %1506 = vmatprep.subr.mxu0 0.0
      %1507 = vmatpush1.msra.mxu0 0.0
      %1508 = vmatprep.subr.mxu0 0.0
      %1509 = vmatpush1.msra.mxu0 0.0
      %1510 = vmatprep.subr.mxu0 0.0
      %1511 = vmatpush1.msra.mxu0 0.0
      %1512 = vmatprep.subr.mxu0 0.0
      %1513 = vmatpush1.msra.mxu0 0.0
      %1514 = vmatprep.subr.mxu0 0.0
      %1515 = vmatpush1.msra.mxu0 0.0
      %1516 = vmatprep.subr.mxu0 0.0
      %1517 = vmatpush1.msra.mxu0 0.0
      %1518 = vmatprep.subr.mxu0 0.0
      %1519 = vmatpush1.msra.mxu0 0.0
      %1520 = vmatprep.subr.mxu0 0.0
      %1521 = vmatpush1.msra.mxu0 0.0
      %1522 = vmatprep.subr.mxu0 0.0
      %1523 = vmatpush1.msra.mxu0 0.0
      %1524 = vmatprep.mubr.f32.mxu0 0.0
      %1525 = vmatmul.mubr.f32.gmra.mrb[0].mxu0 %v1338
      %v1526 = vpop.f32.mrb[0].mxu0
      %v1527 = vadd.f32 0.0, %v1526
      %v1528 = vpop.f32.mrb[0].mxu0
      %1529 = vmatprep.mubr.f32.mxu0 0.0
      %1530 = vmatmul.mubr.f32.gmra.mrb[0].mxu0 %v1341
      %v1531 = vpop.f32.mrb[0].mxu0
      %v1532 = vadd.f32 0.0, %v1531
      %v1533 = vpop.f32.mrb[0].mxu0
      %1534 = vmatprep.mubr.f32.mxu0 0.0
      %1535 = vmatmul.mubr.f32.gmra.mrb[0].mxu0 %v1344
      %v1536 = vpop.f32.mrb[0].mxu0
      %v1537 = vadd.f32 0.0, %v1536
      %v1538 = vpop.f32.mrb[0].mxu0
      %1539 = vmatprep.mubr.f32.mxu0 0.0
      %1540 = vmatmul.mubr.f32.gmra.mrb[0].mxu0 %v1347
      %v1541 = vpop.f32.mrb[0].mxu0
      %v1542 = vadd.f32 0.0, %v1541
      %v1543 = vpop.f32.mrb[0].mxu0
      %1544 = vmatprep.mubr.f32.mxu0 0.0
      %1545 = vmatmul.mubr.f32.gmra.mrb[0].mxu0 %v1350
      %v1546 = vpop.f32.mrb[0].mxu0
      %v1547 = vadd.f32 0.0, %v1546
      %v1548 = vpop.f32.mrb[0].mxu0
      %1549 = vmatprep.mubr.f32.mxu0 0.0
      %1550 = vmatmul.mubr.f32.gmra.mrb[0].mxu0 %v1353
      %v1551 = vpop.f32.mrb[0].mxu0
      %v1552 = vadd.f32 0.0, %v1551
      %v1553 = vpop.f32.mrb[0].mxu0
      %1554 = vmatprep.mubr.f32.mxu0 0.0
      %1555 = vmatmul.mubr.f32.gmra.mrb[0].mxu0 %v1356
      %v1556 = vpop.f32.mrb[0].mxu0
      %v1557 = vadd.f32 0.0, %v1556
      %v1558 = vpop.f32.mrb[0].mxu0
      %1559 = vmatprep.mubr.f32.mxu0 0.0
      %1560 = vmatmul.mubr.f32.gmra.mrb[0].mxu0 %v1359
      %v1561 = vpop.f32.mrb[0].mxu0
      %v1562 = vadd.f32 0.0, %v1561
      %v1563 = vpop.f32.mrb[0].mxu0
      %1564 = vmatprep.mubr.f32.mxu0 0.0
      %1565 = vmatmul.mubr.f32.gmra.mrb[0].mxu0 %v1362
      %v1566 = vpop.f32.mrb[0].mxu0
      %v1567 = vadd.f32 0.0, %v1566
      %v1568 = vpop.f32.mrb[0].mxu0
      %1569 = vmatprep.mubr.f32.mxu0 0.0
      %1570 = vmatmul.mubr.f32.gmra.mrb[0].mxu0 %v1365
      %v1571 = vpop.f32.mrb[0].mxu0
      %v1572 = vadd.f32 0.0, %v1571
      %v1573 = vpop.f32.mrb[0].mxu0
      %1574 = vmatprep.mubr.f32.mxu0 0.0
      %1575 = vmatmul.mubr.f32.gmra.mrb[0].mxu0 %v1368
      %v1576 = vpop.f32.mrb[0].mxu0
      %v1577 = vadd.f32 0.0, %v1576
      %v1578 = vpop.f32.mrb[0].mxu0
      %1579 = vmatprep.mubr.f32.mxu0 0.0
      %1580 = vmatmul.mubr.f32.gmra.mrb[0].mxu0 %v1371
      %v1581 = vpop.f32.mrb[0].mxu0
      %v1582 = vadd.f32 0.0, %v1581
      %v1583 = vpop.f32.mrb[0].mxu0
      %1584 = vmatprep.mubr.f32.mxu0 0.0
      %1585 = vmatmul.mubr.f32.gmra.mrb[0].mxu0 %v1374
      %v1586 = vpop.f32.mrb[0].mxu0
      %v1587 = vadd.f32 0.0, %v1586
      %v1588 = vpop.f32.mrb[0].mxu0
      %1589 = vmatprep.mubr.f32.mxu0 0.0
      %1590 = vmatmul.mubr.f32.gmra.mrb[0].mxu0 %v1377
      %v1591 = vpop.f32.mrb[0].mxu0
      %v1592 = vadd.f32 0.0, %v1591
      %v1593 = vpop.f32.mrb[0].mxu0
      %1594 = vmatprep.mubr.f32.mxu0 0.0
      %1595 = vmatmul.mubr.f32.gmra.mrb[0].mxu0 %v1380
      %v1596 = vpop.f32.mrb[0].mxu0
      %v1597 = vadd.f32 0.0, %v1596
      %v1598 = vpop.f32.mrb[0].mxu0
      %1599 = vmatprep.mubr.f32.mxu0 0.0
      %1600 = vmatmul.mubr.f32.gmra.mrb[0].mxu0 %v1383
      %v1601 = vpop.f32.mrb[0].mxu0
      %v1602 = vadd.f32 0.0, %v1601
      %v1603 = vpop.f32.mrb[0].mxu0
      %1604 = vmatprep.mubr.f32.mxu0 0.0
      %1605 = vmatmul.mubr.f32.gmra.mrb[0].mxu0 %v1386
      %v1606 = vpop.f32.mrb[0].mxu0
      %v1607 = vadd.f32 0.0, %v1606
      %v1608 = vpop.f32.mrb[0].mxu0
      %1609 = vmatprep.mubr.f32.mxu0 0.0
      %1610 = vmatmul.mubr.f32.gmra.mrb[0].mxu0 %v1389
      %v1611 = vpop.f32.mrb[0].mxu0
      %v1612 = vadd.f32 0.0, %v1611
      %v1613 = vpop.f32.mrb[0].mxu0
      %1614 = vmatprep.mubr.f32.mxu0 0.0
      %1615 = vmatmul.mubr.f32.gmra.mrb[0].mxu0 %v1392
      %v1616 = vpop.f32.mrb[0].mxu0
      %v1617 = vadd.f32 0.0, %v1616
      %v1618 = vpop.f32.mrb[0].mxu0
      %1619 = vmatprep.mubr.f32.mxu0 0.0
      %1620 = vmatmul.mubr.f32.gmra.mrb[0].mxu0 %v1395
      %v1621 = vpop.f32.mrb[0].mxu0
      %v1622 = vadd.f32 0.0, %v1621
      %v1623 = vpop.f32.mrb[0].mxu0
      %1624 = vmatprep.mubr.f32.mxu0 0.0
      %1625 = vmatmul.mubr.f32.gmra.mrb[0].mxu0 %v1398
      %v1626 = vpop.f32.mrb[0].mxu0
      %v1627 = vadd.f32 0.0, %v1626
      %v1628 = vpop.f32.mrb[0].mxu0
      %1629 = vmatprep.mubr.f32.mxu0 0.0
      %1630 = vmatmul.mubr.f32.gmra.mrb[0].mxu0 %v1401
      %v1631 = vpop.f32.mrb[0].mxu0
      %v1632 = vadd.f32 0.0, %v1631
      %v1633 = vpop.f32.mrb[0].mxu0
      %1634 = vmatprep.mubr.f32.mxu0 0.0
      %1635 = vmatmul.mubr.f32.gmra.mrb[0].mxu0 %v1404
      %v1636 = vpop.f32.mrb[0].mxu0
      %v1637 = vadd.f32 0.0, %v1636
      %v1638 = vpop.f32.mrb[0].mxu0
      %1639 = vmatprep.mubr.f32.mxu0 0.0
      %1640 = vmatmul.mubr.f32.gmra.mrb[0].mxu0 %v1407
      %v1641 = vpop.f32.mrb[0].mxu0
      %v1642 = vadd.f32 0.0, %v1641
      %v1643 = vpop.f32.mrb[0].mxu0
      %1644 = vmatprep.mubr.f32.mxu0 0.0
      %1645 = vmatmul.mubr.f32.gmra.mrb[0].mxu0 %v1410
      %v1646 = vpop.f32.mrb[0].mxu0
      %v1647 = vadd.f32 0.0, %v1646
      %v1648 = vpop.f32.mrb[0].mxu0
      %1649 = vmatprep.mubr.f32.mxu0 0.0
      %1650 = vmatmul.mubr.f32.gmra.mrb[0].mxu0 %v1413
      %v1651 = vpop.f32.mrb[0].mxu0
      %v1652 = vadd.f32 0.0, %v1651
      %v1653 = vpop.f32.mrb[0].mxu0
      %1654 = vmatprep.mubr.f32.mxu0 0.0
      %1655 = vmatmul.mubr.f32.gmra.mrb[0].mxu0 %v1416
      %v1656 = vpop.f32.mrb[0].mxu0
      %v1657 = vadd.f32 0.0, %v1656
      %v1658 = vpop.f32.mrb[0].mxu0
      %1659 = vmatprep.mubr.f32.mxu0 0.0
      %1660 = vmatmul.mubr.f32.gmra.mrb[0].mxu0 %v1419
      %v1661 = vpop.f32.mrb[0].mxu0
      %v1662 = vadd.f32 0.0, %v1661
      %v1663 = vpop.f32.mrb[0].mxu0
      %1664 = vmatprep.mubr.f32.mxu0 0.0
      %1665 = vmatmul.mubr.f32.gmra.mrb[0].mxu0 %v1422
      %v1666 = vpop.f32.mrb[0].mxu0
      %v1667 = vadd.f32 0.0, %v1666
      %v1668 = vpop.f32.mrb[0].mxu0
      %1669 = vmatprep.mubr.f32.mxu0 0.0
      %1670 = vmatmul.mubr.f32.gmra.mrb[0].mxu0 %v1425
      %v1671 = vpop.f32.mrb[0].mxu0
      %v1672 = vadd.f32 0.0, %v1671
      %v1673 = vpop.f32.mrb[0].mxu0
      %1674 = vmatprep.mubr.f32.mxu0 0.0
      %1675 = vmatmul.mubr.f32.gmra.mrb[0].mxu0 %v1428
      %v1676 = vpop.f32.mrb[0].mxu0
      %v1677 = vadd.f32 0.0, %v1676
      %v1678 = vpop.f32.mrb[0].mxu0
      %1679 = vmatprep.mubr.f32.mxu0 0.0
      %1680 = vmatmul.mubr.f32.gmra.mrb[0].mxu0 %v1431
      %v1681 = vpop.f32.mrb[0].mxu0
      %v1682 = vadd.f32 0.0, %v1681
      %v1683 = vpop.f32.mrb[0].mxu0
      %1684 = vmatprep.mubr.f32.mxu0 0.0
      %1685 = vmatmul.mubr.f32.gmra.mrb[0].mxu0 %v1434
      %v1686 = vpop.f32.mrb[0].mxu0
      %v1687 = vadd.f32 0.0, %v1686
      %v1688 = vpop.f32.mrb[0].mxu0
      %1689 = vmatprep.mubr.f32.mxu0 0.0
      %1690 = vmatmul.mubr.f32.gmra.mrb[0].mxu0 %v1437
      %v1691 = vpop.f32.mrb[0].mxu0
      %v1692 = vadd.f32 0.0, %v1691
      %v1693 = vpop.f32.mrb[0].mxu0
      %1694 = vmatprep.mubr.f32.mxu0 0.0
      %1695 = vmatmul.mubr.f32.gmra.mrb[0].mxu0 %v1440
      %v1696 = vpop.f32.mrb[0].mxu0
      %v1697 = vadd.f32 0.0, %v1696
      %v1698 = vpop.f32.mrb[0].mxu0
      %1699 = vmatprep.mubr.f32.mxu0 0.0
      %1700 = vmatmul.mubr.f32.gmra.mrb[0].mxu0 %v1443
      %v1701 = vpop.f32.mrb[0].mxu0
      %v1702 = vadd.f32 0.0, %v1701
      %v1703 = vpop.f32.mrb[0].mxu0
      %1704 = vmatprep.mubr.f32.mxu0 0.0
      %1705 = vmatmul.mubr.f32.gmra.mrb[0].mxu0 %v1446
      %v1706 = vpop.f32.mrb[0].mxu0
      %v1707 = vadd.f32 0.0, %v1706
      %v1708 = vpop.f32.mrb[0].mxu0
      %1709 = vmatprep.mubr.f32.mxu0 0.0
      %1710 = vmatmul.mubr.f32.gmra.mrb[0].mxu0 %v1449
      %v1711 = vpop.f32.mrb[0].mxu0
      %v1712 = vadd.f32 0.0, %v1711
      %v1713 = vpop.f32.mrb[0].mxu0
      %1714 = vmatprep.mubr.f32.mxu0 0.0
      %1715 = vmatmul.mubr.f32.gmra.mrb[0].mxu0 %v1452
      %v1716 = vpop.f32.mrb[0].mxu0
      %v1717 = vadd.f32 0.0, %v1716
      %v1718 = vpop.f32.mrb[0].mxu0
      %1719 = vmatprep.mubr.f32.mxu0 0.0
      %1720 = vmatmul.mubr.f32.gmra.mrb[0].mxu0 %v1455
      %v1721 = vpop.f32.mrb[0].mxu0
      %v1722 = vadd.f32 0.0, %v1721
      %v1723 = vpop.f32.mrb[0].mxu0
      %1724 = vmatprep.mubr.f32.mxu0 0.0
      %1725 = vmatmul.mubr.f32.gmra.mrb[0].mxu0 %v1458
      %v1726 = vpop.f32.mrb[0].mxu0
      %v1727 = vadd.f32 0.0, %v1726
      %v1728 = vpop.f32.mrb[0].mxu0
      %1729 = vdwg.mxu0
      %v1730 = vadd.f32 %v1252, %v1527
      %v1731 = vadd.f32 %v1253, %v1532
      %v1732 = vadd.f32 %v1254, %v1537
      %v1733 = vadd.f32 %v1255, %v1542
      %v1734 = vadd.f32 %v1256, %v1547
      %v1735 = vadd.f32 %v1257, %v1552
      %v1736 = vadd.f32 %v1258, %v1557
      %v1737 = vadd.f32 %v1259, %v1562
      %v1738 = vadd.f32 %v1260, %v1567
      %v1739 = vadd.f32 %v1261, %v1572
      %v1740 = vadd.f32 %v1262, %v1577
      %v1741 = vadd.f32 %v1263, %v1582
      %v1742 = vadd.f32 %v1264, %v1587
      %v1743 = vadd.f32 %v1265, %v1592
      %v1744 = vadd.f32 %v1266, %v1597
      %v1745 = vadd.f32 %v1267, %v1602
      %v1746 = vadd.f32 %v1268, %v1607
      %v1747 = vadd.f32 %v1269, %v1612
      %v1748 = vadd.f32 %v1270, %v1617
      %v1749 = vadd.f32 %v1271, %v1622
      %v1750 = vadd.f32 %v1272, %v1627
      %v1751 = vadd.f32 %v1273, %v1632
      %v1752 = vadd.f32 %v1274, %v1637
      %v1753 = vadd.f32 %v1275, %v1642
      %v1754 = vadd.f32 %v1276, %v1647
      %v1755 = vadd.f32 %v1277, %v1652
      %v1756 = vadd.f32 %v1278, %v1657
      %v1757 = vadd.f32 %v1279, %v1662
      %v1758 = vadd.f32 %v1280, %v1667
      %v1759 = vadd.f32 %v1281, %v1672
      %v1760 = vadd.f32 %v1282, %v1677
      %v1761 = vadd.f32 %v1283, %v1682
      %v1762 = vadd.f32 %v1284, %v1687
      %v1763 = vadd.f32 %v1285, %v1692
      %v1764 = vadd.f32 %v1286, %v1697
      %v1765 = vadd.f32 %v1287, %v1702
      %v1766 = vadd.f32 %v1288, %v1707
      %v1767 = vadd.f32 %v1289, %v1712
      %v1768 = vadd.f32 %v1290, %v1717
      %v1769 = vadd.f32 %v1291, %v1722
      %v1770 = vadd.f32 %v1292, %v1727
      %v1771 = vld [vmem:[#allocation2 + $0x7] sm:$0xff]
      %v1772 = vld [vmem:[#allocation2 + $0xf] sm:$0xff]
      %v1773 = vld [vmem:[#allocation2 + $0x17] sm:$0xff]
      %v1774 = vld [vmem:[#allocation2 + $0x1f] sm:$0xff]
      %v1775 = vld [vmem:[#allocation2 + $0x27] sm:$0xff]
      %v1776 = vld [vmem:[#allocation2 + $0x2f] sm:$0xff]
      %v1777 = vld [vmem:[#allocation2 + $0x37] sm:$0xff]
      %v1778 = vld [vmem:[#allocation2 + $0x3f] sm:$0xff]
      %v1779 = vld [vmem:[#allocation2 + $0x47] sm:$0xff]
      %v1780 = vld [vmem:[#allocation2 + $0x4f] sm:$0xff]
      %v1781 = vld [vmem:[#allocation2 + $0x57] sm:$0xff]
      %v1782 = vld [vmem:[#allocation2 + $0x5f] sm:$0xff]
      %v1783 = vld [vmem:[#allocation2 + $0x67] sm:$0xff]
      %v1784 = vld [vmem:[#allocation2 + $0x6f] sm:$0xff]
      %v1785 = vld [vmem:[#allocation2 + $0x77] sm:$0xff]
      %v1786 = vld [vmem:[#allocation2 + $0x7f] sm:$0xff]
      %v1787 = vld [vmem:[#allocation2 + $0x87] sm:$0xff]
      %v1788 = vld [vmem:[#allocation2 + $0x8f] sm:$0xff]
      %v1789 = vld [vmem:[#allocation2 + $0x97] sm:$0xff]
      %v1790 = vld [vmem:[#allocation2 + $0x9f] sm:$0xff]
      %v1791 = vld [vmem:[#allocation2 + $0xa7] sm:$0xff]
      %v1792 = vld [vmem:[#allocation2 + $0xaf] sm:$0xff]
      %v1793 = vld [vmem:[#allocation2 + $0xb7] sm:$0xff]
      %v1794 = vld [vmem:[#allocation2 + $0xbf] sm:$0xff]
      %v1795 = vld [vmem:[#allocation2 + $0xc7] sm:$0xff]
      %v1796 = vld [vmem:[#allocation2 + $0xcf] sm:$0xff]
      %v1797 = vld [vmem:[#allocation2 + $0xd7] sm:$0xff]
      %v1798 = vld [vmem:[#allocation2 + $0xdf] sm:$0xff]
      %v1799 = vld [vmem:[#allocation2 + $0xe7] sm:$0xff]
      %v1800 = vld [vmem:[#allocation2 + $0xef] sm:$0xff]
      %v1801 = vld [vmem:[#allocation2 + $0xf7] sm:$0xff]
      %v1802 = vld [vmem:[#allocation2 + $0xff] sm:$0xff]
      %v1803 = vld [vmem:[#allocation2 + $0x107] sm:$0xff]
      %v1804 = vld [vmem:[#allocation2 + $0x10f] sm:$0xff]
      %v1805 = vld [vmem:[#allocation2 + $0x117] sm:$0xff]
      %v1806 = vld [vmem:[#allocation2 + $0x11f] sm:$0xff]
      %v1807 = vld [vmem:[#allocation2 + $0x127] sm:$0xff]
      %v1808 = vld [vmem:[#allocation2 + $0x12f] sm:$0xff]
      %v1809 = vld [vmem:[#allocation2 + $0x137] sm:$0xff]
      %v1810 = vld [vmem:[#allocation2 + $0x13f] sm:$0xff]
      %v1811 = vld [vmem:[#allocation2 + $0x147] sm:$0xf]
      %s1812 = scalar_lea.vmem %s3, 32
      %v1813 = vld [vmem:[%s1812] sm:$0xff]
      %v1814 = vld [vmem:[%s1812 + $0x8] sm:$0xff]
      %v1816 = vsel %vm760, %v1771, 0
      %v1819 = vsel %vm760, %v1772, 0
      %v1822 = vsel %vm760, %v1773, 0
      %v1825 = vsel %vm760, %v1774, 0
      %v1828 = vsel %vm760, %v1775, 0
      %v1831 = vsel %vm760, %v1776, 0
      %v1834 = vsel %vm760, %v1777, 0
      %v1837 = vsel %vm760, %v1778, 0
      %v1840 = vsel %vm760, %v1779, 0
      %v1843 = vsel %vm760, %v1780, 0
      %v1846 = vsel %vm760, %v1781, 0
      %v1849 = vsel %vm760, %v1782, 0
      %v1852 = vsel %vm760, %v1783, 0
      %v1855 = vsel %vm760, %v1784, 0
      %v1858 = vsel %vm760, %v1785, 0
      %v1861 = vsel %vm760, %v1786, 0
      %v1864 = vsel %vm760, %v1787, 0
      %v1867 = vsel %vm760, %v1788, 0
      %v1870 = vsel %vm760, %v1789, 0
      %v1873 = vsel %vm760, %v1790, 0
      %v1876 = vsel %vm760, %v1791, 0
      %v1879 = vsel %vm760, %v1792, 0
      %v1882 = vsel %vm760, %v1793, 0
      %v1885 = vsel %vm760, %v1794, 0
      %v1888 = vsel %vm760, %v1795, 0
      %v1891 = vsel %vm760, %v1796, 0
      %v1894 = vsel %vm760, %v1797, 0
      %v1897 = vsel %vm760, %v1798, 0
      %v1900 = vsel %vm760, %v1799, 0
      %v1903 = vsel %vm760, %v1800, 0
      %v1906 = vsel %vm760, %v1801, 0
      %v1909 = vsel %vm760, %v1802, 0
      %v1912 = vsel %vm760, %v1803, 0
      %v1915 = vsel %vm760, %v1804, 0
      %v1918 = vsel %vm760, %v1805, 0
      %v1921 = vsel %vm760, %v1806, 0
      %v1924 = vsel %vm760, %v1807, 0
      %v1927 = vsel %vm760, %v1808, 0
      %v1930 = vsel %vm760, %v1809, 0
      %v1933 = vsel %vm760, %v1810, 0
      %v1936 = vsel %vm760, %v1811, 0
      %1938 = vmatprep.subr.mxu0 0.0
      %1939 = vmatpush1.msra.mxu0 %v1813
      %1940 = vmatprep.subr.mxu0 0.0
      %1941 = vmatpush1.msra.mxu0 %v1814
      %1942 = vmatprep.subr.mxu0 0.0
      %1943 = vmatpush1.msra.mxu0 0.0
      %1944 = vmatprep.subr.mxu0 0.0
      %1945 = vmatpush1.msra.mxu0 0.0
      %1946 = vmatprep.subr.mxu0 0.0
      %1947 = vmatpush1.msra.mxu0 0.0
      %1948 = vmatprep.subr.mxu0 0.0
      %1949 = vmatpush1.msra.mxu0 0.0
      %1950 = vmatprep.subr.mxu0 0.0
      %1951 = vmatpush1.msra.mxu0 0.0
      %1952 = vmatprep.subr.mxu0 0.0
      %1953 = vmatpush1.msra.mxu0 0.0
      %1954 = vmatprep.subr.mxu0 0.0
      %1955 = vmatpush1.msra.mxu0 0.0
      %1956 = vmatprep.subr.mxu0 0.0
      %1957 = vmatpush1.msra.mxu0 0.0
      %1958 = vmatprep.subr.mxu0 0.0
      %1959 = vmatpush1.msra.mxu0 0.0
      %1960 = vmatprep.subr.mxu0 0.0
      %1961 = vmatpush1.msra.mxu0 0.0
      %1962 = vmatprep.subr.mxu0 0.0
      %1963 = vmatpush1.msra.mxu0 0.0
      %1964 = vmatprep.subr.mxu0 0.0
      %1965 = vmatpush1.msra.mxu0 0.0
      %1966 = vmatprep.subr.mxu0 0.0
      %1967 = vmatpush1.msra.mxu0 0.0
      %1968 = vmatprep.subr.mxu0 0.0
      %1969 = vmatpush1.msra.mxu0 0.0
      %1970 = vmatprep.subr.mxu0 0.0
      %1971 = vmatpush1.msra.mxu0 0.0
      %1972 = vmatprep.subr.mxu0 0.0
      %1973 = vmatpush1.msra.mxu0 0.0
      %1974 = vmatprep.subr.mxu0 0.0
      %1975 = vmatpush1.msra.mxu0 0.0
      %1976 = vmatprep.subr.mxu0 0.0
      %1977 = vmatpush1.msra.mxu0 0.0
      %1978 = vmatprep.subr.mxu0 0.0
      %1979 = vmatpush1.msra.mxu0 0.0
      %1980 = vmatprep.subr.mxu0 0.0
      %1981 = vmatpush1.msra.mxu0 0.0
      %1982 = vmatprep.subr.mxu0 0.0
      %1983 = vmatpush1.msra.mxu0 0.0
      %1984 = vmatprep.subr.mxu0 0.0
      %1985 = vmatpush1.msra.mxu0 0.0
      %1986 = vmatprep.subr.mxu0 0.0
      %1987 = vmatpush1.msra.mxu0 0.0
      %1988 = vmatprep.subr.mxu0 0.0
      %1989 = vmatpush1.msra.mxu0 0.0
      %1990 = vmatprep.subr.mxu0 0.0
      %1991 = vmatpush1.msra.mxu0 0.0
      %1992 = vmatprep.subr.mxu0 0.0
      %1993 = vmatpush1.msra.mxu0 0.0
      %1994 = vmatprep.subr.mxu0 0.0
      %1995 = vmatpush1.msra.mxu0 0.0
      %1996 = vmatprep.subr.mxu0 0.0
      %1997 = vmatpush1.msra.mxu0 0.0
      %1998 = vmatprep.subr.mxu0 0.0
      %1999 = vmatpush1.msra.mxu0 0.0
      %2000 = vmatprep.subr.mxu0 0.0
      %2001 = vmatpush1.msra.mxu0 0.0
      %2002 = vmatprep.mubr.f32.mxu0 0.0
      %2003 = vmatmul.mubr.f32.gmra.mrb[0].mxu0 %v1816
      %v2004 = vpop.f32.mrb[0].mxu0
      %v2005 = vadd.f32 0.0, %v2004
      %v2006 = vpop.f32.mrb[0].mxu0
      %2007 = vmatprep.mubr.f32.mxu0 0.0
      %2008 = vmatmul.mubr.f32.gmra.mrb[0].mxu0 %v1819
      %v2009 = vpop.f32.mrb[0].mxu0
      %v2010 = vadd.f32 0.0, %v2009
      %v2011 = vpop.f32.mrb[0].mxu0
      %2012 = vmatprep.mubr.f32.mxu0 0.0
      %2013 = vmatmul.mubr.f32.gmra.mrb[0].mxu0 %v1822
      %v2014 = vpop.f32.mrb[0].mxu0
      %v2015 = vadd.f32 0.0, %v2014
      %v2016 = vpop.f32.mrb[0].mxu0
      %2017 = vmatprep.mubr.f32.mxu0 0.0
      %2018 = vmatmul.mubr.f32.gmra.mrb[0].mxu0 %v1825
      %v2019 = vpop.f32.mrb[0].mxu0
      %v2020 = vadd.f32 0.0, %v2019
      %v2021 = vpop.f32.mrb[0].mxu0
      %2022 = vmatprep.mubr.f32.mxu0 0.0
      %2023 = vmatmul.mubr.f32.gmra.mrb[0].mxu0 %v1828
      %v2024 = vpop.f32.mrb[0].mxu0
      %v2025 = vadd.f32 0.0, %v2024
      %v2026 = vpop.f32.mrb[0].mxu0
      %2027 = vmatprep.mubr.f32.mxu0 0.0
      %2028 = vmatmul.mubr.f32.gmra.mrb[0].mxu0 %v1831
      %v2029 = vpop.f32.mrb[0].mxu0
      %v2030 = vadd.f32 0.0, %v2029
      %v2031 = vpop.f32.mrb[0].mxu0
      %2032 = vmatprep.mubr.f32.mxu0 0.0
      %2033 = vmatmul.mubr.f32.gmra.mrb[0].mxu0 %v1834
      %v2034 = vpop.f32.mrb[0].mxu0
      %v2035 = vadd.f32 0.0, %v2034
      %v2036 = vpop.f32.mrb[0].mxu0
      %2037 = vmatprep.mubr.f32.mxu0 0.0
      %2038 = vmatmul.mubr.f32.gmra.mrb[0].mxu0 %v1837
      %v2039 = vpop.f32.mrb[0].mxu0
      %v2040 = vadd.f32 0.0, %v2039
      %v2041 = vpop.f32.mrb[0].mxu0
      %2042 = vmatprep.mubr.f32.mxu0 0.0
      %2043 = vmatmul.mubr.f32.gmra.mrb[0].mxu0 %v1840
      %v2044 = vpop.f32.mrb[0].mxu0
      %v2045 = vadd.f32 0.0, %v2044
      %v2046 = vpop.f32.mrb[0].mxu0
      %2047 = vmatprep.mubr.f32.mxu0 0.0
      %2048 = vmatmul.mubr.f32.gmra.mrb[0].mxu0 %v1843
      %v2049 = vpop.f32.mrb[0].mxu0
      %v2050 = vadd.f32 0.0, %v2049
      %v2051 = vpop.f32.mrb[0].mxu0
      %2052 = vmatprep.mubr.f32.mxu0 0.0
      %2053 = vmatmul.mubr.f32.gmra.mrb[0].mxu0 %v1846
      %v2054 = vpop.f32.mrb[0].mxu0
      %v2055 = vadd.f32 0.0, %v2054
      %v2056 = vpop.f32.mrb[0].mxu0
      %2057 = vmatprep.mubr.f32.mxu0 0.0
      %2058 = vmatmul.mubr.f32.gmra.mrb[0].mxu0 %v1849
      %v2059 = vpop.f32.mrb[0].mxu0
      %v2060 = vadd.f32 0.0, %v2059
      %v2061 = vpop.f32.mrb[0].mxu0
      %2062 = vmatprep.mubr.f32.mxu0 0.0
      %2063 = vmatmul.mubr.f32.gmra.mrb[0].mxu0 %v1852
      %v2064 = vpop.f32.mrb[0].mxu0
      %v2065 = vadd.f32 0.0, %v2064
      %v2066 = vpop.f32.mrb[0].mxu0
      %2067 = vmatprep.mubr.f32.mxu0 0.0
      %2068 = vmatmul.mubr.f32.gmra.mrb[0].mxu0 %v1855
      %v2069 = vpop.f32.mrb[0].mxu0
      %v2070 = vadd.f32 0.0, %v2069
      %v2071 = vpop.f32.mrb[0].mxu0
      %2072 = vmatprep.mubr.f32.mxu0 0.0
      %2073 = vmatmul.mubr.f32.gmra.mrb[0].mxu0 %v1858
      %v2074 = vpop.f32.mrb[0].mxu0
      %v2075 = vadd.f32 0.0, %v2074
      %v2076 = vpop.f32.mrb[0].mxu0
      %2077 = vmatprep.mubr.f32.mxu0 0.0
      %2078 = vmatmul.mubr.f32.gmra.mrb[0].mxu0 %v1861
      %v2079 = vpop.f32.mrb[0].mxu0
      %v2080 = vadd.f32 0.0, %v2079
      %v2081 = vpop.f32.mrb[0].mxu0
      %2082 = vmatprep.mubr.f32.mxu0 0.0
      %2083 = vmatmul.mubr.f32.gmra.mrb[0].mxu0 %v1864
      %v2084 = vpop.f32.mrb[0].mxu0
      %v2085 = vadd.f32 0.0, %v2084
      %v2086 = vpop.f32.mrb[0].mxu0
      %2087 = vmatprep.mubr.f32.mxu0 0.0
      %2088 = vmatmul.mubr.f32.gmra.mrb[0].mxu0 %v1867
      %v2089 = vpop.f32.mrb[0].mxu0
      %v2090 = vadd.f32 0.0, %v2089
      %v2091 = vpop.f32.mrb[0].mxu0
      %2092 = vmatprep.mubr.f32.mxu0 0.0
      %2093 = vmatmul.mubr.f32.gmra.mrb[0].mxu0 %v1870
      %v2094 = vpop.f32.mrb[0].mxu0
      %v2095 = vadd.f32 0.0, %v2094
      %v2096 = vpop.f32.mrb[0].mxu0
      %2097 = vmatprep.mubr.f32.mxu0 0.0
      %2098 = vmatmul.mubr.f32.gmra.mrb[0].mxu0 %v1873
      %v2099 = vpop.f32.mrb[0].mxu0
      %v2100 = vadd.f32 0.0, %v2099
      %v2101 = vpop.f32.mrb[0].mxu0
      %2102 = vmatprep.mubr.f32.mxu0 0.0
      %2103 = vmatmul.mubr.f32.gmra.mrb[0].mxu0 %v1876
      %v2104 = vpop.f32.mrb[0].mxu0
      %v2105 = vadd.f32 0.0, %v2104
      %v2106 = vpop.f32.mrb[0].mxu0
      %2107 = vmatprep.mubr.f32.mxu0 0.0
      %2108 = vmatmul.mubr.f32.gmra.mrb[0].mxu0 %v1879
      %v2109 = vpop.f32.mrb[0].mxu0
      %v2110 = vadd.f32 0.0, %v2109
      %v2111 = vpop.f32.mrb[0].mxu0
      %2112 = vmatprep.mubr.f32.mxu0 0.0
      %2113 = vmatmul.mubr.f32.gmra.mrb[0].mxu0 %v1882
      %v2114 = vpop.f32.mrb[0].mxu0
      %v2115 = vadd.f32 0.0, %v2114
      %v2116 = vpop.f32.mrb[0].mxu0
      %2117 = vmatprep.mubr.f32.mxu0 0.0
      %2118 = vmatmul.mubr.f32.gmra.mrb[0].mxu0 %v1885
      %v2119 = vpop.f32.mrb[0].mxu0
      %v2120 = vadd.f32 0.0, %v2119
      %v2121 = vpop.f32.mrb[0].mxu0
      %2122 = vmatprep.mubr.f32.mxu0 0.0
      %2123 = vmatmul.mubr.f32.gmra.mrb[0].mxu0 %v1888
      %v2124 = vpop.f32.mrb[0].mxu0
      %v2125 = vadd.f32 0.0, %v2124
      %v2126 = vpop.f32.mrb[0].mxu0
      %2127 = vmatprep.mubr.f32.mxu0 0.0
      %2128 = vmatmul.mubr.f32.gmra.mrb[0].mxu0 %v1891
      %v2129 = vpop.f32.mrb[0].mxu0
      %v2130 = vadd.f32 0.0, %v2129
      %v2131 = vpop.f32.mrb[0].mxu0
      %2132 = vmatprep.mubr.f32.mxu0 0.0
      %2133 = vmatmul.mubr.f32.gmra.mrb[0].mxu0 %v1894
      %v2134 = vpop.f32.mrb[0].mxu0
      %v2135 = vadd.f32 0.0, %v2134
      %v2136 = vpop.f32.mrb[0].mxu0
      %2137 = vmatprep.mubr.f32.mxu0 0.0
      %2138 = vmatmul.mubr.f32.gmra.mrb[0].mxu0 %v1897
      %v2139 = vpop.f32.mrb[0].mxu0
      %v2140 = vadd.f32 0.0, %v2139
      %v2141 = vpop.f32.mrb[0].mxu0
      %2142 = vmatprep.mubr.f32.mxu0 0.0
      %2143 = vmatmul.mubr.f32.gmra.mrb[0].mxu0 %v1900
      %v2144 = vpop.f32.mrb[0].mxu0
      %v2145 = vadd.f32 0.0, %v2144
      %v2146 = vpop.f32.mrb[0].mxu0
      %2147 = vmatprep.mubr.f32.mxu0 0.0
      %2148 = vmatmul.mubr.f32.gmra.mrb[0].mxu0 %v1903
      %v2149 = vpop.f32.mrb[0].mxu0
      %v2150 = vadd.f32 0.0, %v2149
      %v2151 = vpop.f32.mrb[0].mxu0
      %2152 = vmatprep.mubr.f32.mxu0 0.0
      %2153 = vmatmul.mubr.f32.gmra.mrb[0].mxu0 %v1906
      %v2154 = vpop.f32.mrb[0].mxu0
      %v2155 = vadd.f32 0.0, %v2154
      %v2156 = vpop.f32.mrb[0].mxu0
      %2157 = vmatprep.mubr.f32.mxu0 0.0
      %2158 = vmatmul.mubr.f32.gmra.mrb[0].mxu0 %v1909
      %v2159 = vpop.f32.mrb[0].mxu0
      %v2160 = vadd.f32 0.0, %v2159
      %v2161 = vpop.f32.mrb[0].mxu0
      %2162 = vmatprep.mubr.f32.mxu0 0.0
      %2163 = vmatmul.mubr.f32.gmra.mrb[0].mxu0 %v1912
      %v2164 = vpop.f32.mrb[0].mxu0
      %v2165 = vadd.f32 0.0, %v2164
      %v2166 = vpop.f32.mrb[0].mxu0
      %2167 = vmatprep.mubr.f32.mxu0 0.0
      %2168 = vmatmul.mubr.f32.gmra.mrb[0].mxu0 %v1915
      %v2169 = vpop.f32.mrb[0].mxu0
      %v2170 = vadd.f32 0.0, %v2169
      %v2171 = vpop.f32.mrb[0].mxu0
      %2172 = vmatprep.mubr.f32.mxu0 0.0
      %2173 = vmatmul.mubr.f32.gmra.mrb[0].mxu0 %v1918
      %v2174 = vpop.f32.mrb[0].mxu0
      %v2175 = vadd.f32 0.0, %v2174
      %v2176 = vpop.f32.mrb[0].mxu0
      %2177 = vmatprep.mubr.f32.mxu0 0.0
      %2178 = vmatmul.mubr.f32.gmra.mrb[0].mxu0 %v1921
      %v2179 = vpop.f32.mrb[0].mxu0
      %v2180 = vadd.f32 0.0, %v2179
      %v2181 = vpop.f32.mrb[0].mxu0
      %2182 = vmatprep.mubr.f32.mxu0 0.0
      %2183 = vmatmul.mubr.f32.gmra.mrb[0].mxu0 %v1924
      %v2184 = vpop.f32.mrb[0].mxu0
      %v2185 = vadd.f32 0.0, %v2184
      %v2186 = vpop.f32.mrb[0].mxu0
      %2187 = vmatprep.mubr.f32.mxu0 0.0
      %2188 = vmatmul.mubr.f32.gmra.mrb[0].mxu0 %v1927
      %v2189 = vpop.f32.mrb[0].mxu0
      %v2190 = vadd.f32 0.0, %v2189
      %v2191 = vpop.f32.mrb[0].mxu0
      %2192 = vmatprep.mubr.f32.mxu0 0.0
      %2193 = vmatmul.mubr.f32.gmra.mrb[0].mxu0 %v1930
      %v2194 = vpop.f32.mrb[0].mxu0
      %v2195 = vadd.f32 0.0, %v2194
      %v2196 = vpop.f32.mrb[0].mxu0
      %2197 = vmatprep.mubr.f32.mxu0 0.0
      %2198 = vmatmul.mubr.f32.gmra.mrb[0].mxu0 %v1933
      %v2199 = vpop.f32.mrb[0].mxu0
      %v2200 = vadd.f32 0.0, %v2199
      %v2201 = vpop.f32.mrb[0].mxu0
      %2202 = vmatprep.mubr.f32.mxu0 0.0
      %2203 = vmatmul.mubr.f32.gmra.mrb[0].mxu0 %v1936
      %v2204 = vpop.f32.mrb[0].mxu0
      %v2205 = vadd.f32 0.0, %v2204
      %v2206 = vpop.f32.mrb[0].mxu0
      %2207 = vdwg.mxu0
      %v2208 = vadd.f32 %v1730, %v2005
      %v2209 = vadd.f32 %v1731, %v2010
      %v2210 = vadd.f32 %v1732, %v2015
      %v2211 = vadd.f32 %v1733, %v2020
      %v2212 = vadd.f32 %v1734, %v2025
      %v2213 = vadd.f32 %v1735, %v2030
      %v2214 = vadd.f32 %v1736, %v2035
      %v2215 = vadd.f32 %v1737, %v2040
      %v2216 = vadd.f32 %v1738, %v2045
      %v2217 = vadd.f32 %v1739, %v2050
      %v2218 = vadd.f32 %v1740, %v2055
      %v2219 = vadd.f32 %v1741, %v2060
      %v2220 = vadd.f32 %v1742, %v2065
      %v2221 = vadd.f32 %v1743, %v2070
      %v2222 = vadd.f32 %v1744, %v2075
      %v2223 = vadd.f32 %v1745, %v2080
      %v2224 = vadd.f32 %v1746, %v2085
      %v2225 = vadd.f32 %v1747, %v2090
      %v2226 = vadd.f32 %v1748, %v2095
      %v2227 = vadd.f32 %v1749, %v2100
      %v2228 = vadd.f32 %v1750, %v2105
      %v2229 = vadd.f32 %v1751, %v2110
      %v2230 = vadd.f32 %v1752, %v2115
      %v2231 = vadd.f32 %v1753, %v2120
      %v2232 = vadd.f32 %v1754, %v2125
      %v2233 = vadd.f32 %v1755, %v2130
      %v2234 = vadd.f32 %v1756, %v2135
      %v2235 = vadd.f32 %v1757, %v2140
      %v2236 = vadd.f32 %v1758, %v2145
      %v2237 = vadd.f32 %v1759, %v2150
      %v2238 = vadd.f32 %v1760, %v2155
      %v2239 = vadd.f32 %v1761, %v2160
      %v2240 = vadd.f32 %v1762, %v2165
      %v2241 = vadd.f32 %v1763, %v2170
      %v2242 = vadd.f32 %v1764, %v2175
      %v2243 = vadd.f32 %v1765, %v2180
      %v2244 = vadd.f32 %v1766, %v2185
      %v2245 = vadd.f32 %v1767, %v2190
      %v2246 = vadd.f32 %v1768, %v2195
      %v2247 = vadd.f32 %v1769, %v2200
      %v2248 = vadd.f32 %v1770, %v2205
      %v2249 = vld [vmem:[#allocation2 + $0x17] sm:$0xff]
      %v2250 = vld [vmem:[#allocation2 + $0x1f] sm:$0xff]
      %v2251 = vld [vmem:[#allocation2 + $0x27] sm:$0xff]
      %v2252 = vld [vmem:[#allocation2 + $0x2f] sm:$0xff]
      %v2253 = vld [vmem:[#allocation2 + $0x37] sm:$0xff]
      %v2254 = vld [vmem:[#allocation2 + $0x3f] sm:$0xff]
      %v2255 = vld [vmem:[#allocation2 + $0x47] sm:$0xff]
      %v2256 = vld [vmem:[#allocation2 + $0x4f] sm:$0xff]
      %v2257 = vld [vmem:[#allocation2 + $0x57] sm:$0xff]
      %v2258 = vld [vmem:[#allocation2 + $0x5f] sm:$0xff]
      %v2259 = vld [vmem:[#allocation2 + $0x67] sm:$0xff]
      %v2260 = vld [vmem:[#allocation2 + $0x6f] sm:$0xff]
      %v2261 = vld [vmem:[#allocation2 + $0x77] sm:$0xff]
      %v2262 = vld [vmem:[#allocation2 + $0x7f] sm:$0xff]
      %v2263 = vld [vmem:[#allocation2 + $0x87] sm:$0xff]
      %v2264 = vld [vmem:[#allocation2 + $0x8f] sm:$0xff]
      %v2265 = vld [vmem:[#allocation2 + $0x97] sm:$0xff]
      %v2266 = vld [vmem:[#allocation2 + $0x9f] sm:$0xff]
      %v2267 = vld [vmem:[#allocation2 + $0xa7] sm:$0xff]
      %v2268 = vld [vmem:[#allocation2 + $0xaf] sm:$0xff]
      %v2269 = vld [vmem:[#allocation2 + $0xb7] sm:$0xff]
      %v2270 = vld [vmem:[#allocation2 + $0xbf] sm:$0xff]
      %v2271 = vld [vmem:[#allocation2 + $0xc7] sm:$0xff]
      %v2272 = vld [vmem:[#allocation2 + $0xcf] sm:$0xff]
      %v2273 = vld [vmem:[#allocation2 + $0xd7] sm:$0xff]
      %v2274 = vld [vmem:[#allocation2 + $0xdf] sm:$0xff]
      %v2275 = vld [vmem:[#allocation2 + $0xe7] sm:$0xff]
      %v2276 = vld [vmem:[#allocation2 + $0xef] sm:$0xff]
      %v2277 = vld [vmem:[#allocation2 + $0xf7] sm:$0xff]
      %v2278 = vld [vmem:[#allocation2 + $0xff] sm:$0xff]
      %v2279 = vld [vmem:[#allocation2 + $0x107] sm:$0xff]
      %v2280 = vld [vmem:[#allocation2 + $0x10f] sm:$0xff]
      %v2281 = vld [vmem:[#allocation2 + $0x117] sm:$0xff]
      %v2282 = vld [vmem:[#allocation2 + $0x11f] sm:$0xff]
      %v2283 = vld [vmem:[#allocation2 + $0x127] sm:$0xff]
      %v2284 = vld [vmem:[#allocation2 + $0x12f] sm:$0xff]
      %v2285 = vld [vmem:[#allocation2 + $0x137] sm:$0xff]
      %v2286 = vld [vmem:[#allocation2 + $0x13f] sm:$0xff]
      %v2287 = vld [vmem:[#allocation2 + $0x147] sm:$0xff]
      %v2288 = vld [vmem:[#allocation2 + $0x14f] sm:$0xff]
      %v2289 = vld [vmem:[#allocation2 + $0x157] sm:$0xf]
      %s2290 = scalar_lea.vmem %s3, 48
      %v2291 = vld [vmem:[%s2290] sm:$0xff]
      %v2292 = vld [vmem:[%s2290 + $0x8] sm:$0xff]
      %v2294 = vsel %vm760, %v2249, 0
      %v2297 = vsel %vm760, %v2250, 0
      %v2300 = vsel %vm760, %v2251, 0
      %v2303 = vsel %vm760, %v2252, 0
      %v2306 = vsel %vm760, %v2253, 0
      %v2309 = vsel %vm760, %v2254, 0
      %v2312 = vsel %vm760, %v2255, 0
      %v2315 = vsel %vm760, %v2256, 0
      %v2318 = vsel %vm760, %v2257, 0
      %v2321 = vsel %vm760, %v2258, 0
      %v2324 = vsel %vm760, %v2259, 0
      %v2327 = vsel %vm760, %v2260, 0
      %v2330 = vsel %vm760, %v2261, 0
      %v2333 = vsel %vm760, %v2262, 0
      %v2336 = vsel %vm760, %v2263, 0
      %v2339 = vsel %vm760, %v2264, 0
      %v2342 = vsel %vm760, %v2265, 0
      %v2345 = vsel %vm760, %v2266, 0
      %v2348 = vsel %vm760, %v2267, 0
      %v2351 = vsel %vm760, %v2268, 0
      %v2354 = vsel %vm760, %v2269, 0
      %v2357 = vsel %vm760, %v2270, 0
      %v2360 = vsel %vm760, %v2271, 0
      %v2363 = vsel %vm760, %v2272, 0
      %v2366 = vsel %vm760, %v2273, 0
      %v2369 = vsel %vm760, %v2274, 0
      %v2372 = vsel %vm760, %v2275, 0
      %v2375 = vsel %vm760, %v2276, 0
      %v2378 = vsel %vm760, %v2277, 0
      %v2381 = vsel %vm760, %v2278, 0
      %v2384 = vsel %vm760, %v2279, 0
      %v2387 = vsel %vm760, %v2280, 0
      %v2390 = vsel %vm760, %v2281, 0
      %v2393 = vsel %vm760, %v2282, 0
      %v2396 = vsel %vm760, %v2283, 0
      %v2399 = vsel %vm760, %v2284, 0
      %v2402 = vsel %vm760, %v2285, 0
      %v2405 = vsel %vm760, %v2286, 0
      %v2408 = vsel %vm760, %v2287, 0
      %v2411 = vsel %vm760, %v2288, 0
      %v2414 = vsel %vm760, %v2289, 0
      %2416 = vmatprep.subr.mxu0 0.0
      %2417 = vmatpush1.msra.mxu0 %v2291
      %2418 = vmatprep.subr.mxu0 0.0
      %2419 = vmatpush1.msra.mxu0 %v2292
      %2420 = vmatprep.subr.mxu0 0.0
      %2421 = vmatpush1.msra.mxu0 0.0
      %2422 = vmatprep.subr.mxu0 0.0
      %2423 = vmatpush1.msra.mxu0 0.0
      %2424 = vmatprep.subr.mxu0 0.0
      %2425 = vmatpush1.msra.mxu0 0.0
      %2426 = vmatprep.subr.mxu0 0.0
      %2427 = vmatpush1.msra.mxu0 0.0
      %2428 = vmatprep.subr.mxu0 0.0
      %2429 = vmatpush1.msra.mxu0 0.0
      %2430 = vmatprep.subr.mxu0 0.0
      %2431 = vmatpush1.msra.mxu0 0.0
      %2432 = vmatprep.subr.mxu0 0.0
      %2433 = vmatpush1.msra.mxu0 0.0
      %2434 = vmatprep.subr.mxu0 0.0
      %2435 = vmatpush1.msra.mxu0 0.0
      %2436 = vmatprep.subr.mxu0 0.0
      %2437 = vmatpush1.msra.mxu0 0.0
      %2438 = vmatprep.subr.mxu0 0.0
      %2439 = vmatpush1.msra.mxu0 0.0
      %2440 = vmatprep.subr.mxu0 0.0
      %2441 = vmatpush1.msra.mxu0 0.0
      %2442 = vmatprep.subr.mxu0 0.0
      %2443 = vmatpush1.msra.mxu0 0.0
      %2444 = vmatprep.subr.mxu0 0.0
      %2445 = vmatpush1.msra.mxu0 0.0
      %2446 = vmatprep.subr.mxu0 0.0
      %2447 = vmatpush1.msra.mxu0 0.0
      %2448 = vmatprep.subr.mxu0 0.0
      %2449 = vmatpush1.msra.mxu0 0.0
      %2450 = vmatprep.subr.mxu0 0.0
      %2451 = vmatpush1.msra.mxu0 0.0
      %2452 = vmatprep.subr.mxu0 0.0
      %2453 = vmatpush1.msra.mxu0 0.0
      %2454 = vmatprep.subr.mxu0 0.0
      %2455 = vmatpush1.msra.mxu0 0.0
      %2456 = vmatprep.subr.mxu0 0.0
      %2457 = vmatpush1.msra.mxu0 0.0
      %2458 = vmatprep.subr.mxu0 0.0
      %2459 = vmatpush1.msra.mxu0 0.0
      %2460 = vmatprep.subr.mxu0 0.0
      %2461 = vmatpush1.msra.mxu0 0.0
      %2462 = vmatprep.subr.mxu0 0.0
      %2463 = vmatpush1.msra.mxu0 0.0
      %2464 = vmatprep.subr.mxu0 0.0
      %2465 = vmatpush1.msra.mxu0 0.0
      %2466 = vmatprep.subr.mxu0 0.0
      %2467 = vmatpush1.msra.mxu0 0.0
      %2468 = vmatprep.subr.mxu0 0.0
      %2469 = vmatpush1.msra.mxu0 0.0
      %2470 = vmatprep.subr.mxu0 0.0
      %2471 = vmatpush1.msra.mxu0 0.0
      %2472 = vmatprep.subr.mxu0 0.0
      %2473 = vmatpush1.msra.mxu0 0.0
      %2474 = vmatprep.subr.mxu0 0.0
      %2475 = vmatpush1.msra.mxu0 0.0
      %2476 = vmatprep.subr.mxu0 0.0
      %2477 = vmatpush1.msra.mxu0 0.0
      %2478 = vmatprep.subr.mxu0 0.0
      %2479 = vmatpush1.msra.mxu0 0.0
      %2480 = vmatprep.mubr.f32.mxu0 0.0
      %2481 = vmatmul.mubr.f32.gmra.mrb[0].mxu0 %v2294
      %v2482 = vpop.f32.mrb[0].mxu0
      %v2483 = vadd.f32 0.0, %v2482
      %v2484 = vpop.f32.mrb[0].mxu0
      %2485 = vmatprep.mubr.f32.mxu0 0.0
      %2486 = vmatmul.mubr.f32.gmra.mrb[0].mxu0 %v2297
      %v2487 = vpop.f32.mrb[0].mxu0
      %v2488 = vadd.f32 0.0, %v2487
      %v2489 = vpop.f32.mrb[0].mxu0
      %2490 = vmatprep.mubr.f32.mxu0 0.0
      %2491 = vmatmul.mubr.f32.gmra.mrb[0].mxu0 %v2300
      %v2492 = vpop.f32.mrb[0].mxu0
      %v2493 = vadd.f32 0.0, %v2492
      %v2494 = vpop.f32.mrb[0].mxu0
      %2495 = vmatprep.mubr.f32.mxu0 0.0
      %2496 = vmatmul.mubr.f32.gmra.mrb[0].mxu0 %v2303
      %v2497 = vpop.f32.mrb[0].mxu0
      %v2498 = vadd.f32 0.0, %v2497
      %v2499 = vpop.f32.mrb[0].mxu0
      %2500 = vmatprep.mubr.f32.mxu0 0.0
      %2501 = vmatmul.mubr.f32.gmra.mrb[0].mxu0 %v2306
      %v2502 = vpop.f32.mrb[0].mxu0
      %v2503 = vadd.f32 0.0, %v2502
      %v2504 = vpop.f32.mrb[0].mxu0
      %2505 = vmatprep.mubr.f32.mxu0 0.0
      %2506 = vmatmul.mubr.f32.gmra.mrb[0].mxu0 %v2309
      %v2507 = vpop.f32.mrb[0].mxu0
      %v2508 = vadd.f32 0.0, %v2507
      %v2509 = vpop.f32.mrb[0].mxu0
      %2510 = vmatprep.mubr.f32.mxu0 0.0
      %2511 = vmatmul.mubr.f32.gmra.mrb[0].mxu0 %v2312
      %v2512 = vpop.f32.mrb[0].mxu0
      %v2513 = vadd.f32 0.0, %v2512
      %v2514 = vpop.f32.mrb[0].mxu0
      %2515 = vmatprep.mubr.f32.mxu0 0.0
      %2516 = vmatmul.mubr.f32.gmra.mrb[0].mxu0 %v2315
      %v2517 = vpop.f32.mrb[0].mxu0
      %v2518 = vadd.f32 0.0, %v2517
      %v2519 = vpop.f32.mrb[0].mxu0
      %2520 = vmatprep.mubr.f32.mxu0 0.0
      %2521 = vmatmul.mubr.f32.gmra.mrb[0].mxu0 %v2318
      %v2522 = vpop.f32.mrb[0].mxu0
      %v2523 = vadd.f32 0.0, %v2522
      %v2524 = vpop.f32.mrb[0].mxu0
      %2525 = vmatprep.mubr.f32.mxu0 0.0
      %2526 = vmatmul.mubr.f32.gmra.mrb[0].mxu0 %v2321
      %v2527 = vpop.f32.mrb[0].mxu0
      %v2528 = vadd.f32 0.0, %v2527
      %v2529 = vpop.f32.mrb[0].mxu0
      %2530 = vmatprep.mubr.f32.mxu0 0.0
      %2531 = vmatmul.mubr.f32.gmra.mrb[0].mxu0 %v2324
      %v2532 = vpop.f32.mrb[0].mxu0
      %v2533 = vadd.f32 0.0, %v2532
      %v2534 = vpop.f32.mrb[0].mxu0
      %2535 = vmatprep.mubr.f32.mxu0 0.0
      %2536 = vmatmul.mubr.f32.gmra.mrb[0].mxu0 %v2327
      %v2537 = vpop.f32.mrb[0].mxu0
      %v2538 = vadd.f32 0.0, %v2537
      %v2539 = vpop.f32.mrb[0].mxu0
      %2540 = vmatprep.mubr.f32.mxu0 0.0
      %2541 = vmatmul.mubr.f32.gmra.mrb[0].mxu0 %v2330
      %v2542 = vpop.f32.mrb[0].mxu0
      %v2543 = vadd.f32 0.0, %v2542
      %v2544 = vpop.f32.mrb[0].mxu0
      %2545 = vmatprep.mubr.f32.mxu0 0.0
      %2546 = vmatmul.mubr.f32.gmra.mrb[0].mxu0 %v2333
      %v2547 = vpop.f32.mrb[0].mxu0
      %v2548 = vadd.f32 0.0, %v2547
      %v2549 = vpop.f32.mrb[0].mxu0
      %2550 = vmatprep.mubr.f32.mxu0 0.0
      %2551 = vmatmul.mubr.f32.gmra.mrb[0].mxu0 %v2336
      %v2552 = vpop.f32.mrb[0].mxu0
      %v2553 = vadd.f32 0.0, %v2552
      %v2554 = vpop.f32.mrb[0].mxu0
      %2555 = vmatprep.mubr.f32.mxu0 0.0
      %2556 = vmatmul.mubr.f32.gmra.mrb[0].mxu0 %v2339
      %v2557 = vpop.f32.mrb[0].mxu0
      %v2558 = vadd.f32 0.0, %v2557
      %v2559 = vpop.f32.mrb[0].mxu0
      %2560 = vmatprep.mubr.f32.mxu0 0.0
      %2561 = vmatmul.mubr.f32.gmra.mrb[0].mxu0 %v2342
      %v2562 = vpop.f32.mrb[0].mxu0
      %v2563 = vadd.f32 0.0, %v2562
      %v2564 = vpop.f32.mrb[0].mxu0
      %2565 = vmatprep.mubr.f32.mxu0 0.0
      %2566 = vmatmul.mubr.f32.gmra.mrb[0].mxu0 %v2345
      %v2567 = vpop.f32.mrb[0].mxu0
      %v2568 = vadd.f32 0.0, %v2567
      %v2569 = vpop.f32.mrb[0].mxu0
      %2570 = vmatprep.mubr.f32.mxu0 0.0
      %2571 = vmatmul.mubr.f32.gmra.mrb[0].mxu0 %v2348
      %v2572 = vpop.f32.mrb[0].mxu0
      %v2573 = vadd.f32 0.0, %v2572
      %v2574 = vpop.f32.mrb[0].mxu0
      %2575 = vmatprep.mubr.f32.mxu0 0.0
      %2576 = vmatmul.mubr.f32.gmra.mrb[0].mxu0 %v2351
      %v2577 = vpop.f32.mrb[0].mxu0
      %v2578 = vadd.f32 0.0, %v2577
      %v2579 = vpop.f32.mrb[0].mxu0
      %2580 = vmatprep.mubr.f32.mxu0 0.0
      %2581 = vmatmul.mubr.f32.gmra.mrb[0].mxu0 %v2354
      %v2582 = vpop.f32.mrb[0].mxu0
      %v2583 = vadd.f32 0.0, %v2582
      %v2584 = vpop.f32.mrb[0].mxu0
      %2585 = vmatprep.mubr.f32.mxu0 0.0
      %2586 = vmatmul.mubr.f32.gmra.mrb[0].mxu0 %v2357
      %v2587 = vpop.f32.mrb[0].mxu0
      %v2588 = vadd.f32 0.0, %v2587
      %v2589 = vpop.f32.mrb[0].mxu0
      %2590 = vmatprep.mubr.f32.mxu0 0.0
      %2591 = vmatmul.mubr.f32.gmra.mrb[0].mxu0 %v2360
      %v2592 = vpop.f32.mrb[0].mxu0
      %v2593 = vadd.f32 0.0, %v2592
      %v2594 = vpop.f32.mrb[0].mxu0
      %2595 = vmatprep.mubr.f32.mxu0 0.0
      %2596 = vmatmul.mubr.f32.gmra.mrb[0].mxu0 %v2363
      %v2597 = vpop.f32.mrb[0].mxu0
      %v2598 = vadd.f32 0.0, %v2597
      %v2599 = vpop.f32.mrb[0].mxu0
      %2600 = vmatprep.mubr.f32.mxu0 0.0
      %2601 = vmatmul.mubr.f32.gmra.mrb[0].mxu0 %v2366
      %v2602 = vpop.f32.mrb[0].mxu0
      %v2603 = vadd.f32 0.0, %v2602
      %v2604 = vpop.f32.mrb[0].mxu0
      %2605 = vmatprep.mubr.f32.mxu0 0.0
      %2606 = vmatmul.mubr.f32.gmra.mrb[0].mxu0 %v2369
      %v2607 = vpop.f32.mrb[0].mxu0
      %v2608 = vadd.f32 0.0, %v2607
      %v2609 = vpop.f32.mrb[0].mxu0
      %2610 = vmatprep.mubr.f32.mxu0 0.0
      %2611 = vmatmul.mubr.f32.gmra.mrb[0].mxu0 %v2372
      %v2612 = vpop.f32.mrb[0].mxu0
      %v2613 = vadd.f32 0.0, %v2612
      %v2614 = vpop.f32.mrb[0].mxu0
      %2615 = vmatprep.mubr.f32.mxu0 0.0
      %2616 = vmatmul.mubr.f32.gmra.mrb[0].mxu0 %v2375
      %v2617 = vpop.f32.mrb[0].mxu0
      %v2618 = vadd.f32 0.0, %v2617
      %v2619 = vpop.f32.mrb[0].mxu0
      %2620 = vmatprep.mubr.f32.mxu0 0.0
      %2621 = vmatmul.mubr.f32.gmra.mrb[0].mxu0 %v2378
      %v2622 = vpop.f32.mrb[0].mxu0
      %v2623 = vadd.f32 0.0, %v2622
      %v2624 = vpop.f32.mrb[0].mxu0
      %2625 = vmatprep.mubr.f32.mxu0 0.0
      %2626 = vmatmul.mubr.f32.gmra.mrb[0].mxu0 %v2381
      %v2627 = vpop.f32.mrb[0].mxu0
      %v2628 = vadd.f32 0.0, %v2627
      %v2629 = vpop.f32.mrb[0].mxu0
      %2630 = vmatprep.mubr.f32.mxu0 0.0
      %2631 = vmatmul.mubr.f32.gmra.mrb[0].mxu0 %v2384
      %v2632 = vpop.f32.mrb[0].mxu0
      %v2633 = vadd.f32 0.0, %v2632
      %v2634 = vpop.f32.mrb[0].mxu0
      %2635 = vmatprep.mubr.f32.mxu0 0.0
      %2636 = vmatmul.mubr.f32.gmra.mrb[0].mxu0 %v2387
      %v2637 = vpop.f32.mrb[0].mxu0
      %v2638 = vadd.f32 0.0, %v2637
      %v2639 = vpop.f32.mrb[0].mxu0
      %2640 = vmatprep.mubr.f32.mxu0 0.0
      %2641 = vmatmul.mubr.f32.gmra.mrb[0].mxu0 %v2390
      %v2642 = vpop.f32.mrb[0].mxu0
      %v2643 = vadd.f32 0.0, %v2642
      %v2644 = vpop.f32.mrb[0].mxu0
      %2645 = vmatprep.mubr.f32.mxu0 0.0
      %2646 = vmatmul.mubr.f32.gmra.mrb[0].mxu0 %v2393
      %v2647 = vpop.f32.mrb[0].mxu0
      %v2648 = vadd.f32 0.0, %v2647
      %v2649 = vpop.f32.mrb[0].mxu0
      %2650 = vmatprep.mubr.f32.mxu0 0.0
      %2651 = vmatmul.mubr.f32.gmra.mrb[0].mxu0 %v2396
      %v2652 = vpop.f32.mrb[0].mxu0
      %v2653 = vadd.f32 0.0, %v2652
      %v2654 = vpop.f32.mrb[0].mxu0
      %2655 = vmatprep.mubr.f32.mxu0 0.0
      %2656 = vmatmul.mubr.f32.gmra.mrb[0].mxu0 %v2399
      %v2657 = vpop.f32.mrb[0].mxu0
      %v2658 = vadd.f32 0.0, %v2657
      %v2659 = vpop.f32.mrb[0].mxu0
      %2660 = vmatprep.mubr.f32.mxu0 0.0
      %2661 = vmatmul.mubr.f32.gmra.mrb[0].mxu0 %v2402
      %v2662 = vpop.f32.mrb[0].mxu0
      %v2663 = vadd.f32 0.0, %v2662
      %v2664 = vpop.f32.mrb[0].mxu0
      %2665 = vmatprep.mubr.f32.mxu0 0.0
      %2666 = vmatmul.mubr.f32.gmra.mrb[0].mxu0 %v2405
      %v2667 = vpop.f32.mrb[0].mxu0
      %v2668 = vadd.f32 0.0, %v2667
      %v2669 = vpop.f32.mrb[0].mxu0
      %2670 = vmatprep.mubr.f32.mxu0 0.0
      %2671 = vmatmul.mubr.f32.gmra.mrb[0].mxu0 %v2408
      %v2672 = vpop.f32.mrb[0].mxu0
      %v2673 = vadd.f32 0.0, %v2672
      %v2674 = vpop.f32.mrb[0].mxu0
      %2675 = vmatprep.mubr.f32.mxu0 0.0
      %2676 = vmatmul.mubr.f32.gmra.mrb[0].mxu0 %v2411
      %v2677 = vpop.f32.mrb[0].mxu0
      %v2678 = vadd.f32 0.0, %v2677
      %v2679 = vpop.f32.mrb[0].mxu0
      %2680 = vmatprep.mubr.f32.mxu0 0.0
      %2681 = vmatmul.mubr.f32.gmra.mrb[0].mxu0 %v2414
      %v2682 = vpop.f32.mrb[0].mxu0
      %v2683 = vadd.f32 0.0, %v2682
      %v2684 = vpop.f32.mrb[0].mxu0
      %2685 = vdwg.mxu0
      %v2686 = vadd.f32 %v2208, %v2483
      %v2687 = vadd.f32 %v2209, %v2488
      %v2688 = vadd.f32 %v2210, %v2493
      %v2689 = vadd.f32 %v2211, %v2498
      %v2690 = vadd.f32 %v2212, %v2503
      %v2691 = vadd.f32 %v2213, %v2508
      %v2692 = vadd.f32 %v2214, %v2513
      %v2693 = vadd.f32 %v2215, %v2518
      %v2694 = vadd.f32 %v2216, %v2523
      %v2695 = vadd.f32 %v2217, %v2528
      %v2696 = vadd.f32 %v2218, %v2533
      %v2697 = vadd.f32 %v2219, %v2538
      %v2698 = vadd.f32 %v2220, %v2543
      %v2699 = vadd.f32 %v2221, %v2548
      %v2700 = vadd.f32 %v2222, %v2553
      %v2701 = vadd.f32 %v2223, %v2558
      %v2702 = vadd.f32 %v2224, %v2563
      %v2703 = vadd.f32 %v2225, %v2568
      %v2704 = vadd.f32 %v2226, %v2573
      %v2705 = vadd.f32 %v2227, %v2578
      %v2706 = vadd.f32 %v2228, %v2583
      %v2707 = vadd.f32 %v2229, %v2588
      %v2708 = vadd.f32 %v2230, %v2593
      %v2709 = vadd.f32 %v2231, %v2598
      %v2710 = vadd.f32 %v2232, %v2603
      %v2711 = vadd.f32 %v2233, %v2608
      %v2712 = vadd.f32 %v2234, %v2613
      %v2713 = vadd.f32 %v2235, %v2618
      %v2714 = vadd.f32 %v2236, %v2623
      %v2715 = vadd.f32 %v2237, %v2628
      %v2716 = vadd.f32 %v2238, %v2633
      %v2717 = vadd.f32 %v2239, %v2638
      %v2718 = vadd.f32 %v2240, %v2643
      %v2719 = vadd.f32 %v2241, %v2648
      %v2720 = vadd.f32 %v2242, %v2653
      %v2721 = vadd.f32 %v2243, %v2658
      %v2722 = vadd.f32 %v2244, %v2663
      %v2723 = vadd.f32 %v2245, %v2668
      %v2724 = vadd.f32 %v2246, %v2673
      %v2725 = vadd.f32 %v2247, %v2678
      %v2726 = vadd.f32 %v2248, %v2683
      %v2727 = vld [vmem:[#allocation2 + $0x18] sm:$0xff]
      %v2728 = vld [vmem:[#allocation2 + $0x20] sm:$0xff]
      %v2729 = vld [vmem:[#allocation2 + $0x28] sm:$0xff]
      %v2730 = vld [vmem:[#allocation2 + $0x30] sm:$0xff]
      %v2731 = vld [vmem:[#allocation2 + $0x38] sm:$0xff]
      %v2732 = vld [vmem:[#allocation2 + $0x40] sm:$0xff]
      %v2733 = vld [vmem:[#allocation2 + $0x48] sm:$0xff]
      %v2734 = vld [vmem:[#allocation2 + $0x50] sm:$0xff]
      %v2735 = vld [vmem:[#allocation2 + $0x58] sm:$0xff]
      %v2736 = vld [vmem:[#allocation2 + $0x60] sm:$0xff]
      %v2737 = vld [vmem:[#allocation2 + $0x68] sm:$0xff]
      %v2738 = vld [vmem:[#allocation2 + $0x70] sm:$0xff]
      %v2739 = vld [vmem:[#allocation2 + $0x78] sm:$0xff]
      %v2740 = vld [vmem:[#allocation2 + $0x80] sm:$0xff]
      %v2741 = vld [vmem:[#allocation2 + $0x88] sm:$0xff]
      %v2742 = vld [vmem:[#allocation2 + $0x90] sm:$0xff]
      %v2743 = vld [vmem:[#allocation2 + $0x98] sm:$0xff]
      %v2744 = vld [vmem:[#allocation2 + $0xa0] sm:$0xff]
      %v2745 = vld [vmem:[#allocation2 + $0xa8] sm:$0xff]
      %v2746 = vld [vmem:[#allocation2 + $0xb0] sm:$0xff]
      %v2747 = vld [vmem:[#allocation2 + $0xb8] sm:$0xff]
      %v2748 = vld [vmem:[#allocation2 + $0xc0] sm:$0xff]
      %v2749 = vld [vmem:[#allocation2 + $0xc8] sm:$0xff]
      %v2750 = vld [vmem:[#allocation2 + $0xd0] sm:$0xff]
      %v2751 = vld [vmem:[#allocation2 + $0xd8] sm:$0xff]
      %v2752 = vld [vmem:[#allocation2 + $0xe0] sm:$0xff]
      %v2753 = vld [vmem:[#allocation2 + $0xe8] sm:$0xff]
      %v2754 = vld [vmem:[#allocation2 + $0xf0] sm:$0xff]
      %v2755 = vld [vmem:[#allocation2 + $0xf8] sm:$0xff]
      %v2756 = vld [vmem:[#allocation2 + $0x100] sm:$0xff]
      %v2757 = vld [vmem:[#allocation2 + $0x108] sm:$0xff]
      %v2758 = vld [vmem:[#allocation2 + $0x110] sm:$0xff]
      %v2759 = vld [vmem:[#allocation2 + $0x118] sm:$0xff]
      %v2760 = vld [vmem:[#allocation2 + $0x120] sm:$0xff]
      %v2761 = vld [vmem:[#allocation2 + $0x128] sm:$0xff]
      %v2762 = vld [vmem:[#allocation2 + $0x130] sm:$0xff]
      %v2763 = vld [vmem:[#allocation2 + $0x138] sm:$0xff]
      %v2764 = vld [vmem:[#allocation2 + $0x140] sm:$0xff]
      %v2765 = vld [vmem:[#allocation2 + $0x148] sm:$0xff]
      %v2766 = vld [vmem:[#allocation2 + $0x150] sm:$0xff]
      %v2767 = vld [vmem:[#allocation2 + $0x158] sm:$0xf]
      %s2768 = scalar_lea.vmem %s3, 64
      %v2769 = vld [vmem:[%s2768] sm:$0xff]
      %v2770 = vld [vmem:[%s2768 + $0x8] sm:$0xff]
      %v2772 = vsel %vm760, %v2727, 0
      %v2775 = vsel %vm760, %v2728, 0
      %v2778 = vsel %vm760, %v2729, 0
      %v2781 = vsel %vm760, %v2730, 0
      %v2784 = vsel %vm760, %v2731, 0
      %v2787 = vsel %vm760, %v2732, 0
      %v2790 = vsel %vm760, %v2733, 0
      %v2793 = vsel %vm760, %v2734, 0
      %v2796 = vsel %vm760, %v2735, 0
      %v2799 = vsel %vm760, %v2736, 0
      %v2802 = vsel %vm760, %v2737, 0
      %v2805 = vsel %vm760, %v2738, 0
      %v2808 = vsel %vm760, %v2739, 0
      %v2811 = vsel %vm760, %v2740, 0
      %v2814 = vsel %vm760, %v2741, 0
      %v2817 = vsel %vm760, %v2742, 0
      %v2820 = vsel %vm760, %v2743, 0
      %v2823 = vsel %vm760, %v2744, 0
      %v2826 = vsel %vm760, %v2745, 0
      %v2829 = vsel %vm760, %v2746, 0
      %v2832 = vsel %vm760, %v2747, 0
      %v2835 = vsel %vm760, %v2748, 0
      %v2838 = vsel %vm760, %v2749, 0
      %v2841 = vsel %vm760, %v2750, 0
      %v2844 = vsel %vm760, %v2751, 0
      %v2847 = vsel %vm760, %v2752, 0
      %v2850 = vsel %vm760, %v2753, 0
      %v2853 = vsel %vm760, %v2754, 0
      %v2856 = vsel %vm760, %v2755, 0
      %v2859 = vsel %vm760, %v2756, 0
      %v2862 = vsel %vm760, %v2757, 0
      %v2865 = vsel %vm760, %v2758, 0
      %v2868 = vsel %vm760, %v2759, 0
      %v2871 = vsel %vm760, %v2760, 0
      %v2874 = vsel %vm760, %v2761, 0
      %v2877 = vsel %vm760, %v2762, 0
      %v2880 = vsel %vm760, %v2763, 0
      %v2883 = vsel %vm760, %v2764, 0
      %v2886 = vsel %vm760, %v2765, 0
      %v2889 = vsel %vm760, %v2766, 0
      %v2892 = vsel %vm760, %v2767, 0
      %2894 = vmatprep.subr.mxu0 0.0
      %2895 = vmatpush1.msra.mxu0 %v2769
      %2896 = vmatprep.subr.mxu0 0.0
      %2897 = vmatpush1.msra.mxu0 %v2770
      %2898 = vmatprep.subr.mxu0 0.0
      %2899 = vmatpush1.msra.mxu0 0.0
      %2900 = vmatprep.subr.mxu0 0.0
      %2901 = vmatpush1.msra.mxu0 0.0
      %2902 = vmatprep.subr.mxu0 0.0
      %2903 = vmatpush1.msra.mxu0 0.0
      %2904 = vmatprep.subr.mxu0 0.0
      %2905 = vmatpush1.msra.mxu0 0.0
      %2906 = vmatprep.subr.mxu0 0.0
      %2907 = vmatpush1.msra.mxu0 0.0
      %2908 = vmatprep.subr.mxu0 0.0
      %2909 = vmatpush1.msra.mxu0 0.0
      %2910 = vmatprep.subr.mxu0 0.0
      %2911 = vmatpush1.msra.mxu0 0.0
      %2912 = vmatprep.subr.mxu0 0.0
      %2913 = vmatpush1.msra.mxu0 0.0
      %2914 = vmatprep.subr.mxu0 0.0
      %2915 = vmatpush1.msra.mxu0 0.0
      %2916 = vmatprep.subr.mxu0 0.0
      %2917 = vmatpush1.msra.mxu0 0.0
      %2918 = vmatprep.subr.mxu0 0.0
      %2919 = vmatpush1.msra.mxu0 0.0
      %2920 = vmatprep.subr.mxu0 0.0
      %2921 = vmatpush1.msra.mxu0 0.0
      %2922 = vmatprep.subr.mxu0 0.0
      %2923 = vmatpush1.msra.mxu0 0.0
      %2924 = vmatprep.subr.mxu0 0.0
      %2925 = vmatpush1.msra.mxu0 0.0
      %2926 = vmatprep.subr.mxu0 0.0
      %2927 = vmatpush1.msra.mxu0 0.0
      %2928 = vmatprep.subr.mxu0 0.0
      %2929 = vmatpush1.msra.mxu0 0.0
      %2930 = vmatprep.subr.mxu0 0.0
      %2931 = vmatpush1.msra.mxu0 0.0
      %2932 = vmatprep.subr.mxu0 0.0
      %2933 = vmatpush1.msra.mxu0 0.0
      %2934 = vmatprep.subr.mxu0 0.0
      %2935 = vmatpush1.msra.mxu0 0.0
      %2936 = vmatprep.subr.mxu0 0.0
      %2937 = vmatpush1.msra.mxu0 0.0
      %2938 = vmatprep.subr.mxu0 0.0
      %2939 = vmatpush1.msra.mxu0 0.0
      %2940 = vmatprep.subr.mxu0 0.0
      %2941 = vmatpush1.msra.mxu0 0.0
      %2942 = vmatprep.subr.mxu0 0.0
      %2943 = vmatpush1.msra.mxu0 0.0
      %2944 = vmatprep.subr.mxu0 0.0
      %2945 = vmatpush1.msra.mxu0 0.0
      %2946 = vmatprep.subr.mxu0 0.0
      %2947 = vmatpush1.msra.mxu0 0.0
      %2948 = vmatprep.subr.mxu0 0.0
      %2949 = vmatpush1.msra.mxu0 0.0
      %2950 = vmatprep.subr.mxu0 0.0
      %2951 = vmatpush1.msra.mxu0 0.0
      %2952 = vmatprep.subr.mxu0 0.0
      %2953 = vmatpush1.msra.mxu0 0.0
      %2954 = vmatprep.subr.mxu0 0.0
      %2955 = vmatpush1.msra.mxu0 0.0
      %2956 = vmatprep.subr.mxu0 0.0
      %2957 = vmatpush1.msra.mxu0 0.0
      %2958 = vmatprep.mubr.f32.mxu0 0.0
      %2959 = vmatmul.mubr.f32.gmra.mrb[0].mxu0 %v2772
      %v2960 = vpop.f32.mrb[0].mxu0
      %v2961 = vadd.f32 0.0, %v2960
      %v2962 = vpop.f32.mrb[0].mxu0
      %2963 = vmatprep.mubr.f32.mxu0 0.0
      %2964 = vmatmul.mubr.f32.gmra.mrb[0].mxu0 %v2775
      %v2965 = vpop.f32.mrb[0].mxu0
      %v2966 = vadd.f32 0.0, %v2965
      %v2967 = vpop.f32.mrb[0].mxu0
      %2968 = vmatprep.mubr.f32.mxu0 0.0
      %2969 = vmatmul.mubr.f32.gmra.mrb[0].mxu0 %v2778
      %v2970 = vpop.f32.mrb[0].mxu0
      %v2971 = vadd.f32 0.0, %v2970
      %v2972 = vpop.f32.mrb[0].mxu0
      %2973 = vmatprep.mubr.f32.mxu0 0.0
      %2974 = vmatmul.mubr.f32.gmra.mrb[0].mxu0 %v2781
      %v2975 = vpop.f32.mrb[0].mxu0
      %v2976 = vadd.f32 0.0, %v2975
      %v2977 = vpop.f32.mrb[0].mxu0
      %2978 = vmatprep.mubr.f32.mxu0 0.0
      %2979 = vmatmul.mubr.f32.gmra.mrb[0].mxu0 %v2784
      %v2980 = vpop.f32.mrb[0].mxu0
      %v2981 = vadd.f32 0.0, %v2980
      %v2982 = vpop.f32.mrb[0].mxu0
      %2983 = vmatprep.mubr.f32.mxu0 0.0
      %2984 = vmatmul.mubr.f32.gmra.mrb[0].mxu0 %v2787
      %v2985 = vpop.f32.mrb[0].mxu0
      %v2986 = vadd.f32 0.0, %v2985
      %v2987 = vpop.f32.mrb[0].mxu0
      %2988 = vmatprep.mubr.f32.mxu0 0.0
      %2989 = vmatmul.mubr.f32.gmra.mrb[0].mxu0 %v2790
      %v2990 = vpop.f32.mrb[0].mxu0
      %v2991 = vadd.f32 0.0, %v2990
      %v2992 = vpop.f32.mrb[0].mxu0
      %2993 = vmatprep.mubr.f32.mxu0 0.0
      %2994 = vmatmul.mubr.f32.gmra.mrb[0].mxu0 %v2793
      %v2995 = vpop.f32.mrb[0].mxu0
      %v2996 = vadd.f32 0.0, %v2995
      %v2997 = vpop.f32.mrb[0].mxu0
      %2998 = vmatprep.mubr.f32.mxu0 0.0
      %2999 = vmatmul.mubr.f32.gmra.mrb[0].mxu0 %v2796
      %v3000 = vpop.f32.mrb[0].mxu0
      %v3001 = vadd.f32 0.0, %v3000
      %v3002 = vpop.f32.mrb[0].mxu0
      %3003 = vmatprep.mubr.f32.mxu0 0.0
      %3004 = vmatmul.mubr.f32.gmra.mrb[0].mxu0 %v2799
      %v3005 = vpop.f32.mrb[0].mxu0
      %v3006 = vadd.f32 0.0, %v3005
      %v3007 = vpop.f32.mrb[0].mxu0
      %3008 = vmatprep.mubr.f32.mxu0 0.0
      %3009 = vmatmul.mubr.f32.gmra.mrb[0].mxu0 %v2802
      %v3010 = vpop.f32.mrb[0].mxu0
      %v3011 = vadd.f32 0.0, %v3010
      %v3012 = vpop.f32.mrb[0].mxu0
      %3013 = vmatprep.mubr.f32.mxu0 0.0
      %3014 = vmatmul.mubr.f32.gmra.mrb[0].mxu0 %v2805
      %v3015 = vpop.f32.mrb[0].mxu0
      %v3016 = vadd.f32 0.0, %v3015
      %v3017 = vpop.f32.mrb[0].mxu0
      %3018 = vmatprep.mubr.f32.mxu0 0.0
      %3019 = vmatmul.mubr.f32.gmra.mrb[0].mxu0 %v2808
      %v3020 = vpop.f32.mrb[0].mxu0
      %v3021 = vadd.f32 0.0, %v3020
      %v3022 = vpop.f32.mrb[0].mxu0
      %3023 = vmatprep.mubr.f32.mxu0 0.0
      %3024 = vmatmul.mubr.f32.gmra.mrb[0].mxu0 %v2811
      %v3025 = vpop.f32.mrb[0].mxu0
      %v3026 = vadd.f32 0.0, %v3025
      %v3027 = vpop.f32.mrb[0].mxu0
      %3028 = vmatprep.mubr.f32.mxu0 0.0
      %3029 = vmatmul.mubr.f32.gmra.mrb[0].mxu0 %v2814
      %v3030 = vpop.f32.mrb[0].mxu0
      %v3031 = vadd.f32 0.0, %v3030
      %v3032 = vpop.f32.mrb[0].mxu0
      %3033 = vmatprep.mubr.f32.mxu0 0.0
      %3034 = vmatmul.mubr.f32.gmra.mrb[0].mxu0 %v2817
      %v3035 = vpop.f32.mrb[0].mxu0
      %v3036 = vadd.f32 0.0, %v3035
      %v3037 = vpop.f32.mrb[0].mxu0
      %3038 = vmatprep.mubr.f32.mxu0 0.0
      %3039 = vmatmul.mubr.f32.gmra.mrb[0].mxu0 %v2820
      %v3040 = vpop.f32.mrb[0].mxu0
      %v3041 = vadd.f32 0.0, %v3040
      %v3042 = vpop.f32.mrb[0].mxu0
      %3043 = vmatprep.mubr.f32.mxu0 0.0
      %3044 = vmatmul.mubr.f32.gmra.mrb[0].mxu0 %v2823
      %v3045 = vpop.f32.mrb[0].mxu0
      %v3046 = vadd.f32 0.0, %v3045
      %v3047 = vpop.f32.mrb[0].mxu0
      %3048 = vmatprep.mubr.f32.mxu0 0.0
      %3049 = vmatmul.mubr.f32.gmra.mrb[0].mxu0 %v2826
      %v3050 = vpop.f32.mrb[0].mxu0
      %v3051 = vadd.f32 0.0, %v3050
      %v3052 = vpop.f32.mrb[0].mxu0
      %3053 = vmatprep.mubr.f32.mxu0 0.0
      %3054 = vmatmul.mubr.f32.gmra.mrb[0].mxu0 %v2829
      %v3055 = vpop.f32.mrb[0].mxu0
      %v3056 = vadd.f32 0.0, %v3055
      %v3057 = vpop.f32.mrb[0].mxu0
      %3058 = vmatprep.mubr.f32.mxu0 0.0
      %3059 = vmatmul.mubr.f32.gmra.mrb[0].mxu0 %v2832
      %v3060 = vpop.f32.mrb[0].mxu0
      %v3061 = vadd.f32 0.0, %v3060
      %v3062 = vpop.f32.mrb[0].mxu0
      %3063 = vmatprep.mubr.f32.mxu0 0.0
      %3064 = vmatmul.mubr.f32.gmra.mrb[0].mxu0 %v2835
      %v3065 = vpop.f32.mrb[0].mxu0
      %v3066 = vadd.f32 0.0, %v3065
      %v3067 = vpop.f32.mrb[0].mxu0
      %3068 = vmatprep.mubr.f32.mxu0 0.0
      %3069 = vmatmul.mubr.f32.gmra.mrb[0].mxu0 %v2838
      %v3070 = vpop.f32.mrb[0].mxu0
      %v3071 = vadd.f32 0.0, %v3070
      %v3072 = vpop.f32.mrb[0].mxu0
      %3073 = vmatprep.mubr.f32.mxu0 0.0
      %3074 = vmatmul.mubr.f32.gmra.mrb[0].mxu0 %v2841
      %v3075 = vpop.f32.mrb[0].mxu0
      %v3076 = vadd.f32 0.0, %v3075
      %v3077 = vpop.f32.mrb[0].mxu0
      %3078 = vmatprep.mubr.f32.mxu0 0.0
      %3079 = vmatmul.mubr.f32.gmra.mrb[0].mxu0 %v2844
      %v3080 = vpop.f32.mrb[0].mxu0
      %v3081 = vadd.f32 0.0, %v3080
      %v3082 = vpop.f32.mrb[0].mxu0
      %3083 = vmatprep.mubr.f32.mxu0 0.0
      %3084 = vmatmul.mubr.f32.gmra.mrb[0].mxu0 %v2847
      %v3085 = vpop.f32.mrb[0].mxu0
      %v3086 = vadd.f32 0.0, %v3085
      %v3087 = vpop.f32.mrb[0].mxu0
      %3088 = vmatprep.mubr.f32.mxu0 0.0
      %3089 = vmatmul.mubr.f32.gmra.mrb[0].mxu0 %v2850
      %v3090 = vpop.f32.mrb[0].mxu0
      %v3091 = vadd.f32 0.0, %v3090
      %v3092 = vpop.f32.mrb[0].mxu0
      %3093 = vmatprep.mubr.f32.mxu0 0.0
      %3094 = vmatmul.mubr.f32.gmra.mrb[0].mxu0 %v2853
      %v3095 = vpop.f32.mrb[0].mxu0
      %v3096 = vadd.f32 0.0, %v3095
      %v3097 = vpop.f32.mrb[0].mxu0
      %3098 = vmatprep.mubr.f32.mxu0 0.0
      %3099 = vmatmul.mubr.f32.gmra.mrb[0].mxu0 %v2856
      %v3100 = vpop.f32.mrb[0].mxu0
      %v3101 = vadd.f32 0.0, %v3100
      %v3102 = vpop.f32.mrb[0].mxu0
      %3103 = vmatprep.mubr.f32.mxu0 0.0
      %3104 = vmatmul.mubr.f32.gmra.mrb[0].mxu0 %v2859
      %v3105 = vpop.f32.mrb[0].mxu0
      %v3106 = vadd.f32 0.0, %v3105
      %v3107 = vpop.f32.mrb[0].mxu0
      %3108 = vmatprep.mubr.f32.mxu0 0.0
      %3109 = vmatmul.mubr.f32.gmra.mrb[0].mxu0 %v2862
      %v3110 = vpop.f32.mrb[0].mxu0
      %v3111 = vadd.f32 0.0, %v3110
      %v3112 = vpop.f32.mrb[0].mxu0
      %3113 = vmatprep.mubr.f32.mxu0 0.0
      %3114 = vmatmul.mubr.f32.gmra.mrb[0].mxu0 %v2865
      %v3115 = vpop.f32.mrb[0].mxu0
      %v3116 = vadd.f32 0.0, %v3115
      %v3117 = vpop.f32.mrb[0].mxu0
      %3118 = vmatprep.mubr.f32.mxu0 0.0
      %3119 = vmatmul.mubr.f32.gmra.mrb[0].mxu0 %v2868
      %v3120 = vpop.f32.mrb[0].mxu0
      %v3121 = vadd.f32 0.0, %v3120
      %v3122 = vpop.f32.mrb[0].mxu0
      %3123 = vmatprep.mubr.f32.mxu0 0.0
      %3124 = vmatmul.mubr.f32.gmra.mrb[0].mxu0 %v2871
      %v3125 = vpop.f32.mrb[0].mxu0
      %v3126 = vadd.f32 0.0, %v3125
      %v3127 = vpop.f32.mrb[0].mxu0
      %3128 = vmatprep.mubr.f32.mxu0 0.0
      %3129 = vmatmul.mubr.f32.gmra.mrb[0].mxu0 %v2874
      %v3130 = vpop.f32.mrb[0].mxu0
      %v3131 = vadd.f32 0.0, %v3130
      %v3132 = vpop.f32.mrb[0].mxu0
      %3133 = vmatprep.mubr.f32.mxu0 0.0
      %3134 = vmatmul.mubr.f32.gmra.mrb[0].mxu0 %v2877
      %v3135 = vpop.f32.mrb[0].mxu0
      %v3136 = vadd.f32 0.0, %v3135
      %v3137 = vpop.f32.mrb[0].mxu0
      %3138 = vmatprep.mubr.f32.mxu0 0.0
      %3139 = vmatmul.mubr.f32.gmra.mrb[0].mxu0 %v2880
      %v3140 = vpop.f32.mrb[0].mxu0
      %v3141 = vadd.f32 0.0, %v3140
      %v3142 = vpop.f32.mrb[0].mxu0
      %3143 = vmatprep.mubr.f32.mxu0 0.0
      %3144 = vmatmul.mubr.f32.gmra.mrb[0].mxu0 %v2883
      %v3145 = vpop.f32.mrb[0].mxu0
      %v3146 = vadd.f32 0.0, %v3145
      %v3147 = vpop.f32.mrb[0].mxu0
      %3148 = vmatprep.mubr.f32.mxu0 0.0
      %3149 = vmatmul.mubr.f32.gmra.mrb[0].mxu0 %v2886
      %v3150 = vpop.f32.mrb[0].mxu0
      %v3151 = vadd.f32 0.0, %v3150
      %v3152 = vpop.f32.mrb[0].mxu0
      %3153 = vmatprep.mubr.f32.mxu0 0.0
      %3154 = vmatmul.mubr.f32.gmra.mrb[0].mxu0 %v2889
      %v3155 = vpop.f32.mrb[0].mxu0
      %v3156 = vadd.f32 0.0, %v3155
      %v3157 = vpop.f32.mrb[0].mxu0
      %3158 = vmatprep.mubr.f32.mxu0 0.0
      %3159 = vmatmul.mubr.f32.gmra.mrb[0].mxu0 %v2892
      %v3160 = vpop.f32.mrb[0].mxu0
      %v3161 = vadd.f32 0.0, %v3160
      %v3162 = vpop.f32.mrb[0].mxu0
      %3163 = vdwg.mxu0
      %v3164 = vadd.f32 %v2686, %v2961
      %v3165 = vadd.f32 %v2687, %v2966
      %v3166 = vadd.f32 %v2688, %v2971
      %v3167 = vadd.f32 %v2689, %v2976
      %v3168 = vadd.f32 %v2690, %v2981
      %v3169 = vadd.f32 %v2691, %v2986
      %v3170 = vadd.f32 %v2692, %v2991
      %v3171 = vadd.f32 %v2693, %v2996
      %v3172 = vadd.f32 %v2694, %v3001
      %v3173 = vadd.f32 %v2695, %v3006
      %v3174 = vadd.f32 %v2696, %v3011
      %v3175 = vadd.f32 %v2697, %v3016
      %v3176 = vadd.f32 %v2698, %v3021
      %v3177 = vadd.f32 %v2699, %v3026
      %v3178 = vadd.f32 %v2700, %v3031
      %v3179 = vadd.f32 %v2701, %v3036
      %v3180 = vadd.f32 %v2702, %v3041
      %v3181 = vadd.f32 %v2703, %v3046
      %v3182 = vadd.f32 %v2704, %v3051
      %v3183 = vadd.f32 %v2705, %v3056
      %v3184 = vadd.f32 %v2706, %v3061
      %v3185 = vadd.f32 %v2707, %v3066
      %v3186 = vadd.f32 %v2708, %v3071
      %v3187 = vadd.f32 %v2709, %v3076
      %v3188 = vadd.f32 %v2710, %v3081
      %v3189 = vadd.f32 %v2711, %v3086
      %v3190 = vadd.f32 %v2712, %v3091
      %v3191 = vadd.f32 %v2713, %v3096
      %v3192 = vadd.f32 %v2714, %v3101
      %v3193 = vadd.f32 %v2715, %v3106
      %v3194 = vadd.f32 %v2716, %v3111
      %v3195 = vadd.f32 %v2717, %v3116
      %v3196 = vadd.f32 %v2718, %v3121
      %v3197 = vadd.f32 %v2719, %v3126
      %v3198 = vadd.f32 %v2720, %v3131
      %v3199 = vadd.f32 %v2721, %v3136
      %v3200 = vadd.f32 %v2722, %v3141
      %v3201 = vadd.f32 %v2723, %v3146
      %v3202 = vadd.f32 %v2724, %v3151
      %v3203 = vadd.f32 %v2725, %v3156
      %v3204 = vadd.f32 %v2726, %v3161
      %v3205 = vld [vmem:[#allocation2 + $0x19] sm:$0xff]
      %v3206 = vld [vmem:[#allocation2 + $0x21] sm:$0xff]
      %v3207 = vld [vmem:[#allocation2 + $0x29] sm:$0xff]
      %v3208 = vld [vmem:[#allocation2 + $0x31] sm:$0xff]
      %v3209 = vld [vmem:[#allocation2 + $0x39] sm:$0xff]
      %v3210 = vld [vmem:[#allocation2 + $0x41] sm:$0xff]
      %v3211 = vld [vmem:[#allocation2 + $0x49] sm:$0xff]
      %v3212 = vld [vmem:[#allocation2 + $0x51] sm:$0xff]
      %v3213 = vld [vmem:[#allocation2 + $0x59] sm:$0xff]
      %v3214 = vld [vmem:[#allocation2 + $0x61] sm:$0xff]
      %v3215 = vld [vmem:[#allocation2 + $0x69] sm:$0xff]
      %v3216 = vld [vmem:[#allocation2 + $0x71] sm:$0xff]
      %v3217 = vld [vmem:[#allocation2 + $0x79] sm:$0xff]
      %v3218 = vld [vmem:[#allocation2 + $0x81] sm:$0xff]
      %v3219 = vld [vmem:[#allocation2 + $0x89] sm:$0xff]
      %v3220 = vld [vmem:[#allocation2 + $0x91] sm:$0xff]
      %v3221 = vld [vmem:[#allocation2 + $0x99] sm:$0xff]
      %v3222 = vld [vmem:[#allocation2 + $0xa1] sm:$0xff]
      %v3223 = vld [vmem:[#allocation2 + $0xa9] sm:$0xff]
      %v3224 = vld [vmem:[#allocation2 + $0xb1] sm:$0xff]
      %v3225 = vld [vmem:[#allocation2 + $0xb9] sm:$0xff]
      %v3226 = vld [vmem:[#allocation2 + $0xc1] sm:$0xff]
      %v3227 = vld [vmem:[#allocation2 + $0xc9] sm:$0xff]
      %v3228 = vld [vmem:[#allocation2 + $0xd1] sm:$0xff]
      %v3229 = vld [vmem:[#allocation2 + $0xd9] sm:$0xff]
      %v3230 = vld [vmem:[#allocation2 + $0xe1] sm:$0xff]
      %v3231 = vld [vmem:[#allocation2 + $0xe9] sm:$0xff]
      %v3232 = vld [vmem:[#allocation2 + $0xf1] sm:$0xff]
      %v3233 = vld [vmem:[#allocation2 + $0xf9] sm:$0xff]
      %v3234 = vld [vmem:[#allocation2 + $0x101] sm:$0xff]
      %v3235 = vld [vmem:[#allocation2 + $0x109] sm:$0xff]
      %v3236 = vld [vmem:[#allocation2 + $0x111] sm:$0xff]
      %v3237 = vld [vmem:[#allocation2 + $0x119] sm:$0xff]
      %v3238 = vld [vmem:[#allocation2 + $0x121] sm:$0xff]
      %v3239 = vld [vmem:[#allocation2 + $0x129] sm:$0xff]
      %v3240 = vld [vmem:[#allocation2 + $0x131] sm:$0xff]
      %v3241 = vld [vmem:[#allocation2 + $0x139] sm:$0xff]
      %v3242 = vld [vmem:[#allocation2 + $0x141] sm:$0xff]
      %v3243 = vld [vmem:[#allocation2 + $0x149] sm:$0xff]
      %v3244 = vld [vmem:[#allocation2 + $0x151] sm:$0xff]
      %v3245 = vld [vmem:[#allocation2 + $0x159] sm:$0xf]
      %s3246 = scalar_lea.vmem %s3, 80
      %v3247 = vld [vmem:[%s3246] sm:$0xff]
      %v3248 = vld [vmem:[%s3246 + $0x8] sm:$0xff]
      %v3250 = vsel %vm760, %v3205, 0
      %v3253 = vsel %vm760, %v3206, 0
      %v3256 = vsel %vm760, %v3207, 0
      %v3259 = vsel %vm760, %v3208, 0
      %v3262 = vsel %vm760, %v3209, 0
      %v3265 = vsel %vm760, %v3210, 0
      %v3268 = vsel %vm760, %v3211, 0
      %v3271 = vsel %vm760, %v3212, 0
      %v3274 = vsel %vm760, %v3213, 0
      %v3277 = vsel %vm760, %v3214, 0
      %v3280 = vsel %vm760, %v3215, 0
      %v3283 = vsel %vm760, %v3216, 0
      %v3286 = vsel %vm760, %v3217, 0
      %v3289 = vsel %vm760, %v3218, 0
      %v3292 = vsel %vm760, %v3219, 0
      %v3295 = vsel %vm760, %v3220, 0
      %v3298 = vsel %vm760, %v3221, 0
      %v3301 = vsel %vm760, %v3222, 0
      %v3304 = vsel %vm760, %v3223, 0
      %v3307 = vsel %vm760, %v3224, 0
      %v3310 = vsel %vm760, %v3225, 0
      %v3313 = vsel %vm760, %v3226, 0
      %v3316 = vsel %vm760, %v3227, 0
      %v3319 = vsel %vm760, %v3228, 0
      %v3322 = vsel %vm760, %v3229, 0
      %v3325 = vsel %vm760, %v3230, 0
      %v3328 = vsel %vm760, %v3231, 0
      %v3331 = vsel %vm760, %v3232, 0
      %v3334 = vsel %vm760, %v3233, 0
      %v3337 = vsel %vm760, %v3234, 0
      %v3340 = vsel %vm760, %v3235, 0
      %v3343 = vsel %vm760, %v3236, 0
      %v3346 = vsel %vm760, %v3237, 0
      %v3349 = vsel %vm760, %v3238, 0
      %v3352 = vsel %vm760, %v3239, 0
      %v3355 = vsel %vm760, %v3240, 0
      %v3358 = vsel %vm760, %v3241, 0
      %v3361 = vsel %vm760, %v3242, 0
      %v3364 = vsel %vm760, %v3243, 0
      %v3367 = vsel %vm760, %v3244, 0
      %v3370 = vsel %vm760, %v3245, 0
      %3372 = vmatprep.subr.mxu0 0.0
      %3373 = vmatpush1.msra.mxu0 %v3247
      %3374 = vmatprep.subr.mxu0 0.0
      %3375 = vmatpush1.msra.mxu0 %v3248
      %3376 = vmatprep.subr.mxu0 0.0
      %3377 = vmatpush1.msra.mxu0 0.0
      %3378 = vmatprep.subr.mxu0 0.0
      %3379 = vmatpush1.msra.mxu0 0.0
      %3380 = vmatprep.subr.mxu0 0.0
      %3381 = vmatpush1.msra.mxu0 0.0
      %3382 = vmatprep.subr.mxu0 0.0
      %3383 = vmatpush1.msra.mxu0 0.0
      %3384 = vmatprep.subr.mxu0 0.0
      %3385 = vmatpush1.msra.mxu0 0.0
      %3386 = vmatprep.subr.mxu0 0.0
      %3387 = vmatpush1.msra.mxu0 0.0
      %3388 = vmatprep.subr.mxu0 0.0
      %3389 = vmatpush1.msra.mxu0 0.0
      %3390 = vmatprep.subr.mxu0 0.0
      %3391 = vmatpush1.msra.mxu0 0.0
      %3392 = vmatprep.subr.mxu0 0.0
      %3393 = vmatpush1.msra.mxu0 0.0
      %3394 = vmatprep.subr.mxu0 0.0
      %3395 = vmatpush1.msra.mxu0 0.0
      %3396 = vmatprep.subr.mxu0 0.0
      %3397 = vmatpush1.msra.mxu0 0.0
      %3398 = vmatprep.subr.mxu0 0.0
      %3399 = vmatpush1.msra.mxu0 0.0
      %3400 = vmatprep.subr.mxu0 0.0
      %3401 = vmatpush1.msra.mxu0 0.0
      %3402 = vmatprep.subr.mxu0 0.0
      %3403 = vmatpush1.msra.mxu0 0.0
      %3404 = vmatprep.subr.mxu0 0.0
      %3405 = vmatpush1.msra.mxu0 0.0
      %3406 = vmatprep.subr.mxu0 0.0
      %3407 = vmatpush1.msra.mxu0 0.0
      %3408 = vmatprep.subr.mxu0 0.0
      %3409 = vmatpush1.msra.mxu0 0.0
      %3410 = vmatprep.subr.mxu0 0.0
      %3411 = vmatpush1.msra.mxu0 0.0
      %3412 = vmatprep.subr.mxu0 0.0
      %3413 = vmatpush1.msra.mxu0 0.0
      %3414 = vmatprep.subr.mxu0 0.0
      %3415 = vmatpush1.msra.mxu0 0.0
      %3416 = vmatprep.subr.mxu0 0.0
      %3417 = vmatpush1.msra.mxu0 0.0
      %3418 = vmatprep.subr.mxu0 0.0
      %3419 = vmatpush1.msra.mxu0 0.0
      %3420 = vmatprep.subr.mxu0 0.0
      %3421 = vmatpush1.msra.mxu0 0.0
      %3422 = vmatprep.subr.mxu0 0.0
      %3423 = vmatpush1.msra.mxu0 0.0
      %3424 = vmatprep.subr.mxu0 0.0
      %3425 = vmatpush1.msra.mxu0 0.0
      %3426 = vmatprep.subr.mxu0 0.0
      %3427 = vmatpush1.msra.mxu0 0.0
      %3428 = vmatprep.subr.mxu0 0.0
      %3429 = vmatpush1.msra.mxu0 0.0
      %3430 = vmatprep.subr.mxu0 0.0
      %3431 = vmatpush1.msra.mxu0 0.0
      %3432 = vmatprep.subr.mxu0 0.0
      %3433 = vmatpush1.msra.mxu0 0.0
      %3434 = vmatprep.subr.mxu0 0.0
      %3435 = vmatpush1.msra.mxu0 0.0
      %3436 = vmatprep.mubr.f32.mxu0 0.0
      %3437 = vmatmul.mubr.f32.gmra.mrb[0].mxu0 %v3250
      %v3438 = vpop.f32.mrb[0].mxu0
      %v3439 = vadd.f32 0.0, %v3438
      %v3440 = vpop.f32.mrb[0].mxu0
      %3441 = vmatprep.mubr.f32.mxu0 0.0
      %3442 = vmatmul.mubr.f32.gmra.mrb[0].mxu0 %v3253
      %v3443 = vpop.f32.mrb[0].mxu0
      %v3444 = vadd.f32 0.0, %v3443
      %v3445 = vpop.f32.mrb[0].mxu0
      %3446 = vmatprep.mubr.f32.mxu0 0.0
      %3447 = vmatmul.mubr.f32.gmra.mrb[0].mxu0 %v3256
      %v3448 = vpop.f32.mrb[0].mxu0
      %v3449 = vadd.f32 0.0, %v3448
      %v3450 = vpop.f32.mrb[0].mxu0
      %3451 = vmatprep.mubr.f32.mxu0 0.0
      %3452 = vmatmul.mubr.f32.gmra.mrb[0].mxu0 %v3259
      %v3453 = vpop.f32.mrb[0].mxu0
      %v3454 = vadd.f32 0.0, %v3453
      %v3455 = vpop.f32.mrb[0].mxu0
      %3456 = vmatprep.mubr.f32.mxu0 0.0
      %3457 = vmatmul.mubr.f32.gmra.mrb[0].mxu0 %v3262
      %v3458 = vpop.f32.mrb[0].mxu0
      %v3459 = vadd.f32 0.0, %v3458
      %v3460 = vpop.f32.mrb[0].mxu0
      %3461 = vmatprep.mubr.f32.mxu0 0.0
      %3462 = vmatmul.mubr.f32.gmra.mrb[0].mxu0 %v3265
      %v3463 = vpop.f32.mrb[0].mxu0
      %v3464 = vadd.f32 0.0, %v3463
      %v3465 = vpop.f32.mrb[0].mxu0
      %3466 = vmatprep.mubr.f32.mxu0 0.0
      %3467 = vmatmul.mubr.f32.gmra.mrb[0].mxu0 %v3268
      %v3468 = vpop.f32.mrb[0].mxu0
      %v3469 = vadd.f32 0.0, %v3468
      %v3470 = vpop.f32.mrb[0].mxu0
      %3471 = vmatprep.mubr.f32.mxu0 0.0
      %3472 = vmatmul.mubr.f32.gmra.mrb[0].mxu0 %v3271
      %v3473 = vpop.f32.mrb[0].mxu0
      %v3474 = vadd.f32 0.0, %v3473
      %v3475 = vpop.f32.mrb[0].mxu0
      %3476 = vmatprep.mubr.f32.mxu0 0.0
      %3477 = vmatmul.mubr.f32.gmra.mrb[0].mxu0 %v3274
      %v3478 = vpop.f32.mrb[0].mxu0
      %v3479 = vadd.f32 0.0, %v3478
      %v3480 = vpop.f32.mrb[0].mxu0
      %3481 = vmatprep.mubr.f32.mxu0 0.0
      %3482 = vmatmul.mubr.f32.gmra.mrb[0].mxu0 %v3277
      %v3483 = vpop.f32.mrb[0].mxu0
      %v3484 = vadd.f32 0.0, %v3483
      %v3485 = vpop.f32.mrb[0].mxu0
      %3486 = vmatprep.mubr.f32.mxu0 0.0
      %3487 = vmatmul.mubr.f32.gmra.mrb[0].mxu0 %v3280
      %v3488 = vpop.f32.mrb[0].mxu0
      %v3489 = vadd.f32 0.0, %v3488
      %v3490 = vpop.f32.mrb[0].mxu0
      %3491 = vmatprep.mubr.f32.mxu0 0.0
      %3492 = vmatmul.mubr.f32.gmra.mrb[0].mxu0 %v3283
      %v3493 = vpop.f32.mrb[0].mxu0
      %v3494 = vadd.f32 0.0, %v3493
      %v3495 = vpop.f32.mrb[0].mxu0
      %3496 = vmatprep.mubr.f32.mxu0 0.0
      %3497 = vmatmul.mubr.f32.gmra.mrb[0].mxu0 %v3286
      %v3498 = vpop.f32.mrb[0].mxu0
      %v3499 = vadd.f32 0.0, %v3498
      %v3500 = vpop.f32.mrb[0].mxu0
      %3501 = vmatprep.mubr.f32.mxu0 0.0
      %3502 = vmatmul.mubr.f32.gmra.mrb[0].mxu0 %v3289
      %v3503 = vpop.f32.mrb[0].mxu0
      %v3504 = vadd.f32 0.0, %v3503
      %v3505 = vpop.f32.mrb[0].mxu0
      %3506 = vmatprep.mubr.f32.mxu0 0.0
      %3507 = vmatmul.mubr.f32.gmra.mrb[0].mxu0 %v3292
      %v3508 = vpop.f32.mrb[0].mxu0
      %v3509 = vadd.f32 0.0, %v3508
      %v3510 = vpop.f32.mrb[0].mxu0
      %3511 = vmatprep.mubr.f32.mxu0 0.0
      %3512 = vmatmul.mubr.f32.gmra.mrb[0].mxu0 %v3295
      %v3513 = vpop.f32.mrb[0].mxu0
      %v3514 = vadd.f32 0.0, %v3513
      %v3515 = vpop.f32.mrb[0].mxu0
      %3516 = vmatprep.mubr.f32.mxu0 0.0
      %3517 = vmatmul.mubr.f32.gmra.mrb[0].mxu0 %v3298
      %v3518 = vpop.f32.mrb[0].mxu0
      %v3519 = vadd.f32 0.0, %v3518
      %v3520 = vpop.f32.mrb[0].mxu0
      %3521 = vmatprep.mubr.f32.mxu0 0.0
      %3522 = vmatmul.mubr.f32.gmra.mrb[0].mxu0 %v3301
      %v3523 = vpop.f32.mrb[0].mxu0
      %v3524 = vadd.f32 0.0, %v3523
      %v3525 = vpop.f32.mrb[0].mxu0
      %3526 = vmatprep.mubr.f32.mxu0 0.0
      %3527 = vmatmul.mubr.f32.gmra.mrb[0].mxu0 %v3304
      %v3528 = vpop.f32.mrb[0].mxu0
      %v3529 = vadd.f32 0.0, %v3528
      %v3530 = vpop.f32.mrb[0].mxu0
      %3531 = vmatprep.mubr.f32.mxu0 0.0
      %3532 = vmatmul.mubr.f32.gmra.mrb[0].mxu0 %v3307
      %v3533 = vpop.f32.mrb[0].mxu0
      %v3534 = vadd.f32 0.0, %v3533
      %v3535 = vpop.f32.mrb[0].mxu0
      %3536 = vmatprep.mubr.f32.mxu0 0.0
      %3537 = vmatmul.mubr.f32.gmra.mrb[0].mxu0 %v3310
      %v3538 = vpop.f32.mrb[0].mxu0
      %v3539 = vadd.f32 0.0, %v3538
      %v3540 = vpop.f32.mrb[0].mxu0
      %3541 = vmatprep.mubr.f32.mxu0 0.0
      %3542 = vmatmul.mubr.f32.gmra.mrb[0].mxu0 %v3313
      %v3543 = vpop.f32.mrb[0].mxu0
      %v3544 = vadd.f32 0.0, %v3543
      %v3545 = vpop.f32.mrb[0].mxu0
      %3546 = vmatprep.mubr.f32.mxu0 0.0
      %3547 = vmatmul.mubr.f32.gmra.mrb[0].mxu0 %v3316
      %v3548 = vpop.f32.mrb[0].mxu0
      %v3549 = vadd.f32 0.0, %v3548
      %v3550 = vpop.f32.mrb[0].mxu0
      %3551 = vmatprep.mubr.f32.mxu0 0.0
      %3552 = vmatmul.mubr.f32.gmra.mrb[0].mxu0 %v3319
      %v3553 = vpop.f32.mrb[0].mxu0
      %v3554 = vadd.f32 0.0, %v3553
      %v3555 = vpop.f32.mrb[0].mxu0
      %3556 = vmatprep.mubr.f32.mxu0 0.0
      %3557 = vmatmul.mubr.f32.gmra.mrb[0].mxu0 %v3322
      %v3558 = vpop.f32.mrb[0].mxu0
      %v3559 = vadd.f32 0.0, %v3558
      %v3560 = vpop.f32.mrb[0].mxu0
      %3561 = vmatprep.mubr.f32.mxu0 0.0
      %3562 = vmatmul.mubr.f32.gmra.mrb[0].mxu0 %v3325
      %v3563 = vpop.f32.mrb[0].mxu0
      %v3564 = vadd.f32 0.0, %v3563
      %v3565 = vpop.f32.mrb[0].mxu0
      %3566 = vmatprep.mubr.f32.mxu0 0.0
      %3567 = vmatmul.mubr.f32.gmra.mrb[0].mxu0 %v3328
      %v3568 = vpop.f32.mrb[0].mxu0
      %v3569 = vadd.f32 0.0, %v3568
      %v3570 = vpop.f32.mrb[0].mxu0
      %3571 = vmatprep.mubr.f32.mxu0 0.0
      %3572 = vmatmul.mubr.f32.gmra.mrb[0].mxu0 %v3331
      %v3573 = vpop.f32.mrb[0].mxu0
      %v3574 = vadd.f32 0.0, %v3573
      %v3575 = vpop.f32.mrb[0].mxu0
      %3576 = vmatprep.mubr.f32.mxu0 0.0
      %3577 = vmatmul.mubr.f32.gmra.mrb[0].mxu0 %v3334
      %v3578 = vpop.f32.mrb[0].mxu0
      %v3579 = vadd.f32 0.0, %v3578
      %v3580 = vpop.f32.mrb[0].mxu0
      %3581 = vmatprep.mubr.f32.mxu0 0.0
      %3582 = vmatmul.mubr.f32.gmra.mrb[0].mxu0 %v3337
      %v3583 = vpop.f32.mrb[0].mxu0
      %v3584 = vadd.f32 0.0, %v3583
      %v3585 = vpop.f32.mrb[0].mxu0
      %3586 = vmatprep.mubr.f32.mxu0 0.0
      %3587 = vmatmul.mubr.f32.gmra.mrb[0].mxu0 %v3340
      %v3588 = vpop.f32.mrb[0].mxu0
      %v3589 = vadd.f32 0.0, %v3588
      %v3590 = vpop.f32.mrb[0].mxu0
      %3591 = vmatprep.mubr.f32.mxu0 0.0
      %3592 = vmatmul.mubr.f32.gmra.mrb[0].mxu0 %v3343
      %v3593 = vpop.f32.mrb[0].mxu0
      %v3594 = vadd.f32 0.0, %v3593
      %v3595 = vpop.f32.mrb[0].mxu0
      %3596 = vmatprep.mubr.f32.mxu0 0.0
      %3597 = vmatmul.mubr.f32.gmra.mrb[0].mxu0 %v3346
      %v3598 = vpop.f32.mrb[0].mxu0
      %v3599 = vadd.f32 0.0, %v3598
      %v3600 = vpop.f32.mrb[0].mxu0
      %3601 = vmatprep.mubr.f32.mxu0 0.0
      %3602 = vmatmul.mubr.f32.gmra.mrb[0].mxu0 %v3349
      %v3603 = vpop.f32.mrb[0].mxu0
      %v3604 = vadd.f32 0.0, %v3603
      %v3605 = vpop.f32.mrb[0].mxu0
      %3606 = vmatprep.mubr.f32.mxu0 0.0
      %3607 = vmatmul.mubr.f32.gmra.mrb[0].mxu0 %v3352
      %v3608 = vpop.f32.mrb[0].mxu0
      %v3609 = vadd.f32 0.0, %v3608
      %v3610 = vpop.f32.mrb[0].mxu0
      %3611 = vmatprep.mubr.f32.mxu0 0.0
      %3612 = vmatmul.mubr.f32.gmra.mrb[0].mxu0 %v3355
      %v3613 = vpop.f32.mrb[0].mxu0
      %v3614 = vadd.f32 0.0, %v3613
      %v3615 = vpop.f32.mrb[0].mxu0
      %3616 = vmatprep.mubr.f32.mxu0 0.0
      %3617 = vmatmul.mubr.f32.gmra.mrb[0].mxu0 %v3358
      %v3618 = vpop.f32.mrb[0].mxu0
      %v3619 = vadd.f32 0.0, %v3618
      %v3620 = vpop.f32.mrb[0].mxu0
      %3621 = vmatprep.mubr.f32.mxu0 0.0
      %3622 = vmatmul.mubr.f32.gmra.mrb[0].mxu0 %v3361
      %v3623 = vpop.f32.mrb[0].mxu0
      %v3624 = vadd.f32 0.0, %v3623
      %v3625 = vpop.f32.mrb[0].mxu0
      %3626 = vmatprep.mubr.f32.mxu0 0.0
      %3627 = vmatmul.mubr.f32.gmra.mrb[0].mxu0 %v3364
      %v3628 = vpop.f32.mrb[0].mxu0
      %v3629 = vadd.f32 0.0, %v3628
      %v3630 = vpop.f32.mrb[0].mxu0
      %3631 = vmatprep.mubr.f32.mxu0 0.0
      %3632 = vmatmul.mubr.f32.gmra.mrb[0].mxu0 %v3367
      %v3633 = vpop.f32.mrb[0].mxu0
      %v3634 = vadd.f32 0.0, %v3633
      %v3635 = vpop.f32.mrb[0].mxu0
      %3636 = vmatprep.mubr.f32.mxu0 0.0
      %3637 = vmatmul.mubr.f32.gmra.mrb[0].mxu0 %v3370
      %v3638 = vpop.f32.mrb[0].mxu0
      %v3639 = vadd.f32 0.0, %v3638
      %v3640 = vpop.f32.mrb[0].mxu0
      %3641 = vdwg.mxu0
      %v3642 = vadd.f32 %v3164, %v3439
      %v3643 = vadd.f32 %v3165, %v3444
      %v3644 = vadd.f32 %v3166, %v3449
      %v3645 = vadd.f32 %v3167, %v3454
      %v3646 = vadd.f32 %v3168, %v3459
      %v3647 = vadd.f32 %v3169, %v3464
      %v3648 = vadd.f32 %v3170, %v3469
      %v3649 = vadd.f32 %v3171, %v3474
      %v3650 = vadd.f32 %v3172, %v3479
      %v3651 = vadd.f32 %v3173, %v3484
      %v3652 = vadd.f32 %v3174, %v3489
      %v3653 = vadd.f32 %v3175, %v3494
      %v3654 = vadd.f32 %v3176, %v3499
      %v3655 = vadd.f32 %v3177, %v3504
      %v3656 = vadd.f32 %v3178, %v3509
      %v3657 = vadd.f32 %v3179, %v3514
      %v3658 = vadd.f32 %v3180, %v3519
      %v3659 = vadd.f32 %v3181, %v3524
      %v3660 = vadd.f32 %v3182, %v3529
      %v3661 = vadd.f32 %v3183, %v3534
      %v3662 = vadd.f32 %v3184, %v3539
      %v3663 = vadd.f32 %v3185, %v3544
      %v3664 = vadd.f32 %v3186, %v3549
      %v3665 = vadd.f32 %v3187, %v3554
      %v3666 = vadd.f32 %v3188, %v3559
      %v3667 = vadd.f32 %v3189, %v3564
      %v3668 = vadd.f32 %v3190, %v3569
      %v3669 = vadd.f32 %v3191, %v3574
      %v3670 = vadd.f32 %v3192, %v3579
      %v3671 = vadd.f32 %v3193, %v3584
      %v3672 = vadd.f32 %v3194, %v3589
      %v3673 = vadd.f32 %v3195, %v3594
      %v3674 = vadd.f32 %v3196, %v3599
      %v3675 = vadd.f32 %v3197, %v3604
      %v3676 = vadd.f32 %v3198, %v3609
      %v3677 = vadd.f32 %v3199, %v3614
      %v3678 = vadd.f32 %v3200, %v3619
      %v3679 = vadd.f32 %v3201, %v3624
      %v3680 = vadd.f32 %v3202, %v3629
      %v3681 = vadd.f32 %v3203, %v3634
      %v3682 = vadd.f32 %v3204, %v3639
      %v3683 = vld [vmem:[#allocation2 + $0x29] sm:$0xff]
      %v3684 = vld [vmem:[#allocation2 + $0x31] sm:$0xff]
      %v3685 = vld [vmem:[#allocation2 + $0x39] sm:$0xff]
      %v3686 = vld [vmem:[#allocation2 + $0x41] sm:$0xff]
      %v3687 = vld [vmem:[#allocation2 + $0x49] sm:$0xff]
      %v3688 = vld [vmem:[#allocation2 + $0x51] sm:$0xff]
      %v3689 = vld [vmem:[#allocation2 + $0x59] sm:$0xff]
      %v3690 = vld [vmem:[#allocation2 + $0x61] sm:$0xff]
      %v3691 = vld [vmem:[#allocation2 + $0x69] sm:$0xff]
      %v3692 = vld [vmem:[#allocation2 + $0x71] sm:$0xff]
      %v3693 = vld [vmem:[#allocation2 + $0x79] sm:$0xff]
      %v3694 = vld [vmem:[#allocation2 + $0x81] sm:$0xff]
      %v3695 = vld [vmem:[#allocation2 + $0x89] sm:$0xff]
      %v3696 = vld [vmem:[#allocation2 + $0x91] sm:$0xff]
      %v3697 = vld [vmem:[#allocation2 + $0x99] sm:$0xff]
      %v3698 = vld [vmem:[#allocation2 + $0xa1] sm:$0xff]
      %v3699 = vld [vmem:[#allocation2 + $0xa9] sm:$0xff]
      %v3700 = vld [vmem:[#allocation2 + $0xb1] sm:$0xff]
      %v3701 = vld [vmem:[#allocation2 + $0xb9] sm:$0xff]
      %v3702 = vld [vmem:[#allocation2 + $0xc1] sm:$0xff]
      %v3703 = vld [vmem:[#allocation2 + $0xc9] sm:$0xff]
      %v3704 = vld [vmem:[#allocation2 + $0xd1] sm:$0xff]
      %v3705 = vld [vmem:[#allocation2 + $0xd9] sm:$0xff]
      %v3706 = vld [vmem:[#allocation2 + $0xe1] sm:$0xff]
      %v3707 = vld [vmem:[#allocation2 + $0xe9] sm:$0xff]
      %v3708 = vld [vmem:[#allocation2 + $0xf1] sm:$0xff]
      %v3709 = vld [vmem:[#allocation2 + $0xf9] sm:$0xff]
      %v3710 = vld [vmem:[#allocation2 + $0x101] sm:$0xff]
      %v3711 = vld [vmem:[#allocation2 + $0x109] sm:$0xff]
      %v3712 = vld [vmem:[#allocation2 + $0x111] sm:$0xff]
      %v3713 = vld [vmem:[#allocation2 + $0x119] sm:$0xff]
      %v3714 = vld [vmem:[#allocation2 + $0x121] sm:$0xff]
      %v3715 = vld [vmem:[#allocation2 + $0x129] sm:$0xff]
      %v3716 = vld [vmem:[#allocation2 + $0x131] sm:$0xff]
      %v3717 = vld [vmem:[#allocation2 + $0x139] sm:$0xff]
      %v3718 = vld [vmem:[#allocation2 + $0x141] sm:$0xff]
      %v3719 = vld [vmem:[#allocation2 + $0x149] sm:$0xff]
      %v3720 = vld [vmem:[#allocation2 + $0x151] sm:$0xff]
      %v3721 = vld [vmem:[#allocation2 + $0x159] sm:$0xff]
      %v3722 = vld [vmem:[#allocation2 + $0x161] sm:$0xff]
      %v3723 = vld [vmem:[#allocation2 + $0x169] sm:$0xf]
      %s3724 = scalar_lea.vmem %s3, 96
      %v3725 = vld [vmem:[%s3724] sm:$0xff]
      %v3726 = vld [vmem:[%s3724 + $0x8] sm:$0xff]
      %v3728 = vsel %vm760, %v3683, 0
      %v3731 = vsel %vm760, %v3684, 0
      %v3734 = vsel %vm760, %v3685, 0
      %v3737 = vsel %vm760, %v3686, 0
      %v3740 = vsel %vm760, %v3687, 0
      %v3743 = vsel %vm760, %v3688, 0
      %v3746 = vsel %vm760, %v3689, 0
      %v3749 = vsel %vm760, %v3690, 0
      %v3752 = vsel %vm760, %v3691, 0
      %v3755 = vsel %vm760, %v3692, 0
      %v3758 = vsel %vm760, %v3693, 0
      %v3761 = vsel %vm760, %v3694, 0
      %v3764 = vsel %vm760, %v3695, 0
      %v3767 = vsel %vm760, %v3696, 0
      %v3770 = vsel %vm760, %v3697, 0
      %v3773 = vsel %vm760, %v3698, 0
      %v3776 = vsel %vm760, %v3699, 0
      %v3779 = vsel %vm760, %v3700, 0
      %v3782 = vsel %vm760, %v3701, 0
      %v3785 = vsel %vm760, %v3702, 0
      %v3788 = vsel %vm760, %v3703, 0
      %v3791 = vsel %vm760, %v3704, 0
      %v3794 = vsel %vm760, %v3705, 0
      %v3797 = vsel %vm760, %v3706, 0
      %v3800 = vsel %vm760, %v3707, 0
      %v3803 = vsel %vm760, %v3708, 0
      %v3806 = vsel %vm760, %v3709, 0
      %v3809 = vsel %vm760, %v3710, 0
      %v3812 = vsel %vm760, %v3711, 0
      %v3815 = vsel %vm760, %v3712, 0
      %v3818 = vsel %vm760, %v3713, 0
      %v3821 = vsel %vm760, %v3714, 0
      %v3824 = vsel %vm760, %v3715, 0
      %v3827 = vsel %vm760, %v3716, 0
      %v3830 = vsel %vm760, %v3717, 0
      %v3833 = vsel %vm760, %v3718, 0
      %v3836 = vsel %vm760, %v3719, 0
      %v3839 = vsel %vm760, %v3720, 0
      %v3842 = vsel %vm760, %v3721, 0
      %v3845 = vsel %vm760, %v3722, 0
      %v3848 = vsel %vm760, %v3723, 0
      %3850 = vmatprep.subr.mxu0 0.0
      %3851 = vmatpush1.msra.mxu0 %v3725
      %3852 = vmatprep.subr.mxu0 0.0
      %3853 = vmatpush1.msra.mxu0 %v3726
      %3854 = vmatprep.subr.mxu0 0.0
      %3855 = vmatpush1.msra.mxu0 0.0
      %3856 = vmatprep.subr.mxu0 0.0
      %3857 = vmatpush1.msra.mxu0 0.0
      %3858 = vmatprep.subr.mxu0 0.0
      %3859 = vmatpush1.msra.mxu0 0.0
      %3860 = vmatprep.subr.mxu0 0.0
      %3861 = vmatpush1.msra.mxu0 0.0
      %3862 = vmatprep.subr.mxu0 0.0
      %3863 = vmatpush1.msra.mxu0 0.0
      %3864 = vmatprep.subr.mxu0 0.0
      %3865 = vmatpush1.msra.mxu0 0.0
      %3866 = vmatprep.subr.mxu0 0.0
      %3867 = vmatpush1.msra.mxu0 0.0
      %3868 = vmatprep.subr.mxu0 0.0
      %3869 = vmatpush1.msra.mxu0 0.0
      %3870 = vmatprep.subr.mxu0 0.0
      %3871 = vmatpush1.msra.mxu0 0.0
      %3872 = vmatprep.subr.mxu0 0.0
      %3873 = vmatpush1.msra.mxu0 0.0
      %3874 = vmatprep.subr.mxu0 0.0
      %3875 = vmatpush1.msra.mxu0 0.0
      %3876 = vmatprep.subr.mxu0 0.0
      %3877 = vmatpush1.msra.mxu0 0.0
      %3878 = vmatprep.subr.mxu0 0.0
      %3879 = vmatpush1.msra.mxu0 0.0
      %3880 = vmatprep.subr.mxu0 0.0
      %3881 = vmatpush1.msra.mxu0 0.0
      %3882 = vmatprep.subr.mxu0 0.0
      %3883 = vmatpush1.msra.mxu0 0.0
      %3884 = vmatprep.subr.mxu0 0.0
      %3885 = vmatpush1.msra.mxu0 0.0
      %3886 = vmatprep.subr.mxu0 0.0
      %3887 = vmatpush1.msra.mxu0 0.0
      %3888 = vmatprep.subr.mxu0 0.0
      %3889 = vmatpush1.msra.mxu0 0.0
      %3890 = vmatprep.subr.mxu0 0.0
      %3891 = vmatpush1.msra.mxu0 0.0
      %3892 = vmatprep.subr.mxu0 0.0
      %3893 = vmatpush1.msra.mxu0 0.0
      %3894 = vmatprep.subr.mxu0 0.0
      %3895 = vmatpush1.msra.mxu0 0.0
      %3896 = vmatprep.subr.mxu0 0.0
      %3897 = vmatpush1.msra.mxu0 0.0
      %3898 = vmatprep.subr.mxu0 0.0
      %3899 = vmatpush1.msra.mxu0 0.0
      %3900 = vmatprep.subr.mxu0 0.0
      %3901 = vmatpush1.msra.mxu0 0.0
      %3902 = vmatprep.subr.mxu0 0.0
      %3903 = vmatpush1.msra.mxu0 0.0
      %3904 = vmatprep.subr.mxu0 0.0
      %3905 = vmatpush1.msra.mxu0 0.0
      %3906 = vmatprep.subr.mxu0 0.0
      %3907 = vmatpush1.msra.mxu0 0.0
      %3908 = vmatprep.subr.mxu0 0.0
      %3909 = vmatpush1.msra.mxu0 0.0
      %3910 = vmatprep.subr.mxu0 0.0
      %3911 = vmatpush1.msra.mxu0 0.0
      %3912 = vmatprep.subr.mxu0 0.0
      %3913 = vmatpush1.msra.mxu0 0.0
      %3914 = vmatprep.mubr.f32.mxu0 0.0
      %3915 = vmatmul.mubr.f32.gmra.mrb[0].mxu0 %v3728
      %v3916 = vpop.f32.mrb[0].mxu0
      %v3917 = vadd.f32 0.0, %v3916
      %v3918 = vpop.f32.mrb[0].mxu0
      %3919 = vmatprep.mubr.f32.mxu0 0.0
      %3920 = vmatmul.mubr.f32.gmra.mrb[0].mxu0 %v3731
      %v3921 = vpop.f32.mrb[0].mxu0
      %v3922 = vadd.f32 0.0, %v3921
      %v3923 = vpop.f32.mrb[0].mxu0
      %3924 = vmatprep.mubr.f32.mxu0 0.0
      %3925 = vmatmul.mubr.f32.gmra.mrb[0].mxu0 %v3734
      %v3926 = vpop.f32.mrb[0].mxu0
      %v3927 = vadd.f32 0.0, %v3926
      %v3928 = vpop.f32.mrb[0].mxu0
      %3929 = vmatprep.mubr.f32.mxu0 0.0
      %3930 = vmatmul.mubr.f32.gmra.mrb[0].mxu0 %v3737
      %v3931 = vpop.f32.mrb[0].mxu0
      %v3932 = vadd.f32 0.0, %v3931
      %v3933 = vpop.f32.mrb[0].mxu0
      %3934 = vmatprep.mubr.f32.mxu0 0.0
      %3935 = vmatmul.mubr.f32.gmra.mrb[0].mxu0 %v3740
      %v3936 = vpop.f32.mrb[0].mxu0
      %v3937 = vadd.f32 0.0, %v3936
      %v3938 = vpop.f32.mrb[0].mxu0
      %3939 = vmatprep.mubr.f32.mxu0 0.0
      %3940 = vmatmul.mubr.f32.gmra.mrb[0].mxu0 %v3743
      %v3941 = vpop.f32.mrb[0].mxu0
      %v3942 = vadd.f32 0.0, %v3941
      %v3943 = vpop.f32.mrb[0].mxu0
      %3944 = vmatprep.mubr.f32.mxu0 0.0
      %3945 = vmatmul.mubr.f32.gmra.mrb[0].mxu0 %v3746
      %v3946 = vpop.f32.mrb[0].mxu0
      %v3947 = vadd.f32 0.0, %v3946
      %v3948 = vpop.f32.mrb[0].mxu0
      %3949 = vmatprep.mubr.f32.mxu0 0.0
      %3950 = vmatmul.mubr.f32.gmra.mrb[0].mxu0 %v3749
      %v3951 = vpop.f32.mrb[0].mxu0
      %v3952 = vadd.f32 0.0, %v3951
      %v3953 = vpop.f32.mrb[0].mxu0
      %3954 = vmatprep.mubr.f32.mxu0 0.0
      %3955 = vmatmul.mubr.f32.gmra.mrb[0].mxu0 %v3752
      %v3956 = vpop.f32.mrb[0].mxu0
      %v3957 = vadd.f32 0.0, %v3956
      %v3958 = vpop.f32.mrb[0].mxu0
      %3959 = vmatprep.mubr.f32.mxu0 0.0
      %3960 = vmatmul.mubr.f32.gmra.mrb[0].mxu0 %v3755
      %v3961 = vpop.f32.mrb[0].mxu0
      %v3962 = vadd.f32 0.0, %v3961
      %v3963 = vpop.f32.mrb[0].mxu0
      %3964 = vmatprep.mubr.f32.mxu0 0.0
      %3965 = vmatmul.mubr.f32.gmra.mrb[0].mxu0 %v3758
      %v3966 = vpop.f32.mrb[0].mxu0
      %v3967 = vadd.f32 0.0, %v3966
      %v3968 = vpop.f32.mrb[0].mxu0
      %3969 = vmatprep.mubr.f32.mxu0 0.0
      %3970 = vmatmul.mubr.f32.gmra.mrb[0].mxu0 %v3761
      %v3971 = vpop.f32.mrb[0].mxu0
      %v3972 = vadd.f32 0.0, %v3971
      %v3973 = vpop.f32.mrb[0].mxu0
      %3974 = vmatprep.mubr.f32.mxu0 0.0
      %3975 = vmatmul.mubr.f32.gmra.mrb[0].mxu0 %v3764
      %v3976 = vpop.f32.mrb[0].mxu0
      %v3977 = vadd.f32 0.0, %v3976
      %v3978 = vpop.f32.mrb[0].mxu0
      %3979 = vmatprep.mubr.f32.mxu0 0.0
      %3980 = vmatmul.mubr.f32.gmra.mrb[0].mxu0 %v3767
      %v3981 = vpop.f32.mrb[0].mxu0
      %v3982 = vadd.f32 0.0, %v3981
      %v3983 = vpop.f32.mrb[0].mxu0
      %3984 = vmatprep.mubr.f32.mxu0 0.0
      %3985 = vmatmul.mubr.f32.gmra.mrb[0].mxu0 %v3770
      %v3986 = vpop.f32.mrb[0].mxu0
      %v3987 = vadd.f32 0.0, %v3986
      %v3988 = vpop.f32.mrb[0].mxu0
      %3989 = vmatprep.mubr.f32.mxu0 0.0
      %3990 = vmatmul.mubr.f32.gmra.mrb[0].mxu0 %v3773
      %v3991 = vpop.f32.mrb[0].mxu0
      %v3992 = vadd.f32 0.0, %v3991
      %v3993 = vpop.f32.mrb[0].mxu0
      %3994 = vmatprep.mubr.f32.mxu0 0.0
      %3995 = vmatmul.mubr.f32.gmra.mrb[0].mxu0 %v3776
      %v3996 = vpop.f32.mrb[0].mxu0
      %v3997 = vadd.f32 0.0, %v3996
      %v3998 = vpop.f32.mrb[0].mxu0
      %3999 = vmatprep.mubr.f32.mxu0 0.0
      %4000 = vmatmul.mubr.f32.gmra.mrb[0].mxu0 %v3779
      %v4001 = vpop.f32.mrb[0].mxu0
      %v4002 = vadd.f32 0.0, %v4001
      %v4003 = vpop.f32.mrb[0].mxu0
      %4004 = vmatprep.mubr.f32.mxu0 0.0
      %4005 = vmatmul.mubr.f32.gmra.mrb[0].mxu0 %v3782
      %v4006 = vpop.f32.mrb[0].mxu0
      %v4007 = vadd.f32 0.0, %v4006
      %v4008 = vpop.f32.mrb[0].mxu0
      %4009 = vmatprep.mubr.f32.mxu0 0.0
      %4010 = vmatmul.mubr.f32.gmra.mrb[0].mxu0 %v3785
      %v4011 = vpop.f32.mrb[0].mxu0
      %v4012 = vadd.f32 0.0, %v4011
      %v4013 = vpop.f32.mrb[0].mxu0
      %4014 = vmatprep.mubr.f32.mxu0 0.0
      %4015 = vmatmul.mubr.f32.gmra.mrb[0].mxu0 %v3788
      %v4016 = vpop.f32.mrb[0].mxu0
      %v4017 = vadd.f32 0.0, %v4016
      %v4018 = vpop.f32.mrb[0].mxu0
      %4019 = vmatprep.mubr.f32.mxu0 0.0
      %4020 = vmatmul.mubr.f32.gmra.mrb[0].mxu0 %v3791
      %v4021 = vpop.f32.mrb[0].mxu0
      %v4022 = vadd.f32 0.0, %v4021
      %v4023 = vpop.f32.mrb[0].mxu0
      %4024 = vmatprep.mubr.f32.mxu0 0.0
      %4025 = vmatmul.mubr.f32.gmra.mrb[0].mxu0 %v3794
      %v4026 = vpop.f32.mrb[0].mxu0
      %v4027 = vadd.f32 0.0, %v4026
      %v4028 = vpop.f32.mrb[0].mxu0
      %4029 = vmatprep.mubr.f32.mxu0 0.0
      %4030 = vmatmul.mubr.f32.gmra.mrb[0].mxu0 %v3797
      %v4031 = vpop.f32.mrb[0].mxu0
      %v4032 = vadd.f32 0.0, %v4031
      %v4033 = vpop.f32.mrb[0].mxu0
      %4034 = vmatprep.mubr.f32.mxu0 0.0
      %4035 = vmatmul.mubr.f32.gmra.mrb[0].mxu0 %v3800
      %v4036 = vpop.f32.mrb[0].mxu0
      %v4037 = vadd.f32 0.0, %v4036
      %v4038 = vpop.f32.mrb[0].mxu0
      %4039 = vmatprep.mubr.f32.mxu0 0.0
      %4040 = vmatmul.mubr.f32.gmra.mrb[0].mxu0 %v3803
      %v4041 = vpop.f32.mrb[0].mxu0
      %v4042 = vadd.f32 0.0, %v4041
      %v4043 = vpop.f32.mrb[0].mxu0
      %4044 = vmatprep.mubr.f32.mxu0 0.0
      %4045 = vmatmul.mubr.f32.gmra.mrb[0].mxu0 %v3806
      %v4046 = vpop.f32.mrb[0].mxu0
      %v4047 = vadd.f32 0.0, %v4046
      %v4048 = vpop.f32.mrb[0].mxu0
      %4049 = vmatprep.mubr.f32.mxu0 0.0
      %4050 = vmatmul.mubr.f32.gmra.mrb[0].mxu0 %v3809
      %v4051 = vpop.f32.mrb[0].mxu0
      %v4052 = vadd.f32 0.0, %v4051
      %v4053 = vpop.f32.mrb[0].mxu0
      %4054 = vmatprep.mubr.f32.mxu0 0.0
      %4055 = vmatmul.mubr.f32.gmra.mrb[0].mxu0 %v3812
      %v4056 = vpop.f32.mrb[0].mxu0
      %v4057 = vadd.f32 0.0, %v4056
      %v4058 = vpop.f32.mrb[0].mxu0
      %4059 = vmatprep.mubr.f32.mxu0 0.0
      %4060 = vmatmul.mubr.f32.gmra.mrb[0].mxu0 %v3815
      %v4061 = vpop.f32.mrb[0].mxu0
      %v4062 = vadd.f32 0.0, %v4061
      %v4063 = vpop.f32.mrb[0].mxu0
      %4064 = vmatprep.mubr.f32.mxu0 0.0
      %4065 = vmatmul.mubr.f32.gmra.mrb[0].mxu0 %v3818
      %v4066 = vpop.f32.mrb[0].mxu0
      %v4067 = vadd.f32 0.0, %v4066
      %v4068 = vpop.f32.mrb[0].mxu0
      %4069 = vmatprep.mubr.f32.mxu0 0.0
      %4070 = vmatmul.mubr.f32.gmra.mrb[0].mxu0 %v3821
      %v4071 = vpop.f32.mrb[0].mxu0
      %v4072 = vadd.f32 0.0, %v4071
      %v4073 = vpop.f32.mrb[0].mxu0
      %4074 = vmatprep.mubr.f32.mxu0 0.0
      %4075 = vmatmul.mubr.f32.gmra.mrb[0].mxu0 %v3824
      %v4076 = vpop.f32.mrb[0].mxu0
      %v4077 = vadd.f32 0.0, %v4076
      %v4078 = vpop.f32.mrb[0].mxu0
      %4079 = vmatprep.mubr.f32.mxu0 0.0
      %4080 = vmatmul.mubr.f32.gmra.mrb[0].mxu0 %v3827
      %v4081 = vpop.f32.mrb[0].mxu0
      %v4082 = vadd.f32 0.0, %v4081
      %v4083 = vpop.f32.mrb[0].mxu0
      %4084 = vmatprep.mubr.f32.mxu0 0.0
      %4085 = vmatmul.mubr.f32.gmra.mrb[0].mxu0 %v3830
      %v4086 = vpop.f32.mrb[0].mxu0
      %v4087 = vadd.f32 0.0, %v4086
      %v4088 = vpop.f32.mrb[0].mxu0
      %4089 = vmatprep.mubr.f32.mxu0 0.0
      %4090 = vmatmul.mubr.f32.gmra.mrb[0].mxu0 %v3833
      %v4091 = vpop.f32.mrb[0].mxu0
      %v4092 = vadd.f32 0.0, %v4091
      %v4093 = vpop.f32.mrb[0].mxu0
      %4094 = vmatprep.mubr.f32.mxu0 0.0
      %4095 = vmatmul.mubr.f32.gmra.mrb[0].mxu0 %v3836
      %v4096 = vpop.f32.mrb[0].mxu0
      %v4097 = vadd.f32 0.0, %v4096
      %v4098 = vpop.f32.mrb[0].mxu0
      %4099 = vmatprep.mubr.f32.mxu0 0.0
      %4100 = vmatmul.mubr.f32.gmra.mrb[0].mxu0 %v3839
      %v4101 = vpop.f32.mrb[0].mxu0
      %v4102 = vadd.f32 0.0, %v4101
      %v4103 = vpop.f32.mrb[0].mxu0
      %4104 = vmatprep.mubr.f32.mxu0 0.0
      %4105 = vmatmul.mubr.f32.gmra.mrb[0].mxu0 %v3842
      %v4106 = vpop.f32.mrb[0].mxu0
      %v4107 = vadd.f32 0.0, %v4106
      %v4108 = vpop.f32.mrb[0].mxu0
      %4109 = vmatprep.mubr.f32.mxu0 0.0
      %4110 = vmatmul.mubr.f32.gmra.mrb[0].mxu0 %v3845
      %v4111 = vpop.f32.mrb[0].mxu0
      %v4112 = vadd.f32 0.0, %v4111
      %v4113 = vpop.f32.mrb[0].mxu0
      %4114 = vmatprep.mubr.f32.mxu0 0.0
      %4115 = vmatmul.mubr.f32.gmra.mrb[0].mxu0 %v3848
      %v4116 = vpop.f32.mrb[0].mxu0
      %v4117 = vadd.f32 0.0, %v4116
      %v4118 = vpop.f32.mrb[0].mxu0
      %4119 = vdwg.mxu0
      %v4120 = vadd.f32 %v3642, %v3917
      %v4121 = vadd.f32 %v3643, %v3922
      %v4122 = vadd.f32 %v3644, %v3927
      %v4123 = vadd.f32 %v3645, %v3932
      %v4124 = vadd.f32 %v3646, %v3937
      %v4125 = vadd.f32 %v3647, %v3942
      %v4126 = vadd.f32 %v3648, %v3947
      %v4127 = vadd.f32 %v3649, %v3952
      %v4128 = vadd.f32 %v3650, %v3957
      %v4129 = vadd.f32 %v3651, %v3962
      %v4130 = vadd.f32 %v3652, %v3967
      %v4131 = vadd.f32 %v3653, %v3972
      %v4132 = vadd.f32 %v3654, %v3977
      %v4133 = vadd.f32 %v3655, %v3982
      %v4134 = vadd.f32 %v3656, %v3987
      %v4135 = vadd.f32 %v3657, %v3992
      %v4136 = vadd.f32 %v3658, %v3997
      %v4137 = vadd.f32 %v3659, %v4002
      %v4138 = vadd.f32 %v3660, %v4007
      %v4139 = vadd.f32 %v3661, %v4012
      %v4140 = vadd.f32 %v3662, %v4017
      %v4141 = vadd.f32 %v3663, %v4022
      %v4142 = vadd.f32 %v3664, %v4027
      %v4143 = vadd.f32 %v3665, %v4032
      %v4144 = vadd.f32 %v3666, %v4037
      %v4145 = vadd.f32 %v3667, %v4042
      %v4146 = vadd.f32 %v3668, %v4047
      %v4147 = vadd.f32 %v3669, %v4052
      %v4148 = vadd.f32 %v3670, %v4057
      %v4149 = vadd.f32 %v3671, %v4062
      %v4150 = vadd.f32 %v3672, %v4067
      %v4151 = vadd.f32 %v3673, %v4072
      %v4152 = vadd.f32 %v3674, %v4077
      %v4153 = vadd.f32 %v3675, %v4082
      %v4154 = vadd.f32 %v3676, %v4087
      %v4155 = vadd.f32 %v3677, %v4092
      %v4156 = vadd.f32 %v3678, %v4097
      %v4157 = vadd.f32 %v3679, %v4102
      %v4158 = vadd.f32 %v3680, %v4107
      %v4159 = vadd.f32 %v3681, %v4112
      %v4160 = vadd.f32 %v3682, %v4117
      %v4161 = vld [vmem:[#allocation2 + $0x2a] sm:$0xff]
      %v4162 = vld [vmem:[#allocation2 + $0x32] sm:$0xff]
      %v4163 = vld [vmem:[#allocation2 + $0x3a] sm:$0xff]
      %v4164 = vld [vmem:[#allocation2 + $0x42] sm:$0xff]
      %v4165 = vld [vmem:[#allocation2 + $0x4a] sm:$0xff]
      %v4166 = vld [vmem:[#allocation2 + $0x52] sm:$0xff]
      %v4167 = vld [vmem:[#allocation2 + $0x5a] sm:$0xff]
      %v4168 = vld [vmem:[#allocation2 + $0x62] sm:$0xff]
      %v4169 = vld [vmem:[#allocation2 + $0x6a] sm:$0xff]
      %v4170 = vld [vmem:[#allocation2 + $0x72] sm:$0xff]
      %v4171 = vld [vmem:[#allocation2 + $0x7a] sm:$0xff]
      %v4172 = vld [vmem:[#allocation2 + $0x82] sm:$0xff]
      %v4173 = vld [vmem:[#allocation2 + $0x8a] sm:$0xff]
      %v4174 = vld [vmem:[#allocation2 + $0x92] sm:$0xff]
      %v4175 = vld [vmem:[#allocation2 + $0x9a] sm:$0xff]
      %v4176 = vld [vmem:[#allocation2 + $0xa2] sm:$0xff]
      %v4177 = vld [vmem:[#allocation2 + $0xaa] sm:$0xff]
      %v4178 = vld [vmem:[#allocation2 + $0xb2] sm:$0xff]
      %v4179 = vld [vmem:[#allocation2 + $0xba] sm:$0xff]
      %v4180 = vld [vmem:[#allocation2 + $0xc2] sm:$0xff]
      %v4181 = vld [vmem:[#allocation2 + $0xca] sm:$0xff]
      %v4182 = vld [vmem:[#allocation2 + $0xd2] sm:$0xff]
      %v4183 = vld [vmem:[#allocation2 + $0xda] sm:$0xff]
      %v4184 = vld [vmem:[#allocation2 + $0xe2] sm:$0xff]
      %v4185 = vld [vmem:[#allocation2 + $0xea] sm:$0xff]
      %v4186 = vld [vmem:[#allocation2 + $0xf2] sm:$0xff]
      %v4187 = vld [vmem:[#allocation2 + $0xfa] sm:$0xff]
      %v4188 = vld [vmem:[#allocation2 + $0x102] sm:$0xff]
      %v4189 = vld [vmem:[#allocation2 + $0x10a] sm:$0xff]
      %v4190 = vld [vmem:[#allocation2 + $0x112] sm:$0xff]
      %v4191 = vld [vmem:[#allocation2 + $0x11a] sm:$0xff]
      %v4192 = vld [vmem:[#allocation2 + $0x122] sm:$0xff]
      %v4193 = vld [vmem:[#allocation2 + $0x12a] sm:$0xff]
      %v4194 = vld [vmem:[#allocation2 + $0x132] sm:$0xff]
      %v4195 = vld [vmem:[#allocation2 + $0x13a] sm:$0xff]
      %v4196 = vld [vmem:[#allocation2 + $0x142] sm:$0xff]
      %v4197 = vld [vmem:[#allocation2 + $0x14a] sm:$0xff]
      %v4198 = vld [vmem:[#allocation2 + $0x152] sm:$0xff]
      %v4199 = vld [vmem:[#allocation2 + $0x15a] sm:$0xff]
      %v4200 = vld [vmem:[#allocation2 + $0x162] sm:$0xff]
      %v4201 = vld [vmem:[#allocation2 + $0x16a] sm:$0xf]
      %s4202 = scalar_lea.vmem %s3, 112
      %v4203 = vld [vmem:[%s4202] sm:$0xff]
      %v4204 = vld [vmem:[%s4202 + $0x8] sm:$0xff]
      %v4206 = vsel %vm760, %v4161, 0
      %v4209 = vsel %vm760, %v4162, 0
      %v4212 = vsel %vm760, %v4163, 0
      %v4215 = vsel %vm760, %v4164, 0
      %v4218 = vsel %vm760, %v4165, 0
      %v4221 = vsel %vm760, %v4166, 0
      %v4224 = vsel %vm760, %v4167, 0
      %v4227 = vsel %vm760, %v4168, 0
      %v4230 = vsel %vm760, %v4169, 0
      %v4233 = vsel %vm760, %v4170, 0
      %v4236 = vsel %vm760, %v4171, 0
      %v4239 = vsel %vm760, %v4172, 0
      %v4242 = vsel %vm760, %v4173, 0
      %v4245 = vsel %vm760, %v4174, 0
      %v4248 = vsel %vm760, %v4175, 0
      %v4251 = vsel %vm760, %v4176, 0
      %v4254 = vsel %vm760, %v4177, 0
      %v4257 = vsel %vm760, %v4178, 0
      %v4260 = vsel %vm760, %v4179, 0
      %v4263 = vsel %vm760, %v4180, 0
      %v4266 = vsel %vm760, %v4181, 0
      %v4269 = vsel %vm760, %v4182, 0
      %v4272 = vsel %vm760, %v4183, 0
      %v4275 = vsel %vm760, %v4184, 0
      %v4278 = vsel %vm760, %v4185, 0
      %v4281 = vsel %vm760, %v4186, 0
      %v4284 = vsel %vm760, %v4187, 0
      %v4287 = vsel %vm760, %v4188, 0
      %v4290 = vsel %vm760, %v4189, 0
      %v4293 = vsel %vm760, %v4190, 0
      %v4296 = vsel %vm760, %v4191, 0
      %v4299 = vsel %vm760, %v4192, 0
      %v4302 = vsel %vm760, %v4193, 0
      %v4305 = vsel %vm760, %v4194, 0
      %v4308 = vsel %vm760, %v4195, 0
      %v4311 = vsel %vm760, %v4196, 0
      %v4314 = vsel %vm760, %v4197, 0
      %v4317 = vsel %vm760, %v4198, 0
      %v4320 = vsel %vm760, %v4199, 0
      %v4323 = vsel %vm760, %v4200, 0
      %v4326 = vsel %vm760, %v4201, 0
      %4328 = vmatprep.subr.mxu0 0.0
      %4329 = vmatpush1.msra.mxu0 %v4203
      %4330 = vmatprep.subr.mxu0 0.0
      %4331 = vmatpush1.msra.mxu0 %v4204
      %4332 = vmatprep.subr.mxu0 0.0
      %4333 = vmatpush1.msra.mxu0 0.0
      %4334 = vmatprep.subr.mxu0 0.0
      %4335 = vmatpush1.msra.mxu0 0.0
      %4336 = vmatprep.subr.mxu0 0.0
      %4337 = vmatpush1.msra.mxu0 0.0
      %4338 = vmatprep.subr.mxu0 0.0
      %4339 = vmatpush1.msra.mxu0 0.0
      %4340 = vmatprep.subr.mxu0 0.0
      %4341 = vmatpush1.msra.mxu0 0.0
      %4342 = vmatprep.subr.mxu0 0.0
      %4343 = vmatpush1.msra.mxu0 0.0
      %4344 = vmatprep.subr.mxu0 0.0
      %4345 = vmatpush1.msra.mxu0 0.0
      %4346 = vmatprep.subr.mxu0 0.0
      %4347 = vmatpush1.msra.mxu0 0.0
      %4348 = vmatprep.subr.mxu0 0.0
      %4349 = vmatpush1.msra.mxu0 0.0
      %4350 = vmatprep.subr.mxu0 0.0
      %4351 = vmatpush1.msra.mxu0 0.0
      %4352 = vmatprep.subr.mxu0 0.0
      %4353 = vmatpush1.msra.mxu0 0.0
      %4354 = vmatprep.subr.mxu0 0.0
      %4355 = vmatpush1.msra.mxu0 0.0
      %4356 = vmatprep.subr.mxu0 0.0
      %4357 = vmatpush1.msra.mxu0 0.0
      %4358 = vmatprep.subr.mxu0 0.0
      %4359 = vmatpush1.msra.mxu0 0.0
      %4360 = vmatprep.subr.mxu0 0.0
      %4361 = vmatpush1.msra.mxu0 0.0
      %4362 = vmatprep.subr.mxu0 0.0
      %4363 = vmatpush1.msra.mxu0 0.0
      %4364 = vmatprep.subr.mxu0 0.0
      %4365 = vmatpush1.msra.mxu0 0.0
      %4366 = vmatprep.subr.mxu0 0.0
      %4367 = vmatpush1.msra.mxu0 0.0
      %4368 = vmatprep.subr.mxu0 0.0
      %4369 = vmatpush1.msra.mxu0 0.0
      %4370 = vmatprep.subr.mxu0 0.0
      %4371 = vmatpush1.msra.mxu0 0.0
      %4372 = vmatprep.subr.mxu0 0.0
      %4373 = vmatpush1.msra.mxu0 0.0
      %4374 = vmatprep.subr.mxu0 0.0
      %4375 = vmatpush1.msra.mxu0 0.0
      %4376 = vmatprep.subr.mxu0 0.0
      %4377 = vmatpush1.msra.mxu0 0.0
      %4378 = vmatprep.subr.mxu0 0.0
      %4379 = vmatpush1.msra.mxu0 0.0
      %4380 = vmatprep.subr.mxu0 0.0
      %4381 = vmatpush1.msra.mxu0 0.0
      %4382 = vmatprep.subr.mxu0 0.0
      %4383 = vmatpush1.msra.mxu0 0.0
      %4384 = vmatprep.subr.mxu0 0.0
      %4385 = vmatpush1.msra.mxu0 0.0
      %4386 = vmatprep.subr.mxu0 0.0
      %4387 = vmatpush1.msra.mxu0 0.0
      %4388 = vmatprep.subr.mxu0 0.0
      %4389 = vmatpush1.msra.mxu0 0.0
      %4390 = vmatprep.subr.mxu0 0.0
      %4391 = vmatpush1.msra.mxu0 0.0
      %4392 = vmatprep.mubr.f32.mxu0 0.0
      %4393 = vmatmul.mubr.f32.gmra.mrb[0].mxu0 %v4206
      %v4394 = vpop.f32.mrb[0].mxu0
      %v4395 = vadd.f32 0.0, %v4394
      %v4396 = vpop.f32.mrb[0].mxu0
      %4397 = vmatprep.mubr.f32.mxu0 0.0
      %4398 = vmatmul.mubr.f32.gmra.mrb[0].mxu0 %v4209
      %v4399 = vpop.f32.mrb[0].mxu0
      %v4400 = vadd.f32 0.0, %v4399
      %v4401 = vpop.f32.mrb[0].mxu0
      %4402 = vmatprep.mubr.f32.mxu0 0.0
      %4403 = vmatmul.mubr.f32.gmra.mrb[0].mxu0 %v4212
      %v4404 = vpop.f32.mrb[0].mxu0
      %v4405 = vadd.f32 0.0, %v4404
      %v4406 = vpop.f32.mrb[0].mxu0
      %4407 = vmatprep.mubr.f32.mxu0 0.0
      %4408 = vmatmul.mubr.f32.gmra.mrb[0].mxu0 %v4215
      %v4409 = vpop.f32.mrb[0].mxu0
      %v4410 = vadd.f32 0.0, %v4409
      %v4411 = vpop.f32.mrb[0].mxu0
      %4412 = vmatprep.mubr.f32.mxu0 0.0
      %4413 = vmatmul.mubr.f32.gmra.mrb[0].mxu0 %v4218
      %v4414 = vpop.f32.mrb[0].mxu0
      %v4415 = vadd.f32 0.0, %v4414
      %v4416 = vpop.f32.mrb[0].mxu0
      %4417 = vmatprep.mubr.f32.mxu0 0.0
      %4418 = vmatmul.mubr.f32.gmra.mrb[0].mxu0 %v4221
      %v4419 = vpop.f32.mrb[0].mxu0
      %v4420 = vadd.f32 0.0, %v4419
      %v4421 = vpop.f32.mrb[0].mxu0
      %4422 = vmatprep.mubr.f32.mxu0 0.0
      %4423 = vmatmul.mubr.f32.gmra.mrb[0].mxu0 %v4224
      %v4424 = vpop.f32.mrb[0].mxu0
      %v4425 = vadd.f32 0.0, %v4424
      %v4426 = vpop.f32.mrb[0].mxu0
      %4427 = vmatprep.mubr.f32.mxu0 0.0
      %4428 = vmatmul.mubr.f32.gmra.mrb[0].mxu0 %v4227
      %v4429 = vpop.f32.mrb[0].mxu0
      %v4430 = vadd.f32 0.0, %v4429
      %v4431 = vpop.f32.mrb[0].mxu0
      %4432 = vmatprep.mubr.f32.mxu0 0.0
      %4433 = vmatmul.mubr.f32.gmra.mrb[0].mxu0 %v4230
      %v4434 = vpop.f32.mrb[0].mxu0
      %v4435 = vadd.f32 0.0, %v4434
      %v4436 = vpop.f32.mrb[0].mxu0
      %4437 = vmatprep.mubr.f32.mxu0 0.0
      %4438 = vmatmul.mubr.f32.gmra.mrb[0].mxu0 %v4233
      %v4439 = vpop.f32.mrb[0].mxu0
      %v4440 = vadd.f32 0.0, %v4439
      %v4441 = vpop.f32.mrb[0].mxu0
      %4442 = vmatprep.mubr.f32.mxu0 0.0
      %4443 = vmatmul.mubr.f32.gmra.mrb[0].mxu0 %v4236
      %v4444 = vpop.f32.mrb[0].mxu0
      %v4445 = vadd.f32 0.0, %v4444
      %v4446 = vpop.f32.mrb[0].mxu0
      %4447 = vmatprep.mubr.f32.mxu0 0.0
      %4448 = vmatmul.mubr.f32.gmra.mrb[0].mxu0 %v4239
      %v4449 = vpop.f32.mrb[0].mxu0
      %v4450 = vadd.f32 0.0, %v4449
      %v4451 = vpop.f32.mrb[0].mxu0
      %4452 = vmatprep.mubr.f32.mxu0 0.0
      %4453 = vmatmul.mubr.f32.gmra.mrb[0].mxu0 %v4242
      %v4454 = vpop.f32.mrb[0].mxu0
      %v4455 = vadd.f32 0.0, %v4454
      %v4456 = vpop.f32.mrb[0].mxu0
      %4457 = vmatprep.mubr.f32.mxu0 0.0
      %4458 = vmatmul.mubr.f32.gmra.mrb[0].mxu0 %v4245
      %v4459 = vpop.f32.mrb[0].mxu0
      %v4460 = vadd.f32 0.0, %v4459
      %v4461 = vpop.f32.mrb[0].mxu0
      %4462 = vmatprep.mubr.f32.mxu0 0.0
      %4463 = vmatmul.mubr.f32.gmra.mrb[0].mxu0 %v4248
      %v4464 = vpop.f32.mrb[0].mxu0
      %v4465 = vadd.f32 0.0, %v4464
      %v4466 = vpop.f32.mrb[0].mxu0
      %4467 = vmatprep.mubr.f32.mxu0 0.0
      %4468 = vmatmul.mubr.f32.gmra.mrb[0].mxu0 %v4251
      %v4469 = vpop.f32.mrb[0].mxu0
      %v4470 = vadd.f32 0.0, %v4469
      %v4471 = vpop.f32.mrb[0].mxu0
      %4472 = vmatprep.mubr.f32.mxu0 0.0
      %4473 = vmatmul.mubr.f32.gmra.mrb[0].mxu0 %v4254
      %v4474 = vpop.f32.mrb[0].mxu0
      %v4475 = vadd.f32 0.0, %v4474
      %v4476 = vpop.f32.mrb[0].mxu0
      %4477 = vmatprep.mubr.f32.mxu0 0.0
      %4478 = vmatmul.mubr.f32.gmra.mrb[0].mxu0 %v4257
      %v4479 = vpop.f32.mrb[0].mxu0
      %v4480 = vadd.f32 0.0, %v4479
      %v4481 = vpop.f32.mrb[0].mxu0
      %4482 = vmatprep.mubr.f32.mxu0 0.0
      %4483 = vmatmul.mubr.f32.gmra.mrb[0].mxu0 %v4260
      %v4484 = vpop.f32.mrb[0].mxu0
      %v4485 = vadd.f32 0.0, %v4484
      %v4486 = vpop.f32.mrb[0].mxu0
      %4487 = vmatprep.mubr.f32.mxu0 0.0
      %4488 = vmatmul.mubr.f32.gmra.mrb[0].mxu0 %v4263
      %v4489 = vpop.f32.mrb[0].mxu0
      %v4490 = vadd.f32 0.0, %v4489
      %v4491 = vpop.f32.mrb[0].mxu0
      %4492 = vmatprep.mubr.f32.mxu0 0.0
      %4493 = vmatmul.mubr.f32.gmra.mrb[0].mxu0 %v4266
      %v4494 = vpop.f32.mrb[0].mxu0
      %v4495 = vadd.f32 0.0, %v4494
      %v4496 = vpop.f32.mrb[0].mxu0
      %4497 = vmatprep.mubr.f32.mxu0 0.0
      %4498 = vmatmul.mubr.f32.gmra.mrb[0].mxu0 %v4269
      %v4499 = vpop.f32.mrb[0].mxu0
      %v4500 = vadd.f32 0.0, %v4499
      %v4501 = vpop.f32.mrb[0].mxu0
      %4502 = vmatprep.mubr.f32.mxu0 0.0
      %4503 = vmatmul.mubr.f32.gmra.mrb[0].mxu0 %v4272
      %v4504 = vpop.f32.mrb[0].mxu0
      %v4505 = vadd.f32 0.0, %v4504
      %v4506 = vpop.f32.mrb[0].mxu0
      %4507 = vmatprep.mubr.f32.mxu0 0.0
      %4508 = vmatmul.mubr.f32.gmra.mrb[0].mxu0 %v4275
      %v4509 = vpop.f32.mrb[0].mxu0
      %v4510 = vadd.f32 0.0, %v4509
      %v4511 = vpop.f32.mrb[0].mxu0
      %4512 = vmatprep.mubr.f32.mxu0 0.0
      %4513 = vmatmul.mubr.f32.gmra.mrb[0].mxu0 %v4278
      %v4514 = vpop.f32.mrb[0].mxu0
      %v4515 = vadd.f32 0.0, %v4514
      %v4516 = vpop.f32.mrb[0].mxu0
      %4517 = vmatprep.mubr.f32.mxu0 0.0
      %4518 = vmatmul.mubr.f32.gmra.mrb[0].mxu0 %v4281
      %v4519 = vpop.f32.mrb[0].mxu0
      %v4520 = vadd.f32 0.0, %v4519
      %v4521 = vpop.f32.mrb[0].mxu0
      %4522 = vmatprep.mubr.f32.mxu0 0.0
      %4523 = vmatmul.mubr.f32.gmra.mrb[0].mxu0 %v4284
      %v4524 = vpop.f32.mrb[0].mxu0
      %v4525 = vadd.f32 0.0, %v4524
      %v4526 = vpop.f32.mrb[0].mxu0
      %4527 = vmatprep.mubr.f32.mxu0 0.0
      %4528 = vmatmul.mubr.f32.gmra.mrb[0].mxu0 %v4287
      %v4529 = vpop.f32.mrb[0].mxu0
      %v4530 = vadd.f32 0.0, %v4529
      %v4531 = vpop.f32.mrb[0].mxu0
      %4532 = vmatprep.mubr.f32.mxu0 0.0
      %4533 = vmatmul.mubr.f32.gmra.mrb[0].mxu0 %v4290
      %v4534 = vpop.f32.mrb[0].mxu0
      %v4535 = vadd.f32 0.0, %v4534
      %v4536 = vpop.f32.mrb[0].mxu0
      %4537 = vmatprep.mubr.f32.mxu0 0.0
      %4538 = vmatmul.mubr.f32.gmra.mrb[0].mxu0 %v4293
      %v4539 = vpop.f32.mrb[0].mxu0
      %v4540 = vadd.f32 0.0, %v4539
      %v4541 = vpop.f32.mrb[0].mxu0
      %4542 = vmatprep.mubr.f32.mxu0 0.0
      %4543 = vmatmul.mubr.f32.gmra.mrb[0].mxu0 %v4296
      %v4544 = vpop.f32.mrb[0].mxu0
      %v4545 = vadd.f32 0.0, %v4544
      %v4546 = vpop.f32.mrb[0].mxu0
      %4547 = vmatprep.mubr.f32.mxu0 0.0
      %4548 = vmatmul.mubr.f32.gmra.mrb[0].mxu0 %v4299
      %v4549 = vpop.f32.mrb[0].mxu0
      %v4550 = vadd.f32 0.0, %v4549
      %v4551 = vpop.f32.mrb[0].mxu0
      %4552 = vmatprep.mubr.f32.mxu0 0.0
      %4553 = vmatmul.mubr.f32.gmra.mrb[0].mxu0 %v4302
      %v4554 = vpop.f32.mrb[0].mxu0
      %v4555 = vadd.f32 0.0, %v4554
      %v4556 = vpop.f32.mrb[0].mxu0
      %4557 = vmatprep.mubr.f32.mxu0 0.0
      %4558 = vmatmul.mubr.f32.gmra.mrb[0].mxu0 %v4305
      %v4559 = vpop.f32.mrb[0].mxu0
      %v4560 = vadd.f32 0.0, %v4559
      %v4561 = vpop.f32.mrb[0].mxu0
      %4562 = vmatprep.mubr.f32.mxu0 0.0
      %4563 = vmatmul.mubr.f32.gmra.mrb[0].mxu0 %v4308
      %v4564 = vpop.f32.mrb[0].mxu0
      %v4565 = vadd.f32 0.0, %v4564
      %v4566 = vpop.f32.mrb[0].mxu0
      %4567 = vmatprep.mubr.f32.mxu0 0.0
      %4568 = vmatmul.mubr.f32.gmra.mrb[0].mxu0 %v4311
      %v4569 = vpop.f32.mrb[0].mxu0
      %v4570 = vadd.f32 0.0, %v4569
      %v4571 = vpop.f32.mrb[0].mxu0
      %4572 = vmatprep.mubr.f32.mxu0 0.0
      %4573 = vmatmul.mubr.f32.gmra.mrb[0].mxu0 %v4314
      %v4574 = vpop.f32.mrb[0].mxu0
      %v4575 = vadd.f32 0.0, %v4574
      %v4576 = vpop.f32.mrb[0].mxu0
      %4577 = vmatprep.mubr.f32.mxu0 0.0
      %4578 = vmatmul.mubr.f32.gmra.mrb[0].mxu0 %v4317
      %v4579 = vpop.f32.mrb[0].mxu0
      %v4580 = vadd.f32 0.0, %v4579
      %v4581 = vpop.f32.mrb[0].mxu0
      %4582 = vmatprep.mubr.f32.mxu0 0.0
      %4583 = vmatmul.mubr.f32.gmra.mrb[0].mxu0 %v4320
      %v4584 = vpop.f32.mrb[0].mxu0
      %v4585 = vadd.f32 0.0, %v4584
      %v4586 = vpop.f32.mrb[0].mxu0
      %4587 = vmatprep.mubr.f32.mxu0 0.0
      %4588 = vmatmul.mubr.f32.gmra.mrb[0].mxu0 %v4323
      %v4589 = vpop.f32.mrb[0].mxu0
      %v4590 = vadd.f32 0.0, %v4589
      %v4591 = vpop.f32.mrb[0].mxu0
      %4592 = vmatprep.mubr.f32.mxu0 0.0
      %4593 = vmatmul.mubr.f32.gmra.mrb[0].mxu0 %v4326
      %v4594 = vpop.f32.mrb[0].mxu0
      %v4595 = vadd.f32 0.0, %v4594
      %v4596 = vpop.f32.mrb[0].mxu0
      %4597 = vdwg.mxu0
      %v4598 = vadd.f32 %v4120, %v4395
      %v4599 = vadd.f32 %v4121, %v4400
      %v4600 = vadd.f32 %v4122, %v4405
      %v4601 = vadd.f32 %v4123, %v4410
      %v4602 = vadd.f32 %v4124, %v4415
      %v4603 = vadd.f32 %v4125, %v4420
      %v4604 = vadd.f32 %v4126, %v4425
      %v4605 = vadd.f32 %v4127, %v4430
      %v4606 = vadd.f32 %v4128, %v4435
      %v4607 = vadd.f32 %v4129, %v4440
      %v4608 = vadd.f32 %v4130, %v4445
      %v4609 = vadd.f32 %v4131, %v4450
      %v4610 = vadd.f32 %v4132, %v4455
      %v4611 = vadd.f32 %v4133, %v4460
      %v4612 = vadd.f32 %v4134, %v4465
      %v4613 = vadd.f32 %v4135, %v4470
      %v4614 = vadd.f32 %v4136, %v4475
      %v4615 = vadd.f32 %v4137, %v4480
      %v4616 = vadd.f32 %v4138, %v4485
      %v4617 = vadd.f32 %v4139, %v4490
      %v4618 = vadd.f32 %v4140, %v4495
      %v4619 = vadd.f32 %v4141, %v4500
      %v4620 = vadd.f32 %v4142, %v4505
      %v4621 = vadd.f32 %v4143, %v4510
      %v4622 = vadd.f32 %v4144, %v4515
      %v4623 = vadd.f32 %v4145, %v4520
      %v4624 = vadd.f32 %v4146, %v4525
      %v4625 = vadd.f32 %v4147, %v4530
      %v4626 = vadd.f32 %v4148, %v4535
      %v4627 = vadd.f32 %v4149, %v4540
      %v4628 = vadd.f32 %v4150, %v4545
      %v4629 = vadd.f32 %v4151, %v4550
      %v4630 = vadd.f32 %v4152, %v4555
      %v4631 = vadd.f32 %v4153, %v4560
      %v4632 = vadd.f32 %v4154, %v4565
      %v4633 = vadd.f32 %v4155, %v4570
      %v4634 = vadd.f32 %v4156, %v4575
      %v4635 = vadd.f32 %v4157, %v4580
      %v4636 = vadd.f32 %v4158, %v4585
      %v4637 = vadd.f32 %v4159, %v4590
      %v4638 = vadd.f32 %v4160, %v4595
      %v4639 = vld [vmem:[#allocation2 + $0x2b] sm:$0xff]
      %v4640 = vld [vmem:[#allocation2 + $0x33] sm:$0xff]
      %v4641 = vld [vmem:[#allocation2 + $0x3b] sm:$0xff]
      %v4642 = vld [vmem:[#allocation2 + $0x43] sm:$0xff]
      %v4643 = vld [vmem:[#allocation2 + $0x4b] sm:$0xff]
      %v4644 = vld [vmem:[#allocation2 + $0x53] sm:$0xff]
      %v4645 = vld [vmem:[#allocation2 + $0x5b] sm:$0xff]
      %v4646 = vld [vmem:[#allocation2 + $0x63] sm:$0xff]
      %v4647 = vld [vmem:[#allocation2 + $0x6b] sm:$0xff]
      %v4648 = vld [vmem:[#allocation2 + $0x73] sm:$0xff]
      %v4649 = vld [vmem:[#allocation2 + $0x7b] sm:$0xff]
      %v4650 = vld [vmem:[#allocation2 + $0x83] sm:$0xff]
      %v4651 = vld [vmem:[#allocation2 + $0x8b] sm:$0xff]
      %v4652 = vld [vmem:[#allocation2 + $0x93] sm:$0xff]
      %v4653 = vld [vmem:[#allocation2 + $0x9b] sm:$0xff]
      %v4654 = vld [vmem:[#allocation2 + $0xa3] sm:$0xff]
      %v4655 = vld [vmem:[#allocation2 + $0xab] sm:$0xff]
      %v4656 = vld [vmem:[#allocation2 + $0xb3] sm:$0xff]
      %v4657 = vld [vmem:[#allocation2 + $0xbb] sm:$0xff]
      %v4658 = vld [vmem:[#allocation2 + $0xc3] sm:$0xff]
      %v4659 = vld [vmem:[#allocation2 + $0xcb] sm:$0xff]
      %v4660 = vld [vmem:[#allocation2 + $0xd3] sm:$0xff]
      %v4661 = vld [vmem:[#allocation2 + $0xdb] sm:$0xff]
      %v4662 = vld [vmem:[#allocation2 + $0xe3] sm:$0xff]
      %v4663 = vld [vmem:[#allocation2 + $0xeb] sm:$0xff]
      %v4664 = vld [vmem:[#allocation2 + $0xf3] sm:$0xff]
      %v4665 = vld [vmem:[#allocation2 + $0xfb] sm:$0xff]
      %v4666 = vld [vmem:[#allocation2 + $0x103] sm:$0xff]
      %v4667 = vld [vmem:[#allocation2 + $0x10b] sm:$0xff]
      %v4668 = vld [vmem:[#allocation2 + $0x113] sm:$0xff]
      %v4669 = vld [vmem:[#allocation2 + $0x11b] sm:$0xff]
      %v4670 = vld [vmem:[#allocation2 + $0x123] sm:$0xff]
      %v4671 = vld [vmem:[#allocation2 + $0x12b] sm:$0xff]
      %v4672 = vld [vmem:[#allocation2 + $0x133] sm:$0xff]
      %v4673 = vld [vmem:[#allocation2 + $0x13b] sm:$0xff]
      %v4674 = vld [vmem:[#allocation2 + $0x143] sm:$0xff]
      %v4675 = vld [vmem:[#allocation2 + $0x14b] sm:$0xff]
      %v4676 = vld [vmem:[#allocation2 + $0x153] sm:$0xff]
      %v4677 = vld [vmem:[#allocation2 + $0x15b] sm:$0xff]
      %v4678 = vld [vmem:[#allocation2 + $0x163] sm:$0xff]
      %v4679 = vld [vmem:[#allocation2 + $0x16b] sm:$0xf]
      %s4680 = scalar_lea.vmem %s3, 128
      %v4681 = vld [vmem:[%s4680] sm:$0xff]
      %v4682 = vld [vmem:[%s4680 + $0x8] sm:$0xff]
      %v4684 = vsel %vm760, %v4639, 0
      %v4687 = vsel %vm760, %v4640, 0
      %v4690 = vsel %vm760, %v4641, 0
      %v4693 = vsel %vm760, %v4642, 0
      %v4696 = vsel %vm760, %v4643, 0
      %v4699 = vsel %vm760, %v4644, 0
      %v4702 = vsel %vm760, %v4645, 0
      %v4705 = vsel %vm760, %v4646, 0
      %v4708 = vsel %vm760, %v4647, 0
      %v4711 = vsel %vm760, %v4648, 0
      %v4714 = vsel %vm760, %v4649, 0
      %v4717 = vsel %vm760, %v4650, 0
      %v4720 = vsel %vm760, %v4651, 0
      %v4723 = vsel %vm760, %v4652, 0
      %v4726 = vsel %vm760, %v4653, 0
      %v4729 = vsel %vm760, %v4654, 0
      %v4732 = vsel %vm760, %v4655, 0
      %v4735 = vsel %vm760, %v4656, 0
      %v4738 = vsel %vm760, %v4657, 0
      %v4741 = vsel %vm760, %v4658, 0
      %v4744 = vsel %vm760, %v4659, 0
      %v4747 = vsel %vm760, %v4660, 0
      %v4750 = vsel %vm760, %v4661, 0
      %v4753 = vsel %vm760, %v4662, 0
      %v4756 = vsel %vm760, %v4663, 0
      %v4759 = vsel %vm760, %v4664, 0
      %v4762 = vsel %vm760, %v4665, 0
      %v4765 = vsel %vm760, %v4666, 0
      %v4768 = vsel %vm760, %v4667, 0
      %v4771 = vsel %vm760, %v4668, 0
      %v4774 = vsel %vm760, %v4669, 0
      %v4777 = vsel %vm760, %v4670, 0
      %v4780 = vsel %vm760, %v4671, 0
      %v4783 = vsel %vm760, %v4672, 0
      %v4786 = vsel %vm760, %v4673, 0
      %v4789 = vsel %vm760, %v4674, 0
      %v4792 = vsel %vm760, %v4675, 0
      %v4795 = vsel %vm760, %v4676, 0
      %v4798 = vsel %vm760, %v4677, 0
      %v4801 = vsel %vm760, %v4678, 0
      %v4804 = vsel %vm760, %v4679, 0
      %4806 = vmatprep.subr.mxu0 0.0
      %4807 = vmatpush1.msra.mxu0 %v4681
      %4808 = vmatprep.subr.mxu0 0.0
      %4809 = vmatpush1.msra.mxu0 %v4682
      %4810 = vmatprep.subr.mxu0 0.0
      %4811 = vmatpush1.msra.mxu0 0.0
      %4812 = vmatprep.subr.mxu0 0.0
      %4813 = vmatpush1.msra.mxu0 0.0
      %4814 = vmatprep.subr.mxu0 0.0
      %4815 = vmatpush1.msra.mxu0 0.0
      %4816 = vmatprep.subr.mxu0 0.0
      %4817 = vmatpush1.msra.mxu0 0.0
      %4818 = vmatprep.subr.mxu0 0.0
      %4819 = vmatpush1.msra.mxu0 0.0
      %4820 = vmatprep.subr.mxu0 0.0
      %4821 = vmatpush1.msra.mxu0 0.0
      %4822 = vmatprep.subr.mxu0 0.0
      %4823 = vmatpush1.msra.mxu0 0.0
      %4824 = vmatprep.subr.mxu0 0.0
      %4825 = vmatpush1.msra.mxu0 0.0
      %4826 = vmatprep.subr.mxu0 0.0
      %4827 = vmatpush1.msra.mxu0 0.0
      %4828 = vmatprep.subr.mxu0 0.0
      %4829 = vmatpush1.msra.mxu0 0.0
      %4830 = vmatprep.subr.mxu0 0.0
      %4831 = vmatpush1.msra.mxu0 0.0
      %4832 = vmatprep.subr.mxu0 0.0
      %4833 = vmatpush1.msra.mxu0 0.0
      %4834 = vmatprep.subr.mxu0 0.0
      %4835 = vmatpush1.msra.mxu0 0.0
      %4836 = vmatprep.subr.mxu0 0.0
      %4837 = vmatpush1.msra.mxu0 0.0
      %4838 = vmatprep.subr.mxu0 0.0
      %4839 = vmatpush1.msra.mxu0 0.0
      %4840 = vmatprep.subr.mxu0 0.0
      %4841 = vmatpush1.msra.mxu0 0.0
      %4842 = vmatprep.subr.mxu0 0.0
      %4843 = vmatpush1.msra.mxu0 0.0
      %4844 = vmatprep.subr.mxu0 0.0
      %4845 = vmatpush1.msra.mxu0 0.0
      %4846 = vmatprep.subr.mxu0 0.0
      %4847 = vmatpush1.msra.mxu0 0.0
      %4848 = vmatprep.subr.mxu0 0.0
      %4849 = vmatpush1.msra.mxu0 0.0
      %4850 = vmatprep.subr.mxu0 0.0
      %4851 = vmatpush1.msra.mxu0 0.0
      %4852 = vmatprep.subr.mxu0 0.0
      %4853 = vmatpush1.msra.mxu0 0.0
      %4854 = vmatprep.subr.mxu0 0.0
      %4855 = vmatpush1.msra.mxu0 0.0
      %4856 = vmatprep.subr.mxu0 0.0
      %4857 = vmatpush1.msra.mxu0 0.0
      %4858 = vmatprep.subr.mxu0 0.0
      %4859 = vmatpush1.msra.mxu0 0.0
      %4860 = vmatprep.subr.mxu0 0.0
      %4861 = vmatpush1.msra.mxu0 0.0
      %4862 = vmatprep.subr.mxu0 0.0
      %4863 = vmatpush1.msra.mxu0 0.0
      %4864 = vmatprep.subr.mxu0 0.0
      %4865 = vmatpush1.msra.mxu0 0.0
      %4866 = vmatprep.subr.mxu0 0.0
      %4867 = vmatpush1.msra.mxu0 0.0
      %4868 = vmatprep.subr.mxu0 0.0
      %4869 = vmatpush1.msra.mxu0 0.0
      %4870 = vmatprep.mubr.f32.mxu0 0.0
      %4871 = vmatmul.mubr.f32.gmra.mrb[0].mxu0 %v4684
      %v4872 = vpop.f32.mrb[0].mxu0
      %v4873 = vadd.f32 0.0, %v4872
      %v4874 = vpop.f32.mrb[0].mxu0
      %4875 = vmatprep.mubr.f32.mxu0 0.0
      %4876 = vmatmul.mubr.f32.gmra.mrb[0].mxu0 %v4687
      %v4877 = vpop.f32.mrb[0].mxu0
      %v4878 = vadd.f32 0.0, %v4877
      %v4879 = vpop.f32.mrb[0].mxu0
      %4880 = vmatprep.mubr.f32.mxu0 0.0
      %4881 = vmatmul.mubr.f32.gmra.mrb[0].mxu0 %v4690
      %v4882 = vpop.f32.mrb[0].mxu0
      %v4883 = vadd.f32 0.0, %v4882
      %v4884 = vpop.f32.mrb[0].mxu0
      %4885 = vmatprep.mubr.f32.mxu0 0.0
      %4886 = vmatmul.mubr.f32.gmra.mrb[0].mxu0 %v4693
      %v4887 = vpop.f32.mrb[0].mxu0
      %v4888 = vadd.f32 0.0, %v4887
      %v4889 = vpop.f32.mrb[0].mxu0
      %4890 = vmatprep.mubr.f32.mxu0 0.0
      %4891 = vmatmul.mubr.f32.gmra.mrb[0].mxu0 %v4696
      %v4892 = vpop.f32.mrb[0].mxu0
      %v4893 = vadd.f32 0.0, %v4892
      %v4894 = vpop.f32.mrb[0].mxu0
      %4895 = vmatprep.mubr.f32.mxu0 0.0
      %4896 = vmatmul.mubr.f32.gmra.mrb[0].mxu0 %v4699
      %v4897 = vpop.f32.mrb[0].mxu0
      %v4898 = vadd.f32 0.0, %v4897
      %v4899 = vpop.f32.mrb[0].mxu0
      %4900 = vmatprep.mubr.f32.mxu0 0.0
      %4901 = vmatmul.mubr.f32.gmra.mrb[0].mxu0 %v4702
      %v4902 = vpop.f32.mrb[0].mxu0
      %v4903 = vadd.f32 0.0, %v4902
      %v4904 = vpop.f32.mrb[0].mxu0
      %4905 = vmatprep.mubr.f32.mxu0 0.0
      %4906 = vmatmul.mubr.f32.gmra.mrb[0].mxu0 %v4705
      %v4907 = vpop.f32.mrb[0].mxu0
      %v4908 = vadd.f32 0.0, %v4907
      %v4909 = vpop.f32.mrb[0].mxu0
      %4910 = vmatprep.mubr.f32.mxu0 0.0
      %4911 = vmatmul.mubr.f32.gmra.mrb[0].mxu0 %v4708
      %v4912 = vpop.f32.mrb[0].mxu0
      %v4913 = vadd.f32 0.0, %v4912
      %v4914 = vpop.f32.mrb[0].mxu0
      %4915 = vmatprep.mubr.f32.mxu0 0.0
      %4916 = vmatmul.mubr.f32.gmra.mrb[0].mxu0 %v4711
      %v4917 = vpop.f32.mrb[0].mxu0
      %v4918 = vadd.f32 0.0, %v4917
      %v4919 = vpop.f32.mrb[0].mxu0
      %4920 = vmatprep.mubr.f32.mxu0 0.0
      %4921 = vmatmul.mubr.f32.gmra.mrb[0].mxu0 %v4714
      %v4922 = vpop.f32.mrb[0].mxu0
      %v4923 = vadd.f32 0.0, %v4922
      %v4924 = vpop.f32.mrb[0].mxu0
      %4925 = vmatprep.mubr.f32.mxu0 0.0
      %4926 = vmatmul.mubr.f32.gmra.mrb[0].mxu0 %v4717
      %v4927 = vpop.f32.mrb[0].mxu0
      %v4928 = vadd.f32 0.0, %v4927
      %v4929 = vpop.f32.mrb[0].mxu0
      %4930 = vmatprep.mubr.f32.mxu0 0.0
      %4931 = vmatmul.mubr.f32.gmra.mrb[0].mxu0 %v4720
      %v4932 = vpop.f32.mrb[0].mxu0
      %v4933 = vadd.f32 0.0, %v4932
      %v4934 = vpop.f32.mrb[0].mxu0
      %4935 = vmatprep.mubr.f32.mxu0 0.0
      %4936 = vmatmul.mubr.f32.gmra.mrb[0].mxu0 %v4723
      %v4937 = vpop.f32.mrb[0].mxu0
      %v4938 = vadd.f32 0.0, %v4937
      %v4939 = vpop.f32.mrb[0].mxu0
      %4940 = vmatprep.mubr.f32.mxu0 0.0
      %4941 = vmatmul.mubr.f32.gmra.mrb[0].mxu0 %v4726
      %v4942 = vpop.f32.mrb[0].mxu0
      %v4943 = vadd.f32 0.0, %v4942
      %v4944 = vpop.f32.mrb[0].mxu0
      %4945 = vmatprep.mubr.f32.mxu0 0.0
      %4946 = vmatmul.mubr.f32.gmra.mrb[0].mxu0 %v4729
      %v4947 = vpop.f32.mrb[0].mxu0
      %v4948 = vadd.f32 0.0, %v4947
      %v4949 = vpop.f32.mrb[0].mxu0
      %4950 = vmatprep.mubr.f32.mxu0 0.0
      %4951 = vmatmul.mubr.f32.gmra.mrb[0].mxu0 %v4732
      %v4952 = vpop.f32.mrb[0].mxu0
      %v4953 = vadd.f32 0.0, %v4952
      %v4954 = vpop.f32.mrb[0].mxu0
      %4955 = vmatprep.mubr.f32.mxu0 0.0
      %4956 = vmatmul.mubr.f32.gmra.mrb[0].mxu0 %v4735
      %v4957 = vpop.f32.mrb[0].mxu0
      %v4958 = vadd.f32 0.0, %v4957
      %v4959 = vpop.f32.mrb[0].mxu0
      %4960 = vmatprep.mubr.f32.mxu0 0.0
      %4961 = vmatmul.mubr.f32.gmra.mrb[0].mxu0 %v4738
      %v4962 = vpop.f32.mrb[0].mxu0
      %v4963 = vadd.f32 0.0, %v4962
      %v4964 = vpop.f32.mrb[0].mxu0
      %4965 = vmatprep.mubr.f32.mxu0 0.0
      %4966 = vmatmul.mubr.f32.gmra.mrb[0].mxu0 %v4741
      %v4967 = vpop.f32.mrb[0].mxu0
      %v4968 = vadd.f32 0.0, %v4967
      %v4969 = vpop.f32.mrb[0].mxu0
      %4970 = vmatprep.mubr.f32.mxu0 0.0
      %4971 = vmatmul.mubr.f32.gmra.mrb[0].mxu0 %v4744
      %v4972 = vpop.f32.mrb[0].mxu0
      %v4973 = vadd.f32 0.0, %v4972
      %v4974 = vpop.f32.mrb[0].mxu0
      %4975 = vmatprep.mubr.f32.mxu0 0.0
      %4976 = vmatmul.mubr.f32.gmra.mrb[0].mxu0 %v4747
      %v4977 = vpop.f32.mrb[0].mxu0
      %v4978 = vadd.f32 0.0, %v4977
      %v4979 = vpop.f32.mrb[0].mxu0
      %4980 = vmatprep.mubr.f32.mxu0 0.0
      %4981 = vmatmul.mubr.f32.gmra.mrb[0].mxu0 %v4750
      %v4982 = vpop.f32.mrb[0].mxu0
      %v4983 = vadd.f32 0.0, %v4982
      %v4984 = vpop.f32.mrb[0].mxu0
      %4985 = vmatprep.mubr.f32.mxu0 0.0
      %4986 = vmatmul.mubr.f32.gmra.mrb[0].mxu0 %v4753
      %v4987 = vpop.f32.mrb[0].mxu0
      %v4988 = vadd.f32 0.0, %v4987
      %v4989 = vpop.f32.mrb[0].mxu0
      %4990 = vmatprep.mubr.f32.mxu0 0.0
      %4991 = vmatmul.mubr.f32.gmra.mrb[0].mxu0 %v4756
      %v4992 = vpop.f32.mrb[0].mxu0
      %v4993 = vadd.f32 0.0, %v4992
      %v4994 = vpop.f32.mrb[0].mxu0
      %4995 = vmatprep.mubr.f32.mxu0 0.0
      %4996 = vmatmul.mubr.f32.gmra.mrb[0].mxu0 %v4759
      %v4997 = vpop.f32.mrb[0].mxu0
      %v4998 = vadd.f32 0.0, %v4997
      %v4999 = vpop.f32.mrb[0].mxu0
      %5000 = vmatprep.mubr.f32.mxu0 0.0
      %5001 = vmatmul.mubr.f32.gmra.mrb[0].mxu0 %v4762
      %v5002 = vpop.f32.mrb[0].mxu0
      %v5003 = vadd.f32 0.0, %v5002
      %v5004 = vpop.f32.mrb[0].mxu0
      %5005 = vmatprep.mubr.f32.mxu0 0.0
      %5006 = vmatmul.mubr.f32.gmra.mrb[0].mxu0 %v4765
      %v5007 = vpop.f32.mrb[0].mxu0
      %v5008 = vadd.f32 0.0, %v5007
      %v5009 = vpop.f32.mrb[0].mxu0
      %5010 = vmatprep.mubr.f32.mxu0 0.0
      %5011 = vmatmul.mubr.f32.gmra.mrb[0].mxu0 %v4768
      %v5012 = vpop.f32.mrb[0].mxu0
      %v5013 = vadd.f32 0.0, %v5012
      %v5014 = vpop.f32.mrb[0].mxu0
      %5015 = vmatprep.mubr.f32.mxu0 0.0
      %5016 = vmatmul.mubr.f32.gmra.mrb[0].mxu0 %v4771
      %v5017 = vpop.f32.mrb[0].mxu0
      %v5018 = vadd.f32 0.0, %v5017
      %v5019 = vpop.f32.mrb[0].mxu0
      %5020 = vmatprep.mubr.f32.mxu0 0.0
      %5021 = vmatmul.mubr.f32.gmra.mrb[0].mxu0 %v4774
      %v5022 = vpop.f32.mrb[0].mxu0
      %v5023 = vadd.f32 0.0, %v5022
      %v5024 = vpop.f32.mrb[0].mxu0
      %5025 = vmatprep.mubr.f32.mxu0 0.0
      %5026 = vmatmul.mubr.f32.gmra.mrb[0].mxu0 %v4777
      %v5027 = vpop.f32.mrb[0].mxu0
      %v5028 = vadd.f32 0.0, %v5027
      %v5029 = vpop.f32.mrb[0].mxu0
      %5030 = vmatprep.mubr.f32.mxu0 0.0
      %5031 = vmatmul.mubr.f32.gmra.mrb[0].mxu0 %v4780
      %v5032 = vpop.f32.mrb[0].mxu0
      %v5033 = vadd.f32 0.0, %v5032
      %v5034 = vpop.f32.mrb[0].mxu0
      %5035 = vmatprep.mubr.f32.mxu0 0.0
      %5036 = vmatmul.mubr.f32.gmra.mrb[0].mxu0 %v4783
      %v5037 = vpop.f32.mrb[0].mxu0
      %v5038 = vadd.f32 0.0, %v5037
      %v5039 = vpop.f32.mrb[0].mxu0
      %5040 = vmatprep.mubr.f32.mxu0 0.0
      %5041 = vmatmul.mubr.f32.gmra.mrb[0].mxu0 %v4786
      %v5042 = vpop.f32.mrb[0].mxu0
      %v5043 = vadd.f32 0.0, %v5042
      %v5044 = vpop.f32.mrb[0].mxu0
      %5045 = vmatprep.mubr.f32.mxu0 0.0
      %5046 = vmatmul.mubr.f32.gmra.mrb[0].mxu0 %v4789
      %v5047 = vpop.f32.mrb[0].mxu0
      %v5048 = vadd.f32 0.0, %v5047
      %v5049 = vpop.f32.mrb[0].mxu0
      %5050 = vmatprep.mubr.f32.mxu0 0.0
      %5051 = vmatmul.mubr.f32.gmra.mrb[0].mxu0 %v4792
      %v5052 = vpop.f32.mrb[0].mxu0
      %v5053 = vadd.f32 0.0, %v5052
      %v5054 = vpop.f32.mrb[0].mxu0
      %5055 = vmatprep.mubr.f32.mxu0 0.0
      %5056 = vmatmul.mubr.f32.gmra.mrb[0].mxu0 %v4795
      %v5057 = vpop.f32.mrb[0].mxu0
      %v5058 = vadd.f32 0.0, %v5057
      %v5059 = vpop.f32.mrb[0].mxu0
      %5060 = vmatprep.mubr.f32.mxu0 0.0
      %5061 = vmatmul.mubr.f32.gmra.mrb[0].mxu0 %v4798
      %v5062 = vpop.f32.mrb[0].mxu0
      %v5063 = vadd.f32 0.0, %v5062
      %v5064 = vpop.f32.mrb[0].mxu0
      %5065 = vmatprep.mubr.f32.mxu0 0.0
      %5066 = vmatmul.mubr.f32.gmra.mrb[0].mxu0 %v4801
      %v5067 = vpop.f32.mrb[0].mxu0
      %v5068 = vadd.f32 0.0, %v5067
      %v5069 = vpop.f32.mrb[0].mxu0
      %5070 = vmatprep.mubr.f32.mxu0 0.0
      %5071 = vmatmul.mubr.f32.gmra.mrb[0].mxu0 %v4804
      %v5072 = vpop.f32.mrb[0].mxu0
      %v5073 = vadd.f32 0.0, %v5072
      %v5074 = vpop.f32.mrb[0].mxu0
      %5075 = vdwg.mxu0
      %v5076 = vadd.f32 %v4598, %v4873
      %v5077 = vadd.f32 %v4599, %v4878
      %v5078 = vadd.f32 %v4600, %v4883
      %v5079 = vadd.f32 %v4601, %v4888
      %v5080 = vadd.f32 %v4602, %v4893
      %v5081 = vadd.f32 %v4603, %v4898
      %v5082 = vadd.f32 %v4604, %v4903
      %v5083 = vadd.f32 %v4605, %v4908
      %v5084 = vadd.f32 %v4606, %v4913
      %v5085 = vadd.f32 %v4607, %v4918
      %v5086 = vadd.f32 %v4608, %v4923
      %v5087 = vadd.f32 %v4609, %v4928
      %v5088 = vadd.f32 %v4610, %v4933
      %v5089 = vadd.f32 %v4611, %v4938
      %v5090 = vadd.f32 %v4612, %v4943
      %v5091 = vadd.f32 %v4613, %v4948
      %v5092 = vadd.f32 %v4614, %v4953
      %v5093 = vadd.f32 %v4615, %v4958
      %v5094 = vadd.f32 %v4616, %v4963
      %v5095 = vadd.f32 %v4617, %v4968
      %v5096 = vadd.f32 %v4618, %v4973
      %v5097 = vadd.f32 %v4619, %v4978
      %v5098 = vadd.f32 %v4620, %v4983
      %v5099 = vadd.f32 %v4621, %v4988
      %v5100 = vadd.f32 %v4622, %v4993
      %v5101 = vadd.f32 %v4623, %v4998
      %v5102 = vadd.f32 %v4624, %v5003
      %v5103 = vadd.f32 %v4625, %v5008
      %v5104 = vadd.f32 %v4626, %v5013
      %v5105 = vadd.f32 %v4627, %v5018
      %v5106 = vadd.f32 %v4628, %v5023
      %v5107 = vadd.f32 %v4629, %v5028
      %v5108 = vadd.f32 %v4630, %v5033
      %v5109 = vadd.f32 %v4631, %v5038
      %v5110 = vadd.f32 %v4632, %v5043
      %v5111 = vadd.f32 %v4633, %v5048
      %v5112 = vadd.f32 %v4634, %v5053
      %v5113 = vadd.f32 %v4635, %v5058
      %v5114 = vadd.f32 %v4636, %v5063
      %v5115 = vadd.f32 %v4637, %v5068
      %v5116 = vadd.f32 %v4638, %v5073
      %v5117 = vld [vmem:[%s5] sm:$0xff]
      %v5118 = vld [vmem:[%s6] sm:$0x1]
      %v5120 = vlaneseq
      %v5121 = vshrl.u32 %v5120, 7
      %v5122 = vsub.s32 0, %v5121
      %v5123 = vrot.slane %v5118, %v5122
      %vm5125 = vcmask 64512
      %v5127 = vsel %vm5125, %v5076, 0
      %v5130 = vsel %vm5125, %v5077, 0
      %v5133 = vsel %vm5125, %v5078, 0
      %v5136 = vsel %vm5125, %v5079, 0
      %v5139 = vsel %vm5125, %v5080, 0
      %v5142 = vsel %vm5125, %v5081, 0
      %v5145 = vsel %vm5125, %v5082, 0
      %v5148 = vsel %vm5125, %v5083, 0
      %v5151 = vsel %vm5125, %v5084, 0
      %v5154 = vsel %vm5125, %v5085, 0
      %v5157 = vsel %vm5125, %v5086, 0
      %v5160 = vsel %vm5125, %v5087, 0
      %v5163 = vsel %vm5125, %v5088, 0
      %v5166 = vsel %vm5125, %v5089, 0
      %v5169 = vsel %vm5125, %v5090, 0
      %v5172 = vsel %vm5125, %v5091, 0
      %v5175 = vsel %vm5125, %v5092, 0
      %v5178 = vsel %vm5125, %v5093, 0
      %v5181 = vsel %vm5125, %v5094, 0
      %v5184 = vsel %vm5125, %v5095, 0
      %v5187 = vsel %vm5125, %v5096, 0
      %v5190 = vsel %vm5125, %v5097, 0
      %v5193 = vsel %vm5125, %v5098, 0
      %v5196 = vsel %vm5125, %v5099, 0
      %v5199 = vsel %vm5125, %v5100, 0
      %v5202 = vsel %vm5125, %v5101, 0
      %v5205 = vsel %vm5125, %v5102, 0
      %v5208 = vsel %vm5125, %v5103, 0
      %v5211 = vsel %vm5125, %v5104, 0
      %v5214 = vsel %vm5125, %v5105, 0
      %v5217 = vsel %vm5125, %v5106, 0
      %v5220 = vsel %vm5125, %v5107, 0
      %v5223 = vsel %vm5125, %v5108, 0
      %v5226 = vsel %vm5125, %v5109, 0
      %v5229 = vsel %vm5125, %v5110, 0
      %v5232 = vsel %vm5125, %v5111, 0
      %v5235 = vsel %vm5125, %v5112, 0
      %v5238 = vsel %vm5125, %v5113, 0
      %v5241 = vsel %vm5125, %v5114, 0
      %v5244 = vsel %vm5125, %v5115, 0
      %v5247 = vsel %vm5125, %v5116, 0
      %5249 = vmatprep.subr.mxu0 0.0
      %5250 = vmatpush1.msra.mxu0 %v5117
      %5251 = vmatprep.subr.mxu0 0.0
      %5252 = vmatpush1.msra.mxu0 0.0
      %5253 = vmatprep.subr.mxu0 0.0
      %5254 = vmatpush1.msra.mxu0 0.0
      %5255 = vmatprep.subr.mxu0 0.0
      %5256 = vmatpush1.msra.mxu0 0.0
      %5257 = vmatprep.subr.mxu0 0.0
      %5258 = vmatpush1.msra.mxu0 0.0
      %5259 = vmatprep.subr.mxu0 0.0
      %5260 = vmatpush1.msra.mxu0 0.0
      %5261 = vmatprep.subr.mxu0 0.0
      %5262 = vmatpush1.msra.mxu0 0.0
      %5263 = vmatprep.subr.mxu0 0.0
      %5264 = vmatpush1.msra.mxu0 0.0
      %5265 = vmatprep.subr.mxu0 0.0
      %5266 = vmatpush1.msra.mxu0 0.0
      %5267 = vmatprep.subr.mxu0 0.0
      %5268 = vmatpush1.msra.mxu0 0.0
      %5269 = vmatprep.subr.mxu0 0.0
      %5270 = vmatpush1.msra.mxu0 0.0
      %5271 = vmatprep.subr.mxu0 0.0
      %5272 = vmatpush1.msra.mxu0 0.0
      %5273 = vmatprep.subr.mxu0 0.0
      %5274 = vmatpush1.msra.mxu0 0.0
      %5275 = vmatprep.subr.mxu0 0.0
      %5276 = vmatpush1.msra.mxu0 0.0
      %5277 = vmatprep.subr.mxu0 0.0
      %5278 = vmatpush1.msra.mxu0 0.0
      %5279 = vmatprep.subr.mxu0 0.0
      %5280 = vmatpush1.msra.mxu0 0.0
      %5281 = vmatprep.subr.mxu0 0.0
      %5282 = vmatpush1.msra.mxu0 0.0
      %5283 = vmatprep.subr.mxu0 0.0
      %5284 = vmatpush1.msra.mxu0 0.0
      %5285 = vmatprep.subr.mxu0 0.0
      %5286 = vmatpush1.msra.mxu0 0.0
      %5287 = vmatprep.subr.mxu0 0.0
      %5288 = vmatpush1.msra.mxu0 0.0
      %5289 = vmatprep.subr.mxu0 0.0
      %5290 = vmatpush1.msra.mxu0 0.0
      %5291 = vmatprep.subr.mxu0 0.0
      %5292 = vmatpush1.msra.mxu0 0.0
      %5293 = vmatprep.subr.mxu0 0.0
      %5294 = vmatpush1.msra.mxu0 0.0
      %5295 = vmatprep.subr.mxu0 0.0
      %5296 = vmatpush1.msra.mxu0 0.0
      %5297 = vmatprep.subr.mxu0 0.0
      %5298 = vmatpush1.msra.mxu0 0.0
      %5299 = vmatprep.subr.mxu0 0.0
      %5300 = vmatpush1.msra.mxu0 0.0
      %5301 = vmatprep.subr.mxu0 0.0
      %5302 = vmatpush1.msra.mxu0 0.0
      %5303 = vmatprep.subr.mxu0 0.0
      %5304 = vmatpush1.msra.mxu0 0.0
      %5305 = vmatprep.subr.mxu0 0.0
      %5306 = vmatpush1.msra.mxu0 0.0
      %5307 = vmatprep.subr.mxu0 0.0
      %5308 = vmatpush1.msra.mxu0 0.0
      %5309 = vmatprep.subr.mxu0 0.0
      %5310 = vmatpush1.msra.mxu0 0.0
      %5311 = vmatprep.subr.mxu0 0.0
      %5312 = vmatpush1.msra.mxu0 0.0
      %5313 = vmatprep.mubr.f32.mxu0 0.0
      %5314 = vmatmul.mubr.f32.gmra.mrb[0].mxu0 %v5127
      %v5315 = vpop.f32.mrb[0].mxu0
      %v5316 = vadd.f32 %v5123, %v5315
      %v5317 = vpop.f32.mrb[0].mxu0
      %5318 = vmatprep.mubr.f32.mxu0 0.0
      %5319 = vmatmul.mubr.f32.gmra.mrb[0].mxu0 %v5130
      %v5320 = vpop.f32.mrb[0].mxu0
      %v5321 = vadd.f32 %v5123, %v5320
      %v5322 = vpop.f32.mrb[0].mxu0
      %5323 = vmatprep.mubr.f32.mxu0 0.0
      %5324 = vmatmul.mubr.f32.gmra.mrb[0].mxu0 %v5133
      %v5325 = vpop.f32.mrb[0].mxu0
      %v5326 = vadd.f32 %v5123, %v5325
      %v5327 = vpop.f32.mrb[0].mxu0
      %5328 = vmatprep.mubr.f32.mxu0 0.0
      %5329 = vmatmul.mubr.f32.gmra.mrb[0].mxu0 %v5136
      %v5330 = vpop.f32.mrb[0].mxu0
      %v5331 = vadd.f32 %v5123, %v5330
      %v5332 = vpop.f32.mrb[0].mxu0
      %5333 = vmatprep.mubr.f32.mxu0 0.0
      %5334 = vmatmul.mubr.f32.gmra.mrb[0].mxu0 %v5139
      %v5335 = vpop.f32.mrb[0].mxu0
      %v5336 = vadd.f32 %v5123, %v5335
      %v5337 = vpop.f32.mrb[0].mxu0
      %5338 = vmatprep.mubr.f32.mxu0 0.0
      %5339 = vmatmul.mubr.f32.gmra.mrb[0].mxu0 %v5142
      %v5340 = vpop.f32.mrb[0].mxu0
      %v5341 = vadd.f32 %v5123, %v5340
      %v5342 = vpop.f32.mrb[0].mxu0
      %5343 = vmatprep.mubr.f32.mxu0 0.0
      %5344 = vmatmul.mubr.f32.gmra.mrb[0].mxu0 %v5145
      %v5345 = vpop.f32.mrb[0].mxu0
      %v5346 = vadd.f32 %v5123, %v5345
      %v5347 = vpop.f32.mrb[0].mxu0
      %5348 = vmatprep.mubr.f32.mxu0 0.0
      %5349 = vmatmul.mubr.f32.gmra.mrb[0].mxu0 %v5148
      %v5350 = vpop.f32.mrb[0].mxu0
      %v5351 = vadd.f32 %v5123, %v5350
      %v5352 = vpop.f32.mrb[0].mxu0
      %5353 = vmatprep.mubr.f32.mxu0 0.0
      %5354 = vmatmul.mubr.f32.gmra.mrb[0].mxu0 %v5151
      %v5355 = vpop.f32.mrb[0].mxu0
      %v5356 = vadd.f32 %v5123, %v5355
      %v5357 = vpop.f32.mrb[0].mxu0
      %5358 = vmatprep.mubr.f32.mxu0 0.0
      %5359 = vmatmul.mubr.f32.gmra.mrb[0].mxu0 %v5154
      %v5360 = vpop.f32.mrb[0].mxu0
      %v5361 = vadd.f32 %v5123, %v5360
      %v5362 = vpop.f32.mrb[0].mxu0
      %5363 = vmatprep.mubr.f32.mxu0 0.0
      %5364 = vmatmul.mubr.f32.gmra.mrb[0].mxu0 %v5157
      %v5365 = vpop.f32.mrb[0].mxu0
      %v5366 = vadd.f32 %v5123, %v5365
      %v5367 = vpop.f32.mrb[0].mxu0
      %5368 = vmatprep.mubr.f32.mxu0 0.0
      %5369 = vmatmul.mubr.f32.gmra.mrb[0].mxu0 %v5160
      %v5370 = vpop.f32.mrb[0].mxu0
      %v5371 = vadd.f32 %v5123, %v5370
      %v5372 = vpop.f32.mrb[0].mxu0
      %5373 = vmatprep.mubr.f32.mxu0 0.0
      %5374 = vmatmul.mubr.f32.gmra.mrb[0].mxu0 %v5163
      %v5375 = vpop.f32.mrb[0].mxu0
      %v5376 = vadd.f32 %v5123, %v5375
      %v5377 = vpop.f32.mrb[0].mxu0
      %5378 = vmatprep.mubr.f32.mxu0 0.0
      %5379 = vmatmul.mubr.f32.gmra.mrb[0].mxu0 %v5166
      %v5380 = vpop.f32.mrb[0].mxu0
      %v5381 = vadd.f32 %v5123, %v5380
      %v5382 = vpop.f32.mrb[0].mxu0
      %5383 = vmatprep.mubr.f32.mxu0 0.0
      %5384 = vmatmul.mubr.f32.gmra.mrb[0].mxu0 %v5169
      %v5385 = vpop.f32.mrb[0].mxu0
      %v5386 = vadd.f32 %v5123, %v5385
      %v5387 = vpop.f32.mrb[0].mxu0
      %5388 = vmatprep.mubr.f32.mxu0 0.0
      %5389 = vmatmul.mubr.f32.gmra.mrb[0].mxu0 %v5172
      %v5390 = vpop.f32.mrb[0].mxu0
      %v5391 = vadd.f32 %v5123, %v5390
      %v5392 = vpop.f32.mrb[0].mxu0
      %5393 = vmatprep.mubr.f32.mxu0 0.0
      %5394 = vmatmul.mubr.f32.gmra.mrb[0].mxu0 %v5175
      %v5395 = vpop.f32.mrb[0].mxu0
      %v5396 = vadd.f32 %v5123, %v5395
      %v5397 = vpop.f32.mrb[0].mxu0
      %5398 = vmatprep.mubr.f32.mxu0 0.0
      %5399 = vmatmul.mubr.f32.gmra.mrb[0].mxu0 %v5178
      %v5400 = vpop.f32.mrb[0].mxu0
      %v5401 = vadd.f32 %v5123, %v5400
      %v5402 = vpop.f32.mrb[0].mxu0
      %5403 = vmatprep.mubr.f32.mxu0 0.0
      %5404 = vmatmul.mubr.f32.gmra.mrb[0].mxu0 %v5181
      %v5405 = vpop.f32.mrb[0].mxu0
      %v5406 = vadd.f32 %v5123, %v5405
      %v5407 = vpop.f32.mrb[0].mxu0
      %5408 = vmatprep.mubr.f32.mxu0 0.0
      %5409 = vmatmul.mubr.f32.gmra.mrb[0].mxu0 %v5184
      %v5410 = vpop.f32.mrb[0].mxu0
      %v5411 = vadd.f32 %v5123, %v5410
      %v5412 = vpop.f32.mrb[0].mxu0
      %5413 = vmatprep.mubr.f32.mxu0 0.0
      %5414 = vmatmul.mubr.f32.gmra.mrb[0].mxu0 %v5187
      %v5415 = vpop.f32.mrb[0].mxu0
      %v5416 = vadd.f32 %v5123, %v5415
      %v5417 = vpop.f32.mrb[0].mxu0
      %5418 = vmatprep.mubr.f32.mxu0 0.0
      %5419 = vmatmul.mubr.f32.gmra.mrb[0].mxu0 %v5190
      %v5420 = vpop.f32.mrb[0].mxu0
      %v5421 = vadd.f32 %v5123, %v5420
      %v5422 = vpop.f32.mrb[0].mxu0
      %5423 = vmatprep.mubr.f32.mxu0 0.0
      %5424 = vmatmul.mubr.f32.gmra.mrb[0].mxu0 %v5193
      %v5425 = vpop.f32.mrb[0].mxu0
      %v5426 = vadd.f32 %v5123, %v5425
      %v5427 = vpop.f32.mrb[0].mxu0
      %5428 = vmatprep.mubr.f32.mxu0 0.0
      %5429 = vmatmul.mubr.f32.gmra.mrb[0].mxu0 %v5196
      %v5430 = vpop.f32.mrb[0].mxu0
      %v5431 = vadd.f32 %v5123, %v5430
      %v5432 = vpop.f32.mrb[0].mxu0
      %5433 = vmatprep.mubr.f32.mxu0 0.0
      %5434 = vmatmul.mubr.f32.gmra.mrb[0].mxu0 %v5199
      %v5435 = vpop.f32.mrb[0].mxu0
      %v5436 = vadd.f32 %v5123, %v5435
      %v5437 = vpop.f32.mrb[0].mxu0
      %5438 = vmatprep.mubr.f32.mxu0 0.0
      %5439 = vmatmul.mubr.f32.gmra.mrb[0].mxu0 %v5202
      %v5440 = vpop.f32.mrb[0].mxu0
      %v5441 = vadd.f32 %v5123, %v5440
      %v5442 = vpop.f32.mrb[0].mxu0
      %5443 = vmatprep.mubr.f32.mxu0 0.0
      %5444 = vmatmul.mubr.f32.gmra.mrb[0].mxu0 %v5205
      %v5445 = vpop.f32.mrb[0].mxu0
      %v5446 = vadd.f32 %v5123, %v5445
      %v5447 = vpop.f32.mrb[0].mxu0
      %5448 = vmatprep.mubr.f32.mxu0 0.0
      %5449 = vmatmul.mubr.f32.gmra.mrb[0].mxu0 %v5208
      %v5450 = vpop.f32.mrb[0].mxu0
      %v5451 = vadd.f32 %v5123, %v5450
      %v5452 = vpop.f32.mrb[0].mxu0
      %5453 = vmatprep.mubr.f32.mxu0 0.0
      %5454 = vmatmul.mubr.f32.gmra.mrb[0].mxu0 %v5211
      %v5455 = vpop.f32.mrb[0].mxu0
      %v5456 = vadd.f32 %v5123, %v5455
      %v5457 = vpop.f32.mrb[0].mxu0
      %5458 = vmatprep.mubr.f32.mxu0 0.0
      %5459 = vmatmul.mubr.f32.gmra.mrb[0].mxu0 %v5214
      %v5460 = vpop.f32.mrb[0].mxu0
      %v5461 = vadd.f32 %v5123, %v5460
      %v5462 = vpop.f32.mrb[0].mxu0
      %5463 = vmatprep.mubr.f32.mxu0 0.0
      %5464 = vmatmul.mubr.f32.gmra.mrb[0].mxu0 %v5217
      %v5465 = vpop.f32.mrb[0].mxu0
      %v5466 = vadd.f32 %v5123, %v5465
      %v5467 = vpop.f32.mrb[0].mxu0
      %5468 = vmatprep.mubr.f32.mxu0 0.0
      %5469 = vmatmul.mubr.f32.gmra.mrb[0].mxu0 %v5220
      %v5470 = vpop.f32.mrb[0].mxu0
      %v5471 = vadd.f32 %v5123, %v5470
      %v5472 = vpop.f32.mrb[0].mxu0
      %5473 = vmatprep.mubr.f32.mxu0 0.0
      %5474 = vmatmul.mubr.f32.gmra.mrb[0].mxu0 %v5223
      %v5475 = vpop.f32.mrb[0].mxu0
      %v5476 = vadd.f32 %v5123, %v5475
      %v5477 = vpop.f32.mrb[0].mxu0
      %5478 = vmatprep.mubr.f32.mxu0 0.0
      %5479 = vmatmul.mubr.f32.gmra.mrb[0].mxu0 %v5226
      %v5480 = vpop.f32.mrb[0].mxu0
      %v5481 = vadd.f32 %v5123, %v5480
      %v5482 = vpop.f32.mrb[0].mxu0
      %5483 = vmatprep.mubr.f32.mxu0 0.0
      %5484 = vmatmul.mubr.f32.gmra.mrb[0].mxu0 %v5229
      %v5485 = vpop.f32.mrb[0].mxu0
      %v5486 = vadd.f32 %v5123, %v5485
      %v5487 = vpop.f32.mrb[0].mxu0
      %5488 = vmatprep.mubr.f32.mxu0 0.0
      %5489 = vmatmul.mubr.f32.gmra.mrb[0].mxu0 %v5232
      %v5490 = vpop.f32.mrb[0].mxu0
      %v5491 = vadd.f32 %v5123, %v5490
      %v5492 = vpop.f32.mrb[0].mxu0
      %5493 = vmatprep.mubr.f32.mxu0 0.0
      %5494 = vmatmul.mubr.f32.gmra.mrb[0].mxu0 %v5235
      %v5495 = vpop.f32.mrb[0].mxu0
      %v5496 = vadd.f32 %v5123, %v5495
      %v5497 = vpop.f32.mrb[0].mxu0
      %5498 = vmatprep.mubr.f32.mxu0 0.0
      %5499 = vmatmul.mubr.f32.gmra.mrb[0].mxu0 %v5238
      %v5500 = vpop.f32.mrb[0].mxu0
      %v5501 = vadd.f32 %v5123, %v5500
      %v5502 = vpop.f32.mrb[0].mxu0
      %5503 = vmatprep.mubr.f32.mxu0 0.0
      %5504 = vmatmul.mubr.f32.gmra.mrb[0].mxu0 %v5241
      %v5505 = vpop.f32.mrb[0].mxu0
      %v5506 = vadd.f32 %v5123, %v5505
      %v5507 = vpop.f32.mrb[0].mxu0
      %5508 = vmatprep.mubr.f32.mxu0 0.0
      %5509 = vmatmul.mubr.f32.gmra.mrb[0].mxu0 %v5244
      %v5510 = vpop.f32.mrb[0].mxu0
      %v5511 = vadd.f32 %v5123, %v5510
      %v5512 = vpop.f32.mrb[0].mxu0
      %5513 = vmatprep.mubr.f32.mxu0 0.0
      %5514 = vmatmul.mubr.f32.gmra.mrb[0].mxu0 %v5247
      %v5515 = vpop.f32.mrb[0].mxu0
      %v5516 = vadd.f32 %v5123, %v5515
      %v5517 = vpop.f32.mrb[0].mxu0
      %5518 = vdwg.mxu0
      %v5519 = vadd.f32 %v5316, %v279
      %v5520 = vadd.f32 %v5321, %v280
      %v5521 = vadd.f32 %v5326, %v281
      %v5522 = vadd.f32 %v5331, %v282
      %v5523 = vadd.f32 %v5336, %v283
      %v5524 = vadd.f32 %v5341, %v284
      %v5525 = vadd.f32 %v5346, %v285
      %v5526 = vadd.f32 %v5351, %v286
      %v5527 = vadd.f32 %v5356, %v287
      %v5528 = vadd.f32 %v5361, %v288
      %v5529 = vadd.f32 %v5366, %v289
      %v5530 = vadd.f32 %v5371, %v290
      %v5531 = vadd.f32 %v5376, %v291
      %v5532 = vadd.f32 %v5381, %v292
      %v5533 = vadd.f32 %v5386, %v293
      %v5534 = vadd.f32 %v5391, %v294
      %v5535 = vadd.f32 %v5396, %v295
      %v5536 = vadd.f32 %v5401, %v296
      %v5537 = vadd.f32 %v5406, %v297
      %v5538 = vadd.f32 %v5411, %v298
      %v5539 = vadd.f32 %v5416, %v299
      %v5540 = vadd.f32 %v5421, %v300
      %v5541 = vadd.f32 %v5426, %v301
      %v5542 = vadd.f32 %v5431, %v302
      %v5543 = vadd.f32 %v5436, %v303
      %v5544 = vadd.f32 %v5441, %v304
      %v5545 = vadd.f32 %v5446, %v305
      %v5546 = vadd.f32 %v5451, %v306
      %v5547 = vadd.f32 %v5456, %v307
      %v5548 = vadd.f32 %v5461, %v308
      %v5549 = vadd.f32 %v5466, %v309
      %v5550 = vadd.f32 %v5471, %v310
      %v5551 = vadd.f32 %v5476, %v311
      %v5552 = vadd.f32 %v5481, %v312
      %v5553 = vadd.f32 %v5486, %v313
      %v5554 = vadd.f32 %v5491, %v314
      %v5555 = vadd.f32 %v5496, %v315
      %v5556 = vadd.f32 %v5501, %v316
      %v5557 = vadd.f32 %v5506, %v317
      %v5558 = vadd.f32 %v5511, %v318
      %v5559 = vadd.f32 %v5516, %v319
      %5560 = vst.msk [vmem:[%s278] sm:$0xff] %vm362, %v5519
      %5561 = vst.msk [vmem:[%s278 + $0x8] sm:$0xff] %vm362, %v5520
      %5562 = vst.msk [vmem:[%s278 + $0x10] sm:$0xff] %vm362, %v5521
      %5563 = vst.msk [vmem:[%s278 + $0x18] sm:$0xff] %vm362, %v5522
      %5564 = vst.msk [vmem:[%s278 + $0x20] sm:$0xff] %vm362, %v5523
      %5565 = vst.msk [vmem:[%s278 + $0x28] sm:$0xff] %vm362, %v5524
      %5566 = vst.msk [vmem:[%s278 + $0x30] sm:$0xff] %vm362, %v5525
      %5567 = vst.msk [vmem:[%s278 + $0x38] sm:$0xff] %vm362, %v5526
      %5568 = vst.msk [vmem:[%s278 + $0x40] sm:$0xff] %vm362, %v5527
      %5569 = vst.msk [vmem:[%s278 + $0x48] sm:$0xff] %vm362, %v5528
      %5570 = vst.msk [vmem:[%s278 + $0x50] sm:$0xff] %vm362, %v5529
      %5571 = vst.msk [vmem:[%s278 + $0x58] sm:$0xff] %vm362, %v5530
      %5572 = vst.msk [vmem:[%s278 + $0x60] sm:$0xff] %vm362, %v5531
      %5573 = vst.msk [vmem:[%s278 + $0x68] sm:$0xff] %vm362, %v5532
      %5574 = vst.msk [vmem:[%s278 + $0x70] sm:$0xff] %vm362, %v5533
      %5575 = vst.msk [vmem:[%s278 + $0x78] sm:$0xff] %vm362, %v5534
      %5576 = vst.msk [vmem:[%s278 + $0x80] sm:$0xff] %vm362, %v5535
      %5577 = vst.msk [vmem:[%s278 + $0x88] sm:$0xff] %vm362, %v5536
      %5578 = vst.msk [vmem:[%s278 + $0x90] sm:$0xff] %vm362, %v5537
      %5579 = vst.msk [vmem:[%s278 + $0x98] sm:$0xff] %vm362, %v5538
      %5580 = vst.msk [vmem:[%s278 + $0xa0] sm:$0xff] %vm362, %v5539
      %5581 = vst.msk [vmem:[%s278 + $0xa8] sm:$0xff] %vm362, %v5540
      %5582 = vst.msk [vmem:[%s278 + $0xb0] sm:$0xff] %vm362, %v5541
      %5583 = vst.msk [vmem:[%s278 + $0xb8] sm:$0xff] %vm362, %v5542
      %5584 = vst.msk [vmem:[%s278 + $0xc0] sm:$0xff] %vm362, %v5543
      %5585 = vst.msk [vmem:[%s278 + $0xc8] sm:$0xff] %vm362, %v5544
      %5586 = vst.msk [vmem:[%s278 + $0xd0] sm:$0xff] %vm362, %v5545
      %5587 = vst.msk [vmem:[%s278 + $0xd8] sm:$0xff] %vm362, %v5546
      %5588 = vst.msk [vmem:[%s278 + $0xe0] sm:$0xff] %vm362, %v5547
      %5589 = vst.msk [vmem:[%s278 + $0xe8] sm:$0xff] %vm362, %v5548
      %5590 = vst.msk [vmem:[%s278 + $0xf0] sm:$0xff] %vm362, %v5549
      %5591 = vst.msk [vmem:[%s278 + $0xf8] sm:$0xff] %vm362, %v5550
      %5592 = vst.msk [vmem:[%s278 + $0x100] sm:$0xff] %vm362, %v5551
      %5593 = vst.msk [vmem:[%s278 + $0x108] sm:$0xff] %vm362, %v5552
      %5594 = vst.msk [vmem:[%s278 + $0x110] sm:$0xff] %vm362, %v5553
      %5595 = vst.msk [vmem:[%s278 + $0x118] sm:$0xff] %vm362, %v5554
      %5596 = vst.msk [vmem:[%s278 + $0x120] sm:$0xff] %vm362, %v5555
      %5597 = vst.msk [vmem:[%s278 + $0x128] sm:$0xff] %vm362, %v5556
      %5598 = vst.msk [vmem:[%s278 + $0x130] sm:$0xff] %vm362, %v5557
      %5599 = vst.msk [vmem:[%s278 + $0x138] sm:$0xff] %vm362, %v5558
      %vm5600 = vcmask 27648
      %5601 = vst.msk [vmem:[%s278 + $0x140] sm:$0xf] %vm5600, %v5559
      %p5602 = scmp.lt.s32.totalorder %s18, 1
      %s5603 = scalar_select %p5602, %s18, 1
      %s5604 = smul.addr %s5603, 41
      %s5605 = smul.addr %s5604, 8
      %s5606 = scalar_lea.vmem %s7, %s5605
      // Predicated region
      $region49: #{resnext_forward.1} parent=47 // pred_check
        %p5607 = pneg %p188
      $region50: #{resnext_forward.1} parent=47 // pred_check_branch
        %5609 = sbr.rel (%p5607) target = $region52
      $region51: #{resnext_forward.1} parent=47 // pred_region
        _
      $region52: #{resnext_forward.1} parent=47 // pred_fallthru
        _
    $region48: #{resnext_forward.1} parent=5 // pred_fallthru
      _
    %p5610 = scmp.le.s32.totalorder 2, %s13
    // Predicated region
    $region53: #{resnext_forward.1} parent=5 // pred_check
      %p5611 = pneg %p5610
    $region54: #{resnext_forward.1} parent=5 // pred_check_branch
      %5613 = sbr.rel (%p5611) target = $region56
    $region55: #{resnext_forward.1} parent=5 // pred_region
      %s5614 = ssub.s32 %s13, 2
      // Predicated region
      $region57: #{resnext_forward.1} parent=55 // pred_check
        %p5615 = pneg %p194
      $region58: #{resnext_forward.1} parent=55 // pred_check_branch
        %5617 = sbr.rel (%p5615) target = $region60
      $region59: #{resnext_forward.1} parent=55 // pred_region
        %p5618 = scmp.lt.s32.totalorder %s19, 1
        %s5619 = scalar_select %p5618, %s19, 1
        %s5620 = smul.addr %s5619, 41
        %s5621 = smul.addr %s5620, 8
        %s5622 = scalar_lea.vmem %s7, %s5621
      $region60: #{resnext_forward.1} parent=55 // pred_fallthru
        _
    $region56: #{resnext_forward.1} parent=5 // pred_fallthru
      _
  $region6: #{resnext_forward.1} parent=0 // loop_footer
    %s17 = sadd.s32 1, %s13
  $region7: #{resnext_forward.1} parent=0 // loop_footer_branch
    %12 = sbr.rel target = $region3
  $region8: #{resnext_forward.1} parent=0 // loop_exit
    _

</llo_original>
